<compile_context>
chip_gen: v6e
topology: v6e:2x2x1
jax: 0.10.0
libtpu: 0.0.40
codegen_flags: <defaults>
</compile_context>

<pallas_src>
import math
import functools

import jax
import jax.numpy as jnp
from jax import lax
from jax.experimental import pallas as pl
from jax.experimental.pallas import tpu as pltpu

NEG_INF = -1e30                       # additive mask value (matches torch bool-mask -> -inf)
_MXU_DTYPE = jnp.bfloat16             # matmul operand / MXU-only activation dtype
_LN_EPS = 1e-5


# --------------------------- hardware-aware config ---------------------------

_VMEM_LIMIT_CACHE = [None]


def _vmem_limit_bytes():
    """Generation-aware scoped-VMEM budget: <=32 MiB on v7x (64 MiB phys), 48 MiB otherwise."""
    if _VMEM_LIMIT_CACHE[0] is None:
        try:
            cap = int(pltpu.get_tpu_info().vmem_capacity_bytes)
        except Exception:  # pragma: no cover - conservative fallback
            cap = 128 * 1024 * 1024
        _VMEM_LIMIT_CACHE[0] = int(min(48 * 1024 * 1024, cap // 2))
    return _VMEM_LIMIT_CACHE[0]


def _compiler_params(sem):
    return pltpu.CompilerParams(dimension_semantics=sem,
                                vmem_limit_bytes=_vmem_limit_bytes())


# ------------------------------ tile helpers --------------------------------

def _pick_row_tile(m, target=256):
    """Largest divisor of m that is <= target and a multiple of 8, else full m."""
    for d in range(min(m, target), 0, -1):
        if m % d == 0 and d % 8 == 0:
            return d
    return m


def _pick_col_tile(n, target=512):
    """Largest divisor of n <= target, preferring multiples of 256 (v6e/v7x MXU),
    then 128 (v5e MXU), else full n."""
    best128 = None
    for d in range(min(n, target), 0, -1):
        if n % d == 0:
            if d % 256 == 0:
                return d
            if best128 is None and d % 128 == 0:
                best128 = d
    return best128 if best128 is not None else n


def _pick_k_tile(k, target=512):
    """Largest divisor of k <= target that is a multiple of 128, else full k."""
    for d in range(min(k, target), 0, -1):
        if k % d == 0 and d % 128 == 0:
            return d
    return k


def _pick_q_tile(s, target=256):
    """Query-axis tile for attention: divisor of s, multiple of 8, else full s."""
    for d in range(min(s, target), 0, -1):
        if s % d == 0 and d % 8 == 0:
            return d
    return s


# ----------------------------- Pallas kernels -------------------------------

def _ln_matmul_kernel(x_ref, g_ref, b_ref, w_ref, wb_ref, o_ref, xn_ref):
    """out[:, j] = LayerNorm(x) @ w[:, j] + wb[:, j].

    Grid = (row tiles, col tiles); the column axis is the inner "arbitrary" axis.
    LayerNorm is computed once per row tile (j == 0), cached in bf16 VMEM scratch,
    and reused for every output-column tile (no recomputation, no x re-DMA).
    """
    @pl.when(pl.program_id(1) == 0)
    def _():
        x = x_ref[...]
        mu = jnp.mean(x, axis=-1, keepdims=True)
        var = jnp.mean((x - mu) ** 2, axis=-1, keepdims=True)
        xn = (x - mu) * lax.rsqrt(var + _LN_EPS) * g_ref[...] + b_ref[...]
        xn_ref[...] = xn.astype(_MXU_DTYPE)

    acc = jnp.dot(xn_ref[...], w_ref[...], preferred_element_type=jnp.float32)
    o_ref[...] = (acc + wb_ref[...]).astype(o_ref.dtype)


def _matmul_bias_kernel(x_ref, w_ref, b_ref, o_ref, acc_ref):
    """out = x @ w + b, K streamed as a reduction grid axis (f32 accumulator)."""
    kk = pl.program_id(2)

    @pl.when(kk == 0)
    def _():
        acc_ref[...] = jnp.zeros_like(acc_ref)

    acc_ref[...] += jnp.dot(x_ref[...].astype(_MXU_DTYPE), w_ref[...],
                            preferred_element_type=jnp.float32)

    @pl.when(kk == pl.num_programs(2) - 1)
    def _():
        o_ref[...] = (acc_ref[...] + b_ref[...]).astype(o_ref.dtype)


def _matmul_bias_res_kernel(x_ref, w_ref, b_ref, r_ref, o_ref, acc_ref):
    """out = residual + x @ w + b, K streamed as a reduction grid axis."""
    kk = pl.program_id(2)

    @pl.when(kk == 0)
    def _():
        acc_ref[...] = jnp.zeros_like(acc_ref)

    acc_ref[...] += jnp.dot(x_ref[...].astype(_MXU_DTYPE), w_ref[...],
                            preferred_element_type=jnp.float32)

    @pl.when(kk == pl.num_programs(2) - 1)
    def _():
        o_ref[...] = (acc_ref[...] + b_ref[...] + r_ref[...]).astype(o_ref.dtype)


def _ln_ffn_res_kernel(x_ref, g_ref, bt_ref, w1_ref, b1_ref, w2_ref, b2_ref,
                       o_ref, xn_ref):
    """out = x + SiLU(LayerNorm(x) @ w1 + b1) @ w2 + b2, streamed over the F axis.

    LayerNorm is computed once per row tile (f == 0, cached bf16 in VMEM scratch);
    the f32 output block stays resident and accumulates across the F reduction.
    Only (D,tf) of w1 and (tf,D) of w2 are in VMEM per step.
    """
    f = pl.program_id(1)

    @pl.when(f == 0)
    def _():
        x = x_ref[...]
        mu = jnp.mean(x, axis=-1, keepdims=True)
        var = jnp.mean((x - mu) ** 2, axis=-1, keepdims=True)
        xn = (x - mu) * lax.rsqrt(var + _LN_EPS) * g_ref[...] + bt_ref[...]
        xn_ref[...] = xn.astype(_MXU_DTYPE)

    h = (jnp.dot(xn_ref[...], w1_ref[...], preferred_element_type=jnp.float32)
         + b1_ref[...])
    h = h * jax.nn.sigmoid(h)                    # SiLU in f32 (v5e-safe)
    part = jnp.dot(h.astype(_MXU_DTYPE), w2_ref[...],
                   preferred_element_type=jnp.float32)

    @pl.when(f == 0)
    def _():
        o_ref[...] = x_ref[...] + b2_ref[...] + part

    @pl.when(f != 0)
    def _():
        o_ref[...] += part


def _attn_heads(q, k, v, *, num_heads, scale, causal, q_offset):
    """All-head scaled-dot-product attention on lane-packed tiles.

    q: (Sq, D), k/v: (Sk, D).  Heads are split once (reshape + leading-axis swap)
    and processed by a single batched MXU pass per matmul; the result is written
    back as one lane-dense (Sq, D) tile (no per-head lane slicing or concat).
    """
    sq, d = q.shape
    sk = k.shape[0]
    hd = d // num_heads

    q3 = jnp.swapaxes(q.reshape(sq, num_heads, hd), 0, 1).astype(_MXU_DTYPE)  # (H,Sq,hd)
    k3 = jnp.swapaxes(k.reshape(sk, num_heads, hd), 0, 1).astype(_MXU_DTYPE)  # (H,Sk,hd)
    v3 = jnp.swapaxes(v.reshape(sk, num_heads, hd), 0, 1).astype(_MXU_DTYPE)  # (H,Sk,hd)

    s = jnp.einsum('hqd,hkd->hqk', q3, k3,
                   preferred_element_type=jnp.float32) * scale                # (H,Sq,Sk)

    if causal:
        row = q_offset + lax.broadcasted_iota(jnp.int32, (1, sq, sk), 1)
        col = lax.broadcasted_iota(jnp.int32, (1, sq, sk), 2)
        s = jnp.where(col > row, NEG_INF, s)       # in-place mask, no bias tensor

    m = jnp.max(s, axis=-1, keepdims=True)
    p = jnp.exp(s - m)                              # softmax stats in f32
    denom = jnp.sum(p, axis=-1, keepdims=True)
    p = p * pl.reciprocal(denom, approx=True)       # EUP slot

    o = jnp.einsum('hqk,hkd->hqd', p.astype(_MXU_DTYPE), v3,
                   preferred_element_type=jnp.float32)                        # (H,Sq,hd)
    return jnp.swapaxes(o, 0, 1).reshape(sq, d)     # single lane-dense (Sq, D)


def _self_attn_kernel(qt_ref, kv_ref, o_ref, *, num_heads, scale, causal, q_tile):
    # TODO(synk): for very long Sk add a KV reduction grid axis with online
    # (flash-style) softmax so the (tq, Sk) score tile never exceeds VMEM.
    qt = qt_ref[0]                                # (tq, 3D) packed QKV, query tile
    kv = kv_ref[0]                                # (S,  3D) packed QKV, full K/V
    d = qt.shape[-1] // 3
    q = qt[:, :d]
    k = kv[:, d:2 * d]
    v = kv[:, 2 * d:]
    out = _attn_heads(q, k, v, num_heads=num_heads, scale=scale, causal=causal,
                      q_offset=pl.program_id(1) * q_tile)
    o_ref[0] = out.astype(o_ref.dtype)


def _cross_attn_kernel(q_ref, kv_ref, o_ref, *, num_heads, scale):
    q = q_ref[0]                                  # (tq, D)
    kv = kv_ref[0]                                # (Sk, 2D) packed KV
    d = q.shape[-1]
    k = kv[:, :d]
    v = kv[:, d:]
    out = _attn_heads(q, k, v, num_heads=num_heads, scale=scale, causal=False,
                      q_offset=0)
    o_ref[0] = out.astype(o_ref.dtype)


# ------------------------------ kernel wrappers ------------------------------

def ln_matmul(x, gamma, beta, w, b, out_dtype=jnp.float32):
    """Fused LayerNorm + (x @ w + b).  Grid over (M rows parallel, N cols arbitrary)."""
    m, d = x.shape
    n = w.shape[1]
    tm = _pick_row_tile(m)
    tn = _pick_col_tile(n)
    cost = pl.CostEstimate(
        flops=2 * m * n * d + 10 * m * d,
        transcendentals=m,
        bytes_accessed=4 * m * d + 2 * d * n + m * n * jnp.dtype(out_dtype).itemsize)
    return pl.pallas_call(
        _ln_matmul_kernel,
        grid=(m // tm, n // tn),
        in_specs=[
            pl.BlockSpec((tm, d), lambda i, j: (i, 0)),
            pl.BlockSpec((1, d), lambda i, j: (0, 0)),
            pl.BlockSpec((1, d), lambda i, j: (0, 0)),
            pl.BlockSpec((d, tn), lambda i, j: (0, j)),
            pl.BlockSpec((1, tn), lambda i, j: (0, j)),
        ],
        out_specs=pl.BlockSpec((tm, tn), lambda i, j: (i, j)),
        out_shape=jax.ShapeDtypeStruct((m, n), out_dtype),
        scratch_shapes=[pltpu.VMEM((tm, d), _MXU_DTYPE)],
        compiler_params=_compiler_params(("parallel", "arbitrary")),
        cost_estimate=cost,
    )(x, gamma.reshape(1, d), beta.reshape(1, d), w, b.reshape(1, n))


def matmul_bias(x, w, b, out_dtype=jnp.float32):
    """x @ w + b with K streamed as a reduction grid axis."""
    m, k = x.shape
    n = w.shape[1]
    tm = _pick_row_tile(m)
    tn = _pick_col_tile(n)
    tk = _pick_k_tile(k)
    cost = pl.CostEstimate(
        flops=2 * m * n * k, transcendentals=0,
        bytes_accessed=4 * m * k + 2 * k * n + m * n * jnp.dtype(out_dtype).itemsize)
    return pl.pallas_call(
        _matmul_bias_kernel,
        grid=(m // tm, n // tn, k // tk),
        in_specs=[
            pl.BlockSpec((tm, tk), lambda i, j, kk: (i, kk)),
            pl.BlockSpec((tk, tn), lambda i, j, kk: (kk, j)),
            pl.BlockSpec((1, tn), lambda i, j, kk: (0, j)),
        ],
        out_specs=pl.BlockSpec((tm, tn), lambda i, j, kk: (i, j)),
        out_shape=jax.ShapeDtypeStruct((m, n), out_dtype),
        scratch_shapes=[pltpu.VMEM((tm, tn), jnp.float32)],
        compiler_params=_compiler_params(("parallel", "parallel", "arbitrary")),
        cost_estimate=cost,
    )(x, w, b.reshape(1, n))


def matmul_bias_res(x, w, b, res):
    """Fused out-projection + residual add: res + x @ w + b (K streamed)."""
    m, k = x.shape
    n = w.shape[1]
    tm = _pick_row_tile(m)
    tn = _pick_col_tile(n)
    tk = _pick_k_tile(k)
    cost = pl.CostEstimate(
        flops=2 * m * n * k + m * n, transcendentals=0,
        bytes_accessed=2 * m * k + 2 * k * n + 8 * m * n)
    return pl.pallas_call(
        _matmul_bias_res_kernel,
        grid=(m // tm, n // tn, k // tk),
        in_specs=[
            pl.BlockSpec((tm, tk), lambda i, j, kk: (i, kk)),
            pl.BlockSpec((tk, tn), lambda i, j, kk: (kk, j)),
            pl.BlockSpec((1, tn), lambda i, j, kk: (0, j)),
            pl.BlockSpec((tm, tn), lambda i, j, kk: (i, j)),
        ],
        out_specs=pl.BlockSpec((tm, tn), lambda i, j, kk: (i, j)),
        out_shape=jax.ShapeDtypeStruct((m, n), jnp.float32),
        scratch_shapes=[pltpu.VMEM((tm, tn), jnp.float32)],
        compiler_params=_compiler_params(("parallel", "parallel", "arbitrary")),
        cost_estimate=cost,
    )(x, w, b.reshape(1, n), res)


def ln_ffn_res(x, gamma, beta, w1, b1, w2, b2):
    """Fused LayerNorm + FFN (w1/SiLU/w2) + residual, F streamed as a reduction axis."""
    m, d = x.shape
    f_dim = w1.shape[1]
    tm = _pick_row_tile(m)
    tf = _pick_col_tile(f_dim)
    cost = pl.CostEstimate(
        flops=4 * m * f_dim * d + 10 * m * d,
        transcendentals=m * f_dim + m,
        bytes_accessed=12 * m * d + 4 * d * f_dim)
    # TODO(synk): on v5e/v6e (128 MiB VMEM) add pipeline_mode=pl.Buffered(3) on the
    # streamed w1/w2 BlockSpecs for deeper weight prefetch.
    return pl.pallas_call(
        _ln_ffn_res_kernel,
        grid=(m // tm, f_dim // tf),
        in_specs=[
            pl.BlockSpec((tm, d), lambda i, f: (i, 0)),
            pl.BlockSpec((1, d), lambda i, f: (0, 0)),
            pl.BlockSpec((1, d), lambda i, f: (0, 0)),
            pl.BlockSpec((d, tf), lambda i, f: (0, f)),
            pl.BlockSpec((1, tf), lambda i, f: (0, f)),
            pl.BlockSpec((tf, d), lambda i, f: (f, 0)),
            pl.BlockSpec((1, d), lambda i, f: (0, 0)),
        ],
        out_specs=pl.BlockSpec((tm, d), lambda i, f: (i, 0)),
        out_shape=jax.ShapeDtypeStruct((m, d), jnp.float32),
        scratch_shapes=[pltpu.VMEM((tm, d), _MXU_DTYPE)],
        compiler_params=_compiler_params(("parallel", "arbitrary")),
        cost_estimate=cost,
    )(x, gamma.reshape(1, d), beta.reshape(1, d), w1, b1.reshape(1, f_dim),
      w2, b2.reshape(1, d))


def self_attention(qkv, num_heads, causal):
    """qkv: (B, S, 3D) packed bf16.  Grid = (batch, query tiles), both parallel."""
    bsz, s, d3 = qkv.shape
    d = d3 // 3
    hd = d // num_heads
    tq = _pick_q_tile(s)
    cost = pl.CostEstimate(
        flops=4 * bsz * s * s * d,
        transcendentals=bsz * num_heads * s * s,
        bytes_accessed=2 * bsz * s * d3 * (s // tq) + 2 * bsz * s * d)
    return pl.pallas_call(
        functools.partial(_self_attn_kernel, num_heads=num_heads,
                          scale=1.0 / math.sqrt(hd), causal=causal, q_tile=tq),
        grid=(bsz, s // tq),
        in_specs=[pl.BlockSpec((1, tq, d3), lambda b, qi: (b, qi, 0)),
                  pl.BlockSpec((1, s, d3), lambda b, qi: (b, 0, 0))],
        out_specs=pl.BlockSpec((1, tq, d), lambda b, qi: (b, qi, 0)),
        out_shape=jax.ShapeDtypeStruct((bsz, s, d), _MXU_DTYPE),
        compiler_params=_compiler_params(("parallel", "parallel")),
        cost_estimate=cost,
    )(qkv, qkv)


def cross_attention(q, kv, num_heads):
    """q: (B, Sq, D) bf16, kv: (B, Sk, 2D) packed bf16."""
    bsz, sq, d = q.shape
    _, sk, d2 = kv.shape
    hd = d // num_heads
    tq = _pick_q_tile(sq)
    cost = pl.CostEstimate(
        flops=4 * bsz * sq * sk * d,
        transcendentals=bsz * num_heads * sq * sk,
        bytes_accessed=2 * bsz * sq * d * 2 + 2 * bsz * sk * d2 * (sq // tq))
    return pl.pallas_call(
        functools.partial(_cross_attn_kernel, num_heads=num_heads,
                          scale=1.0 / math.sqrt(hd)),
        grid=(bsz, sq // tq),
        in_specs=[pl.BlockSpec((1, tq, d), lambda b, qi: (b, qi, 0)),
                  pl.BlockSpec((1, sk, d2), lambda b, qi: (b, 0, 0))],
        out_specs=pl.BlockSpec((1, tq, d), lambda b, qi: (b, qi, 0)),
        out_shape=jax.ShapeDtypeStruct((bsz, sq, d), _MXU_DTYPE),
        compiler_params=_compiler_params(("parallel", "parallel")),
        cost_estimate=cost,
    )(q, kv)


# --------------------------- model building blocks ---------------------------

def encoder_layer(x, p, num_heads):
    b, s, d = x.shape
    m = b * s
    x2 = x.reshape(m, d)
    # fused LN1 + packed QKV projection (bf16 output: consumed only by the MXU)
    qkv = ln_matmul(x2, p["ln1_g"], p["ln1_b"],
                    p["attn"]["w_qkv"], p["attn"]["b_qkv"], out_dtype=_MXU_DTYPE)
    a = self_attention(qkv.reshape(b, s, 3 * d), num_heads, causal=False)
    # fused out-projection + residual (f32 residual stream)
    x2 = matmul_bias_res(a.reshape(m, d), p["attn"]["wo"], p["attn"]["bo"], x2)
    # fused LN2 + FFN + residual
    x2 = ln_ffn_res(x2, p["ln2_g"], p["ln2_b"],
                    p["ff_w1"], p["ff_b1"], p["ff_w2"], p["ff_b2"])
    return x2.reshape(b, s, d)


def decoder_layer(x, enc_out, p, num_heads):
    b, s, d = x.shape
    be, sk, _ = enc_out.shape
    m = b * s
    x2 = x.reshape(m, d)

    # masked self-attention (causal mask generated inside the kernel)
    qkv = ln_matmul(x2, p["ln1_g"], p["ln1_b"],
                    p["attn1"]["w_qkv"], p["attn1"]["b_qkv"], out_dtype=_MXU_DTYPE)
    a = self_attention(qkv.reshape(b, s, 3 * d), num_heads, causal=True)
    x2 = matmul_bias_res(a.reshape(m, d), p["attn1"]["wo"], p["attn1"]["bo"], x2)

    # cross-attention: fused LN2 + Q projection; packed KV projection of encoder out
    q = ln_matmul(x2, p["ln2_g"], p["ln2_b"],
                  p["attn2"]["w_q"], p["attn2"]["b_q"], out_dtype=_MXU_DTYPE)
    kv = matmul_bias(enc_out.reshape(be * sk, d),
                     p["attn2"]["w_kv"], p["attn2"]["b_kv"], out_dtype=_MXU_DTYPE)
    a = cross_attention(q.reshape(b, s, d), kv.reshape(be, sk, 2 * d), num_heads)
    x2 = matmul_bias_res(a.reshape(m, d), p["attn2"]["wo"], p["attn2"]["bo"], x2)

    # fused LN3 + FFN + residual
    x2 = ln_ffn_res(x2, p["ln3_g"], p["ln3_b"],
                    p["ff_w1"], p["ff_b1"], p["ff_w2"], p["ff_b2"])
    return x2.reshape(b, s, d)


def embed(ids, tok_table, pos_table, embed_dim):
    # token embedding gather + learned positional embedding (plain-JAX glue)
    _, s = ids.shape
    tok = jnp.take(tok_table, ids, axis=0) * math.sqrt(embed_dim)
    pos = pos_table[:s][None, :, :]
    return tok + pos


def transformer_forward(params, src_ids, tgt_ids, num_heads):
    d = params["src_tok"].shape[1]

    # ---- encode ----
    x = embed(src_ids, params["src_tok"], params["src_pos"], d)
    for lp in params["encoders"]:
        x = encoder_layer(x, lp, num_heads)
    encoder_out = x

    # ---- decode ----
    y = embed(tgt_ids, params["tgt_tok"], params["tgt_pos"], d)
    for lp in params["decoders"]:
        y = decoder_layer(y, encoder_out, lp, num_heads)

    # ---- fused final LayerNorm + output projection (f32 logits) ----
    b, s, _ = y.shape
    logits = ln_matmul(y.reshape(b * s, d), params["final_g"], params["final_b"],
                       params["out_w"], params["out_b"], out_dtype=jnp.float32)
    vocab = params["out_w"].shape[1]
    return logits.reshape(b, s, vocab)


# ------------------------------ parameter init -------------------------------

def _dense(key, shape, scale=0.02, dtype=_MXU_DTYPE):
    return (scale * jax.random.normal(key, shape, dtype=jnp.float32)).astype(dtype)


def init_self_attn_params(key, d):
    k1, k2 = jax.random.split(key)
    return {
        "w_qkv": _dense(k1, (d, 3 * d)), "b_qkv": jnp.zeros((3 * d,), jnp.float32),
        "wo": _dense(k2, (d, d)), "bo": jnp.zeros((d,), jnp.float32),
    }


def init_cross_attn_params(key, d):
    k1, k2, k3 = jax.random.split(key, 3)
    return {
        "w_q": _dense(k1, (d, d)), "b_q": jnp.zeros((d,), jnp.float32),
        "w_kv": _dense(k2, (d, 2 * d)), "b_kv": jnp.zeros((2 * d,), jnp.float32),
        "wo": _dense(k3, (d, d)), "bo": jnp.zeros((d,), jnp.float32),
    }


def init_encoder_params(key, d, f):
    ks = jax.random.split(key, 3)
    return {
        "attn": init_self_attn_params(ks[0], d),
        "ln1_g": jnp.ones((d,), jnp.float32), "ln1_b": jnp.zeros((d,), jnp.float32),
        "ln2_g": jnp.ones((d,), jnp.float32), "ln2_b": jnp.zeros((d,), jnp.float32),
        "ff_w1": _dense(ks[1], (d, f)), "ff_b1": jnp.zeros((f,), jnp.float32),
        "ff_w2": _dense(ks[2], (f, d)), "ff_b2": jnp.zeros((d,), jnp.float32),
    }


def init_decoder_params(key, d, f):
    ks = jax.random.split(key, 4)
    return {
        "attn1": init_self_attn_params(ks[0], d),
        "attn2": init_cross_attn_params(ks[1], d),
        "ln1_g": jnp.ones((d,), jnp.float32), "ln1_b": jnp.zeros((d,), jnp.float32),
        "ln2_g": jnp.ones((d,), jnp.float32), "ln2_b": jnp.zeros((d,), jnp.float32),
        "ln3_g": jnp.ones((d,), jnp.float32), "ln3_b": jnp.zeros((d,), jnp.float32),
        "ff_w1": _dense(ks[2], (d, f)), "ff_b1": jnp.zeros((f,), jnp.float32),
        "ff_w2": _dense(ks[3], (f, d)), "ff_b2": jnp.zeros((d,), jnp.float32),
    }


def init_transformer_params(key, vocab, d, f, n_enc, n_dec, max_pos=512):
    ks = jax.random.split(key, 6 + n_enc + n_dec)
    return {
        "src_tok": _dense(ks[0], (vocab, d), scale=1.0, dtype=jnp.float32),
        "src_pos": _dense(ks[1], (max_pos, d), scale=1.0, dtype=jnp.float32),
        "tgt_tok": _dense(ks[2], (vocab, d), scale=1.0, dtype=jnp.float32),
        "tgt_pos": _dense(ks[3], (max_pos, d), scale=1.0, dtype=jnp.float32),
        "final_g": jnp.ones((d,), jnp.float32),
        "final_b": jnp.zeros((d,), jnp.float32),
        "out_w": _dense(ks[4], (d, vocab)),
        "out_b": jnp.zeros((vocab,), jnp.float32),
        "encoders": [init_encoder_params(ks[6 + i], d, f) for i in range(n_enc)],
        "decoders": [init_decoder_params(ks[6 + n_enc + i], d, f) for i in range(n_dec)],
    }


# ----------------------------------- main ------------------------------------

if __name__ == "__main__":
    VOCAB, EMBED, FF, HEADS = 64, 32, 64, 4
    N_ENC, N_DEC = 2, 2
    B, SRC_LEN, TGT_LEN = 2, 8, 8

    key = jax.random.PRNGKey(0)
    k_par, k_src, k_tgt = jax.random.split(key, 3)

    params = init_transformer_params(k_par, VOCAB, EMBED, FF, N_ENC, N_DEC)
    src_ids = jax.random.randint(k_src, (B, SRC_LEN), 0, VOCAB, dtype=jnp.int32)
    tgt_ids = jax.random.randint(k_tgt, (B, TGT_LEN), 0, VOCAB, dtype=jnp.int32)

    fwd = jax.jit(functools.partial(transformer_forward, num_heads=HEADS))
    logits = fwd(params, src_ids, tgt_ids)
    logits = jax.block_until_ready(logits)

    assert logits.shape == (B, TGT_LEN, VOCAB)
    assert bool(jnp.all(jnp.isfinite(logits)))
    print("KERNEL_OK")
</pallas_src>

<mosaic_0001>
module attributes {stable_mosaic.version = 11 : i64} {
  func.func @_ln_matmul_kernel(%arg0: i32, %arg1: i32, %arg2: memref<16x32xf32, #tpu.memory_space<vmem>>, %arg3: memref<1x32xf32, #tpu.memory_space<vmem>>, %arg4: memref<1x32xf32, #tpu.memory_space<vmem>>, %arg5: memref<32x96xbf16, #tpu.memory_space<vmem>>, %arg6: memref<1x96xf32, #tpu.memory_space<vmem>>, %arg7: memref<16x96xbf16, #tpu.memory_space<vmem>>, %arg8: memref<16x32xbf16, #tpu.memory_space<vmem>>) attributes {dimension_semantics = [#tpu.dimension_semantics<parallel>, #tpu.dimension_semantics<arbitrary>], iteration_bounds = array<i64: 1, 1>, scalar_prefetch = 0 : i64, scratch_operands = 1 : i64, tpu.core_type = #tpu.core_type<tc>, window_params = [{transform_indices = @transform_0, window_bounds = array<i64: 16, 32>}, {pipeline_mode = #tpu.pipeline_mode<synchronous>, transform_indices = @transform_1, window_bounds = array<i64: 1, 32>}, {pipeline_mode = #tpu.pipeline_mode<synchronous>, transform_indices = @transform_2, window_bounds = array<i64: 1, 32>}, {transform_indices = @transform_3, window_bounds = array<i64: 32, 96>}, {transform_indices = @transform_4, window_bounds = array<i64: 1, 96>}, {transform_indices = @transform_5, window_bounds = array<i64: 16, 96>}]} {
    %c0_i32 = arith.constant 0 : i32
    %0 = arith.cmpi eq, %arg1, %c0_i32 : i32
    %1 = arith.extui %0 : i1 to i32
    %c0_i32_0 = arith.constant 0 : i32
    %2 = arith.cmpi ne, %1, %c0_i32_0 : i32
    scf.if %2 {
      %c0_8 = arith.constant 0 : index
      %c0_9 = arith.constant 0 : index
      %11 = vector.load %arg2[%c0_8, %c0_9] : memref<16x32xf32, #tpu.memory_space<vmem>>, vector<16x32xf32>
      %cst_10 = arith.constant dense<0.000000e+00> : vector<16xf32>
      %12 = vector.multi_reduction <add>, %11, %cst_10 [1] : vector<16x32xf32> to vector<16xf32>
      %13 = vector.shape_cast %12 : vector<16xf32> to vector<16x1xf32>
      %cst_11 = arith.constant 3.200000e+01 : f32
      %14 = vector.broadcast %cst_11 : f32 to vector<16x1xf32>
      %15 = arith.divf %13, %14 : vector<16x1xf32>
      %16 = vector.broadcast %15 : vector<16x1xf32> to vector<16x32xf32>
      %17 = arith.subf %11, %16 : vector<16x32xf32>
      %18 = arith.mulf %17, %17 : vector<16x32xf32>
      %cst_12 = arith.constant dense<0.000000e+00> : vector<16xf32>
      %19 = vector.multi_reduction <add>, %18, %cst_12 [1] : vector<16x32xf32> to vector<16xf32>
      %20 = vector.shape_cast %19 : vector<16xf32> to vector<16x1xf32>
      %cst_13 = arith.constant 3.200000e+01 : f32
      %21 = vector.broadcast %cst_13 : f32 to vector<16x1xf32>
      %22 = arith.divf %20, %21 : vector<16x1xf32>
      %23 = vector.broadcast %15 : vector<16x1xf32> to vector<16x32xf32>
      %24 = arith.subf %11, %23 : vector<16x32xf32>
      %cst_14 = arith.constant 9.99999974E-6 : f32
      %25 = vector.broadcast %cst_14 : f32 to vector<16x1xf32>
      %26 = arith.addf %22, %25 : vector<16x1xf32>
      %27 = math.rsqrt %26 : vector<16x1xf32>
      %28 = vector.broadcast %27 : vector<16x1xf32> to vector<16x32xf32>
      %29 = arith.mulf %24, %28 : vector<16x32xf32>
      %c0_15 = arith.constant 0 : index
      %c0_16 = arith.constant 0 : index
      %30 = vector.load %arg3[%c0_15, %c0_16] : memref<1x32xf32, #tpu.memory_space<vmem>>, vector<1x32xf32>
      %31 = vector.broadcast %30 : vector<1x32xf32> to vector<16x32xf32>
      %32 = arith.mulf %29, %31 : vector<16x32xf32>
      %c0_17 = arith.constant 0 : index
      %c0_18 = arith.constant 0 : index
      %33 = vector.load %arg4[%c0_17, %c0_18] : memref<1x32xf32, #tpu.memory_space<vmem>>, vector<1x32xf32>
      %34 = vector.broadcast %33 : vector<1x32xf32> to vector<16x32xf32>
      %35 = arith.addf %32, %34 : vector<16x32xf32>
      %36 = arith.truncf %35 : vector<16x32xf32> to vector<16x32xbf16>
      %c0_19 = arith.constant 0 : index
      %c0_20 = arith.constant 0 : index
      %37 = vector.load %arg8[%c0_19, %c0_20] : memref<16x32xbf16, #tpu.memory_space<vmem>>, vector<16x32xbf16>
      tpu.vector_store %arg8[%c0_19, %c0_20], %36 {strides = array<i32>} : memref<16x32xbf16, #tpu.memory_space<vmem>>, vector<16x32xbf16>,
    } else {
    }
    %c0 = arith.constant 0 : index
    %c0_1 = arith.constant 0 : index
    %3 = vector.load %arg8[%c0, %c0_1] : memref<16x32xbf16, #tpu.memory_space<vmem>>, vector<16x32xbf16>
    %c0_2 = arith.constant 0 : index
    %c0_3 = arith.constant 0 : index
    %4 = vector.load %arg5[%c0_2, %c0_3] : memref<32x96xbf16, #tpu.memory_space<vmem>>, vector<32x96xbf16>
    %cst = arith.constant dense<0.000000e+00> : vector<16x96xf32>
    %5 = tpu.matmul %3, %4, %cst {dimension_numbers = #tpu.dot_dimension_numbers<[1], [0], [0], [1], [0, 0, 1, 1], [], []>} : vector<16x32xbf16>, vector<32x96xbf16>, vector<16x96xf32> -> vector<16x96xf32>
    %c0_4 = arith.constant 0 : index
    %c0_5 = arith.constant 0 : index
    %6 = vector.load %arg6[%c0_4, %c0_5] : memref<1x96xf32, #tpu.memory_space<vmem>>, vector<1x96xf32>
    %7 = vector.broadcast %6 : vector<1x96xf32> to vector<16x96xf32>
    %8 = arith.addf %5, %7 : vector<16x96xf32>
    %9 = arith.truncf %8 : vector<16x96xf32> to vector<16x96xbf16>
    %c0_6 = arith.constant 0 : index
    %c0_7 = arith.constant 0 : index
    %10 = vector.load %arg7[%c0_6, %c0_7] : memref<16x96xbf16, #tpu.memory_space<vmem>>, vector<16x96xbf16>
    tpu.vector_store %arg7[%c0_6, %c0_7], %9 {strides = array<i32>} : memref<16x96xbf16, #tpu.memory_space<vmem>>, vector<16x96xbf16>,
    return
  }
  func.func @transform_0(%arg0: i32, %arg1: i32) -> (i32, i32) {
    %c0_i32 = arith.constant 0 : i32
    %c0_i32_0 = arith.constant 0 : i32
    return %arg0, %c0_i32 : i32, i32
  }
  func.func @transform_1(%arg0: i32, %arg1: i32) -> (i32, i32) {
    %c0_i32 = arith.constant 0 : i32
    %c0_i32_0 = arith.constant 0 : i32
    %c0_i32_1 = arith.constant 0 : i32
    return %c0_i32, %c0_i32_0 : i32, i32
  }
  func.func @transform_2(%arg0: i32, %arg1: i32) -> (i32, i32) {
    %c0_i32 = arith.constant 0 : i32
    %c0_i32_0 = arith.constant 0 : i32
    %c0_i32_1 = arith.constant 0 : i32
    return %c0_i32, %c0_i32_0 : i32, i32
  }
  func.func @transform_3(%arg0: i32, %arg1: i32) -> (i32, i32) {
    %c0_i32 = arith.constant 0 : i32
    %c0_i32_0 = arith.constant 0 : i32
    return %c0_i32, %arg1 : i32, i32
  }
  func.func @transform_4(%arg0: i32, %arg1: i32) -> (i32, i32) {
    %c0_i32 = arith.constant 0 : i32
    %c0_i32_0 = arith.constant 0 : i32
    return %c0_i32, %arg1 : i32, i32
  }
  func.func @transform_5(%arg0: i32, %arg1: i32) -> (i32, i32) {
    %c0_i32 = arith.constant 0 : i32
    return %arg0, %arg1 : i32, i32
  }
}

module attributes {stable_mosaic.version = 11 : i64} {
  func.func @_self_attn_kernel(%arg0: i32, %arg1: i32, %arg2: memref<1x8x96xbf16, #tpu.memory_space<vmem>>, %arg3: memref<1x8x96xbf16, #tpu.memory_space<vmem>>, %arg4: memref<1x8x32xbf16, #tpu.memory_space<vmem>>) attributes {dimension_semantics = [#tpu.dimension_semantics<parallel>, #tpu.dimension_semantics<parallel>], iteration_bounds = array<i64: 2, 1>, scalar_prefetch = 0 : i64, scratch_operands = 0 : i64, tpu.core_type = #tpu.core_type<tc>, window_params = [{transform_indices = @transform_0, window_bounds = array<i64: 1, 8, 96>}, {transform_indices = @transform_1, window_bounds = array<i64: 1, 8, 96>}, {transform_indices = @transform_2, window_bounds = array<i64: 1, 8, 32>}]} {
    %c0 = arith.constant 0 : index
    %c0_0 = arith.constant 0 : index
    %c0_1 = arith.constant 0 : index
    %0 = vector.load %arg2[%c0, %c0_0, %c0_1] : memref<1x8x96xbf16, #tpu.memory_space<vmem>>, vector<1x8x96xbf16>
    %1 = vector.shape_cast %0 : vector<1x8x96xbf16> to vector<8x96xbf16>
    %c0_2 = arith.constant 0 : index
    %c0_3 = arith.constant 0 : index
    %c0_4 = arith.constant 0 : index
    %2 = vector.load %arg3[%c0_2, %c0_3, %c0_4] : memref<1x8x96xbf16, #tpu.memory_space<vmem>>, vector<1x8x96xbf16>
    %3 = vector.shape_cast %2 : vector<1x8x96xbf16> to vector<8x96xbf16>
    %4 = vector.extract_strided_slice %1 {offsets = [0, 0], sizes = [8, 32], strides = [1, 1]} : vector<8x96xbf16> to vector<8x32xbf16>
    %5 = vector.extract_strided_slice %3 {offsets = [0, 32], sizes = [8, 32], strides = [1, 1]} : vector<8x96xbf16> to vector<8x32xbf16>
    %6 = vector.extract_strided_slice %3 {offsets = [0, 64], sizes = [8, 32], strides = [1, 1]} : vector<8x96xbf16> to vector<8x32xbf16>
    %7 = vector.shape_cast %4 : vector<8x32xbf16> to vector<8x4x8xbf16>
    %8 = tpu.transpose %7, [1, 0, 2] : vector<8x4x8xbf16> -> vector<4x8x8xbf16>
    %9 = vector.shape_cast %5 : vector<8x32xbf16> to vector<8x4x8xbf16>
    %10 = tpu.transpose %9, [1, 0, 2] : vector<8x4x8xbf16> -> vector<4x8x8xbf16>
    %11 = vector.shape_cast %6 : vector<8x32xbf16> to vector<8x4x8xbf16>
    %12 = tpu.transpose %11, [1, 0, 2] : vector<8x4x8xbf16> -> vector<4x8x8xbf16>
    "tpu.trace_start"() <{level = 10 : i32, message = "hqd,hkd->hqk"}> : () -> ()
    %cst = arith.constant dense<0.000000e+00> : vector<4x8x8xf32>
    %13 = tpu.matmul %8, %10, %cst {dimension_numbers = #tpu.dot_dimension_numbers<[2], [2], [1], [1], [0, 0, 0, 1, 1, 1], [0], [0]>} : vector<4x8x8xbf16>, vector<4x8x8xbf16>, vector<4x8x8xf32> -> vector<4x8x8xf32>
    "tpu.trace_stop"() : () -> ()
    %cst_5 = arith.constant 0.353553385 : f32
    %14 = vector.broadcast %cst_5 : f32 to vector<4x8x8xf32>
    %15 = arith.mulf %13, %14 : vector<4x8x8xf32>
    %cst_6 = arith.constant dense<0xFF800000> : vector<4x8xf32>
    %16 = vector.multi_reduction <maximumf>, %15, %cst_6 [2] : vector<4x8x8xf32> to vector<4x8xf32>
    %17 = vector.shape_cast %16 : vector<4x8xf32> to vector<4x8x1xf32>
    %18 = vector.broadcast %17 : vector<4x8x1xf32> to vector<4x8x8xf32>
    %19 = arith.subf %15, %18 : vector<4x8x8xf32>
    %20 = math.exp %19 : vector<4x8x8xf32>
    %cst_7 = arith.constant dense<0.000000e+00> : vector<4x8xf32>
    %21 = vector.multi_reduction <add>, %20, %cst_7 [2] : vector<4x8x8xf32> to vector<4x8xf32>
    %22 = vector.shape_cast %21 : vector<4x8xf32> to vector<4x8x1xf32>
    %23 = tpu.reciprocal %22 {approx = true} : vector<4x8x1xf32> -> vector<4x8x1xf32>
    %24 = vector.broadcast %23 : vector<4x8x1xf32> to vector<4x8x8xf32>
    %25 = arith.mulf %20, %24 : vector<4x8x8xf32>
    %26 = arith.truncf %25 : vector<4x8x8xf32> to vector<4x8x8xbf16>
    "tpu.trace_start"() <{level = 10 : i32, message = "hqk,hkd->hqd"}> : () -> ()
    %cst_8 = arith.constant dense<0.000000e+00> : vector<4x8x8xf32>
    %27 = tpu.matmul %26, %12, %cst_8 {dimension_numbers = #tpu.dot_dimension_numbers<[2], [1], [1], [2], [0, 0, 0, 1, 1, 2], [0], [0]>} : vector<4x8x8xbf16>, vector<4x8x8xbf16>, vector<4x8x8xf32> -> vector<4x8x8xf32>
    "tpu.trace_stop"() : () -> ()
    %28 = tpu.transpose %27, [1, 0, 2] : vector<4x8x8xf32> -> vector<8x4x8xf32>
    %29 = vector.shape_cast %28 : vector<8x4x8xf32> to vector<8x32xf32>
    %30 = arith.truncf %29 : vector<8x32xf32> to vector<8x32xbf16>
    %c0_9 = arith.constant 0 : index
    %c0_10 = arith.constant 0 : index
    %c0_11 = arith.constant 0 : index
    %31 = vector.load %arg4[%c0_9, %c0_10, %c0_11] : memref<1x8x32xbf16, #tpu.memory_space<vmem>>, vector<1x8x32xbf16>
    %32 = vector.shape_cast %31 : vector<1x8x32xbf16> to vector<8x32xbf16>
    %33 = vector.shape_cast %30 : vector<8x32xbf16> to vector<1x8x32xbf16>
    tpu.vector_store %arg4[%c0_9, %c0_10, %c0_11], %33 {strides = array<i32>} : memref<1x8x32xbf16, #tpu.memory_space<vmem>>, vector<1x8x32xbf16>,
    return
  }
  func.func @transform_0(%arg0: i32, %arg1: i32) -> (i32, i32, i32) {
    %c0_i32 = arith.constant 0 : i32
    %c0_i32_0 = arith.constant 0 : i32
    return %arg0, %arg1, %c0_i32 : i32, i32, i32
  }
  func.func @transform_1(%arg0: i32, %arg1: i32) -> (i32, i32, i32) {
    %c0_i32 = arith.constant 0 : i32
    %c0_i32_0 = arith.constant 0 : i32
    %c0_i32_1 = arith.constant 0 : i32
    return %arg0, %c0_i32, %c0_i32_0 : i32, i32, i32
  }
  func.func @transform_2(%arg0: i32, %arg1: i32) -> (i32, i32, i32) {
    %c0_i32 = arith.constant 0 : i32
    %c0_i32_0 = arith.constant 0 : i32
    return %arg0, %arg1, %c0_i32 : i32, i32, i32
  }
}

module attributes {stable_mosaic.version = 11 : i64} {
  func.func @_ln_ffn_res_kernel(%arg0: i32, %arg1: i32, %arg2: memref<16x32xf32, #tpu.memory_space<vmem>>, %arg3: memref<1x32xf32, #tpu.memory_space<vmem>>, %arg4: memref<1x32xf32, #tpu.memory_space<vmem>>, %arg5: memref<32x64xbf16, #tpu.memory_space<vmem>>, %arg6: memref<1x64xf32, #tpu.memory_space<vmem>>, %arg7: memref<64x32xbf16, #tpu.memory_space<vmem>>, %arg8: memref<1x32xf32, #tpu.memory_space<vmem>>, %arg9: memref<16x32xf32, #tpu.memory_space<vmem>>, %arg10: memref<16x32xbf16, #tpu.memory_space<vmem>>) attributes {dimension_semantics = [#tpu.dimension_semantics<parallel>, #tpu.dimension_semantics<arbitrary>], iteration_bounds = array<i64: 1, 1>, scalar_prefetch = 0 : i64, scratch_operands = 1 : i64, tpu.core_type = #tpu.core_type<tc>, window_params = [{transform_indices = @transform_0, window_bounds = array<i64: 16, 32>}, {pipeline_mode = #tpu.pipeline_mode<synchronous>, transform_indices = @transform_1, window_bounds = array<i64: 1, 32>}, {pipeline_mode = #tpu.pipeline_mode<synchronous>, transform_indices = @transform_2, window_bounds = array<i64: 1, 32>}, {transform_indices = @transform_3, window_bounds = array<i64: 32, 64>}, {transform_indices = @transform_4, window_bounds = array<i64: 1, 64>}, {transform_indices = @transform_5, window_bounds = array<i64: 64, 32>}, {pipeline_mode = #tpu.pipeline_mode<synchronous>, transform_indices = @transform_6, window_bounds = array<i64: 1, 32>}, {transform_indices = @transform_7, window_bounds = array<i64: 16, 32>}]} {
    %c0_i32 = arith.constant 0 : i32
    %0 = arith.cmpi eq, %arg1, %c0_i32 : i32
    %1 = arith.extui %0 : i1 to i32
    %c0_i32_0 = arith.constant 0 : i32
    %2 = arith.cmpi ne, %1, %c0_i32_0 : i32
    scf.if %2 {
      %c0_14 = arith.constant 0 : index
      %c0_15 = arith.constant 0 : index
      %24 = vector.load %arg2[%c0_14, %c0_15] : memref<16x32xf32, #tpu.memory_space<vmem>>, vector<16x32xf32>
      %cst_16 = arith.constant dense<0.000000e+00> : vector<16xf32>
      %25 = vector.multi_reduction <add>, %24, %cst_16 [1] : vector<16x32xf32> to vector<16xf32>
      %26 = vector.shape_cast %25 : vector<16xf32> to vector<16x1xf32>
      %cst_17 = arith.constant 3.200000e+01 : f32
      %27 = vector.broadcast %cst_17 : f32 to vector<16x1xf32>
      %28 = arith.divf %26, %27 : vector<16x1xf32>
      %29 = vector.broadcast %28 : vector<16x1xf32> to vector<16x32xf32>
      %30 = arith.subf %24, %29 : vector<16x32xf32>
      %31 = arith.mulf %30, %30 : vector<16x32xf32>
      %cst_18 = arith.constant dense<0.000000e+00> : vector<16xf32>
      %32 = vector.multi_reduction <add>, %31, %cst_18 [1] : vector<16x32xf32> to vector<16xf32>
      %33 = vector.shape_cast %32 : vector<16xf32> to vector<16x1xf32>
      %cst_19 = arith.constant 3.200000e+01 : f32
      %34 = vector.broadcast %cst_19 : f32 to vector<16x1xf32>
      %35 = arith.divf %33, %34 : vector<16x1xf32>
      %36 = vector.broadcast %28 : vector<16x1xf32> to vector<16x32xf32>
      %37 = arith.subf %24, %36 : vector<16x32xf32>
      %cst_20 = arith.constant 9.99999974E-6 : f32
      %38 = vector.broadcast %cst_20 : f32 to vector<16x1xf32>
      %39 = arith.addf %35, %38 : vector<16x1xf32>
      %40 = math.rsqrt %39 : vector<16x1xf32>
      %41 = vector.broadcast %40 : vector<16x1xf32> to vector<16x32xf32>
      %42 = arith.mulf %37, %41 : vector<16x32xf32>
      %c0_21 = arith.constant 0 : index
      %c0_22 = arith.constant 0 : index
      %43 = vector.load %arg3[%c0_21, %c0_22] : memref<1x32xf32, #tpu.memory_space<vmem>>, vector<1x32xf32>
      %44 = vector.broadcast %43 : vector<1x32xf32> to vector<16x32xf32>
      %45 = arith.mulf %42, %44 : vector<16x32xf32>
      %c0_23 = arith.constant 0 : index
      %c0_24 = arith.constant 0 : index
      %46 = vector.load %arg4[%c0_23, %c0_24] : memref<1x32xf32, #tpu.memory_space<vmem>>, vector<1x32xf32>
      %47 = vector.broadcast %46 : vector<1x32xf32> to vector<16x32xf32>
      %48 = arith.addf %45, %47 : vector<16x32xf32>
      %49 = arith.truncf %48 : vector<16x32xf32> to vector<16x32xbf16>
      %c0_25 = arith.constant 0 : index
      %c0_26 = arith.constant 0 : index
      %50 = vector.load %arg10[%c0_25, %c0_26] : memref<16x32xbf16, #tpu.memory_space<vmem>>, vector<16x32xbf16>
      tpu.vector_store %arg10[%c0_25, %c0_26], %49 {strides = array<i32>} : memref<16x32xbf16, #tpu.memory_space<vmem>>, vector<16x32xbf16>,
    } else {
    }
    %c0 = arith.constant 0 : index
    %c0_1 = arith.constant 0 : index
    %3 = vector.load %arg10[%c0, %c0_1] : memref<16x32xbf16, #tpu.memory_space<vmem>>, vector<16x32xbf16>
    %c0_2 = arith.constant 0 : index
    %c0_3 = arith.constant 0 : index
    %4 = vector.load %arg5[%c0_2, %c0_3] : memref<32x64xbf16, #tpu.memory_space<vmem>>, vector<32x64xbf16>
    %cst = arith.constant dense<0.000000e+00> : vector<16x64xf32>
    %5 = tpu.matmul %3, %4, %cst {dimension_numbers = #tpu.dot_dimension_numbers<[1], [0], [0], [1], [0, 0, 1, 1], [], []>} : vector<16x32xbf16>, vector<32x64xbf16>, vector<16x64xf32> -> vector<16x64xf32>
    %c0_4 = arith.constant 0 : index
    %c0_5 = arith.constant 0 : index
    %6 = vector.load %arg6[%c0_4, %c0_5] : memref<1x64xf32, #tpu.memory_space<vmem>>, vector<1x64xf32>
    %7 = vector.broadcast %6 : vector<1x64xf32> to vector<16x64xf32>
    %8 = arith.addf %5, %7 : vector<16x64xf32>
    %9 = arith.negf %8 : vector<16x64xf32>
    %10 = math.exp %9 : vector<16x64xf32>
    %cst_6 = arith.constant 1.000000e+00 : f32
    %11 = vector.broadcast %cst_6 : f32 to vector<16x64xf32>
    %12 = arith.addf %11, %10 : vector<16x64xf32>
    %13 = arith.divf %11, %12 : vector<16x64xf32>
    %14 = arith.mulf %8, %13 : vector<16x64xf32>
    %15 = arith.truncf %14 : vector<16x64xf32> to vector<16x64xbf16>
    %c0_7 = arith.constant 0 : index
    %c0_8 = arith.constant 0 : index
    %16 = vector.load %arg7[%c0_7, %c0_8] : memref<64x32xbf16, #tpu.memory_space<vmem>>, vector<64x32xbf16>
    %cst_9 = arith.constant dense<0.000000e+00> : vector<16x32xf32>
    %17 = tpu.matmul %15, %16, %cst_9 {dimension_numbers = #tpu.dot_dimension_numbers<[1], [0], [0], [1], [0, 0, 1, 1], [], []>} : vector<16x64xbf16>, vector<64x32xbf16>, vector<16x32xf32> -> vector<16x32xf32>
    %c0_i32_10 = arith.constant 0 : i32
    %18 = arith.cmpi eq, %arg1, %c0_i32_10 : i32
    %19 = arith.extui %18 : i1 to i32
    %c0_i32_11 = arith.constant 0 : i32
    %20 = arith.cmpi ne, %19, %c0_i32_11 : i32
    scf.if %20 {
      %c0_14 = arith.constant 0 : index
      %c0_15 = arith.constant 0 : index
      %24 = vector.load %arg2[%c0_14, %c0_15] : memref<16x32xf32, #tpu.memory_space<vmem>>, vector<16x32xf32>
      %c0_16 = arith.constant 0 : index
      %c0_17 = arith.constant 0 : index
      %25 = vector.load %arg8[%c0_16, %c0_17] : memref<1x32xf32, #tpu.memory_space<vmem>>, vector<1x32xf32>
      %26 = vector.broadcast %25 : vector<1x32xf32> to vector<16x32xf32>
      %27 = arith.addf %24, %26 : vector<16x32xf32>
      %28 = arith.addf %27, %17 : vector<16x32xf32>
      %c0_18 = arith.constant 0 : index
      %c0_19 = arith.constant 0 : index
      %29 = vector.load %arg9[%c0_18, %c0_19] : memref<16x32xf32, #tpu.memory_space<vmem>>, vector<16x32xf32>
      tpu.vector_store %arg9[%c0_18, %c0_19], %28 {strides = array<i32>} : memref<16x32xf32, #tpu.memory_space<vmem>>, vector<16x32xf32>,
    } else {
    }
    %c0_i32_12 = arith.constant 0 : i32
    %21 = arith.cmpi ne, %arg1, %c0_i32_12 : i32
    %22 = arith.extui %21 : i1 to i32
    %c0_i32_13 = arith.constant 0 : i32
    %23 = arith.cmpi ne, %22, %c0_i32_13 : i32
    scf.if %23 {
      %c0_14 = arith.constant 0 : index
      %c0_15 = arith.constant 0 : index
      %24 = vector.load %arg9[%c0_14, %c0_15] : memref<16x32xf32, #tpu.memory_space<vmem>>, vector<16x32xf32>
      %25 = arith.addf %24, %17 : vector<16x32xf32>
      %c0_16 = arith.constant 0 : index
      %c0_17 = arith.constant 0 : index
      %26 = vector.load %arg9[%c0_16, %c0_17] : memref<16x32xf32, #tpu.memory_space<vmem>>, vector<16x32xf32>
      tpu.vector_store %arg9[%c0_16, %c0_17], %25 {strides = array<i32>} : memref<16x32xf32, #tpu.memory_space<vmem>>, vector<16x32xf32>,
    } else {
    }
    return
  }
  func.func @transform_0(%arg0: i32, %arg1: i32) -> (i32, i32) {
    %c0_i32 = arith.constant 0 : i32
    %c0_i32_0 = arith.constant 0 : i32
    return %arg0, %c0_i32 : i32, i32
  }
  func.func @transform_1(%arg0: i32, %arg1: i32) -> (i32, i32) {
    %c0_i32 = arith.constant 0 : i32
    %c0_i32_0 = arith.constant 0 : i32
    %c0_i32_1 = arith.constant 0 : i32
    return %c0_i32, %c0_i32_0 : i32, i32
  }
  func.func @transform_2(%arg0: i32, %arg1: i32) -> (i32, i32) {
    %c0_i32 = arith.constant 0 : i32
    %c0_i32_0 = arith.constant 0 : i32
    %c0_i32_1 = arith.constant 0 : i32
    return %c0_i32, %c0_i32_0 : i32, i32
  }
  func.func @transform_3(%arg0: i32, %arg1: i32) -> (i32, i32) {
    %c0_i32 = arith.constant 0 : i32
    %c0_i32_0 = arith.constant 0 : i32
    return %c0_i32, %arg1 : i32, i32
  }
  func.func @transform_4(%arg0: i32, %arg1: i32) -> (i32, i32) {
    %c0_i32 = arith.constant 0 : i32
    %c0_i32_0 = arith.constant 0 : i32
    return %c0_i32, %arg1 : i32, i32
  }
  func.func @transform_5(%arg0: i32, %arg1: i32) -> (i32, i32) {
    %c0_i32 = arith.constant 0 : i32
    %c0_i32_0 = arith.constant 0 : i32
    return %arg1, %c0_i32 : i32, i32
  }
  func.func @transform_6(%arg0: i32, %arg1: i32) -> (i32, i32) {
    %c0_i32 = arith.constant 0 : i32
    %c0_i32_0 = arith.constant 0 : i32
    %c0_i32_1 = arith.constant 0 : i32
    return %c0_i32, %c0_i32_0 : i32, i32
  }
  func.func @transform_7(%arg0: i32, %arg1: i32) -> (i32, i32) {
    %c0_i32 = arith.constant 0 : i32
    %c0_i32_0 = arith.constant 0 : i32
    return %arg0, %c0_i32 : i32, i32
  }
}

module attributes {stable_mosaic.version = 11 : i64} {
  func.func @_matmul_bias_res_kernel(%arg0: i32, %arg1: i32, %arg2: i32, %arg3: memref<16x32xbf16, #tpu.memory_space<vmem>>, %arg4: memref<32x32xbf16, #tpu.memory_space<vmem>>, %arg5: memref<1x32xf32, #tpu.memory_space<vmem>>, %arg6: memref<16x32xf32, #tpu.memory_space<vmem>>, %arg7: memref<16x32xf32, #tpu.memory_space<vmem>>, %arg8: memref<16x32xf32, #tpu.memory_space<vmem>>) attributes {dimension_semantics = [#tpu.dimension_semantics<parallel>, #tpu.dimension_semantics<parallel>, #tpu.dimension_semantics<arbitrary>], iteration_bounds = array<i64: 1, 1, 1>, scalar_prefetch = 0 : i64, scratch_operands = 1 : i64, tpu.core_type = #tpu.core_type<tc>, window_params = [{transform_indices = @transform_0, window_bounds = array<i64: 16, 32>}, {transform_indices = @transform_1, window_bounds = array<i64: 32, 32>}, {transform_indices = @transform_2, window_bounds = array<i64: 1, 32>}, {transform_indices = @transform_3, window_bounds = array<i64: 16, 32>}, {transform_indices = @transform_4, window_bounds = array<i64: 16, 32>}]} {
    %c0_i32 = arith.constant 0 : i32
    %0 = arith.cmpi eq, %arg2, %c0_i32 : i32
    %1 = arith.extui %0 : i1 to i32
    %c0_i32_0 = arith.constant 0 : i32
    %2 = arith.cmpi ne, %1, %c0_i32_0 : i32
    scf.if %2 {
      %cst_10 = arith.constant 0.000000e+00 : f32
      %12 = vector.broadcast %cst_10 : f32 to vector<16x32xf32>
      %c0_11 = arith.constant 0 : index
      %c0_12 = arith.constant 0 : index
      %13 = vector.load %arg8[%c0_11, %c0_12] : memref<16x32xf32, #tpu.memory_space<vmem>>, vector<16x32xf32>
      tpu.vector_store %arg8[%c0_11, %c0_12], %12 {strides = array<i32>} : memref<16x32xf32, #tpu.memory_space<vmem>>, vector<16x32xf32>,
    } else {
    }
    %c0 = arith.constant 0 : index
    %c0_1 = arith.constant 0 : index
    %3 = vector.load %arg8[%c0, %c0_1] : memref<16x32xf32, #tpu.memory_space<vmem>>, vector<16x32xf32>
    %c0_2 = arith.constant 0 : index
    %c0_3 = arith.constant 0 : index
    %4 = vector.load %arg3[%c0_2, %c0_3] : memref<16x32xbf16, #tpu.memory_space<vmem>>, vector<16x32xbf16>
    %c0_4 = arith.constant 0 : index
    %c0_5 = arith.constant 0 : index
    %5 = vector.load %arg4[%c0_4, %c0_5] : memref<32x32xbf16, #tpu.memory_space<vmem>>, vector<32x32xbf16>
    %cst = arith.constant dense<0.000000e+00> : vector<16x32xf32>
    %6 = tpu.matmul %4, %5, %cst {dimension_numbers = #tpu.dot_dimension_numbers<[1], [0], [0], [1], [0, 0, 1, 1], [], []>} : vector<16x32xbf16>, vector<32x32xbf16>, vector<16x32xf32> -> vector<16x32xf32>
    %7 = arith.addf %3, %6 : vector<16x32xf32>
    %c0_6 = arith.constant 0 : index
    %c0_7 = arith.constant 0 : index
    %8 = vector.load %arg8[%c0_6, %c0_7] : memref<16x32xf32, #tpu.memory_space<vmem>>, vector<16x32xf32>
    tpu.vector_store %arg8[%c0_6, %c0_7], %7 {strides = array<i32>} : memref<16x32xf32, #tpu.memory_space<vmem>>, vector<16x32xf32>,
    %c0_i32_8 = arith.constant 0 : i32
    %9 = arith.cmpi eq, %arg2, %c0_i32_8 : i32
    %10 = arith.extui %9 : i1 to i32
    %c0_i32_9 = arith.constant 0 : i32
    %11 = arith.cmpi ne, %10, %c0_i32_9 : i32
    scf.if %11 {
      %c0_10 = arith.constant 0 : index
      %c0_11 = arith.constant 0 : index
      %12 = vector.load %arg8[%c0_10, %c0_11] : memref<16x32xf32, #tpu.memory_space<vmem>>, vector<16x32xf32>
      %c0_12 = arith.constant 0 : index
      %c0_13 = arith.constant 0 : index
      %13 = vector.load %arg5[%c0_12, %c0_13] : memref<1x32xf32, #tpu.memory_space<vmem>>, vector<1x32xf32>
      %14 = vector.broadcast %13 : vector<1x32xf32> to vector<16x32xf32>
      %15 = arith.addf %12, %14 : vector<16x32xf32>
      %c0_14 = arith.constant 0 : index
      %c0_15 = arith.constant 0 : index
      %16 = vector.load %arg6[%c0_14, %c0_15] : memref<16x32xf32, #tpu.memory_space<vmem>>, vector<16x32xf32>
      %17 = arith.addf %15, %16 : vector<16x32xf32>
      %c0_16 = arith.constant 0 : index
      %c0_17 = arith.constant 0 : index
      %18 = vector.load %arg7[%c0_16, %c0_17] : memref<16x32xf32, #tpu.memory_space<vmem>>, vector<16x32xf32>
      tpu.vector_store %arg7[%c0_16, %c0_17], %17 {strides = array<i32>} : memref<16x32xf32, #tpu.memory_space<vmem>>, vector<16x32xf32>,
    } else {
    }
    return
  }
  func.func @transform_0(%arg0: i32, %arg1: i32, %arg2: i32) -> (i32, i32) {
    %c0_i32 = arith.constant 0 : i32
    return %arg0, %arg2 : i32, i32
  }
  func.func @transform_1(%arg0: i32, %arg1: i32, %arg2: i32) -> (i32, i32) {
    %c0_i32 = arith.constant 0 : i32
    return %arg2, %arg1 : i32, i32
  }
  func.func @transform_2(%arg0: i32, %arg1: i32, %arg2: i32) -> (i32, i32) {
    %c0_i32 = arith.constant 0 : i32
    %c0_i32_0 = arith.constant 0 : i32
    return %c0_i32, %arg1 : i32, i32
  }
  func.func @transform_3(%arg0: i32, %arg1: i32, %arg2: i32) -> (i32, i32) {
    %c0_i32 = arith.constant 0 : i32
    return %arg0, %arg1 : i32, i32
  }
  func.func @transform_4(%arg0: i32, %arg1: i32, %arg2: i32) -> (i32, i32) {
    %c0_i32 = arith.constant 0 : i32
    return %arg0, %arg1 : i32, i32
  }
}

module attributes {stable_mosaic.version = 11 : i64} {
  func.func @_matmul_bias_kernel(%arg0: i32, %arg1: i32, %arg2: i32, %arg3: memref<16x32xf32, #tpu.memory_space<vmem>>, %arg4: memref<32x64xbf16, #tpu.memory_space<vmem>>, %arg5: memref<1x64xf32, #tpu.memory_space<vmem>>, %arg6: memref<16x64xbf16, #tpu.memory_space<vmem>>, %arg7: memref<16x64xf32, #tpu.memory_space<vmem>>) attributes {dimension_semantics = [#tpu.dimension_semantics<parallel>, #tpu.dimension_semantics<parallel>, #tpu.dimension_semantics<arbitrary>], iteration_bounds = array<i64: 1, 1, 1>, scalar_prefetch = 0 : i64, scratch_operands = 1 : i64, tpu.core_type = #tpu.core_type<tc>, window_params = [{transform_indices = @transform_0, window_bounds = array<i64: 16, 32>}, {transform_indices = @transform_1, window_bounds = array<i64: 32, 64>}, {transform_indices = @transform_2, window_bounds = array<i64: 1, 64>}, {transform_indices = @transform_3, window_bounds = array<i64: 16, 64>}]} {
    %c0_i32 = arith.constant 0 : i32
    %0 = arith.cmpi eq, %arg2, %c0_i32 : i32
    %1 = arith.extui %0 : i1 to i32
    %c0_i32_0 = arith.constant 0 : i32
    %2 = arith.cmpi ne, %1, %c0_i32_0 : i32
    scf.if %2 {
      %cst_10 = arith.constant 0.000000e+00 : f32
      %13 = vector.broadcast %cst_10 : f32 to vector<16x64xf32>
      %c0_11 = arith.constant 0 : index
      %c0_12 = arith.constant 0 : index
      %14 = vector.load %arg7[%c0_11, %c0_12] : memref<16x64xf32, #tpu.memory_space<vmem>>, vector<16x64xf32>
      tpu.vector_store %arg7[%c0_11, %c0_12], %13 {strides = array<i32>} : memref<16x64xf32, #tpu.memory_space<vmem>>, vector<16x64xf32>,
    } else {
    }
    %c0 = arith.constant 0 : index
    %c0_1 = arith.constant 0 : index
    %3 = vector.load %arg7[%c0, %c0_1] : memref<16x64xf32, #tpu.memory_space<vmem>>, vector<16x64xf32>
    %c0_2 = arith.constant 0 : index
    %c0_3 = arith.constant 0 : index
    %4 = vector.load %arg3[%c0_2, %c0_3] : memref<16x32xf32, #tpu.memory_space<vmem>>, vector<16x32xf32>
    %5 = arith.truncf %4 : vector<16x32xf32> to vector<16x32xbf16>
    %c0_4 = arith.constant 0 : index
    %c0_5 = arith.constant 0 : index
    %6 = vector.load %arg4[%c0_4, %c0_5] : memref<32x64xbf16, #tpu.memory_space<vmem>>, vector<32x64xbf16>
    %cst = arith.constant dense<0.000000e+00> : vector<16x64xf32>
    %7 = tpu.matmul %5, %6, %cst {dimension_numbers = #tpu.dot_dimension_numbers<[1], [0], [0], [1], [0, 0, 1, 1], [], []>} : vector<16x32xbf16>, vector<32x64xbf16>, vector<16x64xf32> -> vector<16x64xf32>
    %8 = arith.addf %3, %7 : vector<16x64xf32>
    %c0_6 = arith.constant 0 : index
    %c0_7 = arith.constant 0 : index
    %9 = vector.load %arg7[%c0_6, %c0_7] : memref<16x64xf32, #tpu.memory_space<vmem>>, vector<16x64xf32>
    tpu.vector_store %arg7[%c0_6, %c0_7], %8 {strides = array<i32>} : memref<16x64xf32, #tpu.memory_space<vmem>>, vector<16x64xf32>,
    %c0_i32_8 = arith.constant 0 : i32
    %10 = arith.cmpi eq, %arg2, %c0_i32_8 : i32
    %11 = arith.extui %10 : i1 to i32
    %c0_i32_9 = arith.constant 0 : i32
    %12 = arith.cmpi ne, %11, %c0_i32_9 : i32
    scf.if %12 {
      %c0_10 = arith.constant 0 : index
      %c0_11 = arith.constant 0 : index
      %13 = vector.load %arg7[%c0_10, %c0_11] : memref<16x64xf32, #tpu.memory_space<vmem>>, vector<16x64xf32>
      %c0_12 = arith.constant 0 : index
      %c0_13 = arith.constant 0 : index
      %14 = vector.load %arg5[%c0_12, %c0_13] : memref<1x64xf32, #tpu.memory_space<vmem>>, vector<1x64xf32>
      %15 = vector.broadcast %14 : vector<1x64xf32> to vector<16x64xf32>
      %16 = arith.addf %13, %15 : vector<16x64xf32>
      %17 = arith.truncf %16 : vector<16x64xf32> to vector<16x64xbf16>
      %c0_14 = arith.constant 0 : index
      %c0_15 = arith.constant 0 : index
      %18 = vector.load %arg6[%c0_14, %c0_15] : memref<16x64xbf16, #tpu.memory_space<vmem>>, vector<16x64xbf16>
      tpu.vector_store %arg6[%c0_14, %c0_15], %17 {strides = array<i32>} : memref<16x64xbf16, #tpu.memory_space<vmem>>, vector<16x64xbf16>,
    } else {
    }
    return
  }
  func.func @transform_0(%arg0: i32, %arg1: i32, %arg2: i32) -> (i32, i32) {
    %c0_i32 = arith.constant 0 : i32
    return %arg0, %arg2 : i32, i32
  }
  func.func @transform_1(%arg0: i32, %arg1: i32, %arg2: i32) -> (i32, i32) {
    %c0_i32 = arith.constant 0 : i32
    return %arg2, %arg1 : i32, i32
  }
  func.func @transform_2(%arg0: i32, %arg1: i32, %arg2: i32) -> (i32, i32) {
    %c0_i32 = arith.constant 0 : i32
    %c0_i32_0 = arith.constant 0 : i32
    return %c0_i32, %arg1 : i32, i32
  }
  func.func @transform_3(%arg0: i32, %arg1: i32, %arg2: i32) -> (i32, i32) {
    %c0_i32 = arith.constant 0 : i32
    return %arg0, %arg1 : i32, i32
  }
}

module attributes {stable_mosaic.version = 11 : i64} {
  func.func @_self_attn_kernel(%arg0: i32, %arg1: i32, %arg2: memref<1x8x96xbf16, #tpu.memory_space<vmem>>, %arg3: memref<1x8x96xbf16, #tpu.memory_space<vmem>>, %arg4: memref<1x8x32xbf16, #tpu.memory_space<vmem>>) attributes {dimension_semantics = [#tpu.dimension_semantics<parallel>, #tpu.dimension_semantics<parallel>], iteration_bounds = array<i64: 2, 1>, scalar_prefetch = 0 : i64, scratch_operands = 0 : i64, tpu.core_type = #tpu.core_type<tc>, window_params = [{transform_indices = @transform_0, window_bounds = array<i64: 1, 8, 96>}, {transform_indices = @transform_1, window_bounds = array<i64: 1, 8, 96>}, {transform_indices = @transform_2, window_bounds = array<i64: 1, 8, 32>}]} {
    %c0 = arith.constant 0 : index
    %c0_0 = arith.constant 0 : index
    %c0_1 = arith.constant 0 : index
    %0 = vector.load %arg2[%c0, %c0_0, %c0_1] : memref<1x8x96xbf16, #tpu.memory_space<vmem>>, vector<1x8x96xbf16>
    %1 = vector.shape_cast %0 : vector<1x8x96xbf16> to vector<8x96xbf16>
    %c0_2 = arith.constant 0 : index
    %c0_3 = arith.constant 0 : index
    %c0_4 = arith.constant 0 : index
    %2 = vector.load %arg3[%c0_2, %c0_3, %c0_4] : memref<1x8x96xbf16, #tpu.memory_space<vmem>>, vector<1x8x96xbf16>
    %3 = vector.shape_cast %2 : vector<1x8x96xbf16> to vector<8x96xbf16>
    %4 = vector.extract_strided_slice %1 {offsets = [0, 0], sizes = [8, 32], strides = [1, 1]} : vector<8x96xbf16> to vector<8x32xbf16>
    %5 = vector.extract_strided_slice %3 {offsets = [0, 32], sizes = [8, 32], strides = [1, 1]} : vector<8x96xbf16> to vector<8x32xbf16>
    %6 = vector.extract_strided_slice %3 {offsets = [0, 64], sizes = [8, 32], strides = [1, 1]} : vector<8x96xbf16> to vector<8x32xbf16>
    %c8_i32 = arith.constant 8 : i32
    %7 = arith.muli %arg1, %c8_i32 : i32
    %8 = vector.shape_cast %4 : vector<8x32xbf16> to vector<8x4x8xbf16>
    %9 = tpu.transpose %8, [1, 0, 2] : vector<8x4x8xbf16> -> vector<4x8x8xbf16>
    %10 = vector.shape_cast %5 : vector<8x32xbf16> to vector<8x4x8xbf16>
    %11 = tpu.transpose %10, [1, 0, 2] : vector<8x4x8xbf16> -> vector<4x8x8xbf16>
    %12 = vector.shape_cast %6 : vector<8x32xbf16> to vector<8x4x8xbf16>
    %13 = tpu.transpose %12, [1, 0, 2] : vector<8x4x8xbf16> -> vector<4x8x8xbf16>
    "tpu.trace_start"() <{level = 10 : i32, message = "hqd,hkd->hqk"}> : () -> ()
    %cst = arith.constant dense<0.000000e+00> : vector<4x8x8xf32>
    %14 = tpu.matmul %9, %11, %cst {dimension_numbers = #tpu.dot_dimension_numbers<[2], [2], [1], [1], [0, 0, 0, 1, 1, 1], [0], [0]>} : vector<4x8x8xbf16>, vector<4x8x8xbf16>, vector<4x8x8xf32> -> vector<4x8x8xf32>
    "tpu.trace_stop"() : () -> ()
    %cst_5 = arith.constant 0.353553385 : f32
    %15 = vector.broadcast %cst_5 : f32 to vector<4x8x8xf32>
    %16 = arith.mulf %14, %15 : vector<4x8x8xf32>
    %17 = tpu.iota {dimensions = array<i32: 1>} : vector<1x8x8xi32>
    %18 = vector.broadcast %7 : i32 to vector<1x8x8xi32>
    %19 = arith.addi %18, %17 : vector<1x8x8xi32>
    %20 = tpu.iota {dimensions = array<i32: 2>} : vector<1x8x8xi32>
    %21 = arith.cmpi sgt, %20, %19 : vector<1x8x8xi32>
    %cst_6 = arith.constant -1.000000e+30 : f32
    %22 = vector.shape_cast %21 : vector<1x8x8xi1> to vector<1x8x8xi1>
    %23 = vector.broadcast %22 : vector<1x8x8xi1> to vector<4x8x8xi1>
    %24 = vector.broadcast %cst_6 : f32 to vector<4x8x8xf32>
    %25 = arith.select %23, %24, %16 : vector<4x8x8xi1>, vector<4x8x8xf32>
    %cst_7 = arith.constant dense<0xFF800000> : vector<4x8xf32>
    %26 = vector.multi_reduction <maximumf>, %25, %cst_7 [2] : vector<4x8x8xf32> to vector<4x8xf32>
    %27 = vector.shape_cast %26 : vector<4x8xf32> to vector<4x8x1xf32>
    %28 = vector.broadcast %27 : vector<4x8x1xf32> to vector<4x8x8xf32>
    %29 = arith.subf %25, %28 : vector<4x8x8xf32>
    %30 = math.exp %29 : vector<4x8x8xf32>
    %cst_8 = arith.constant dense<0.000000e+00> : vector<4x8xf32>
    %31 = vector.multi_reduction <add>, %30, %cst_8 [2] : vector<4x8x8xf32> to vector<4x8xf32>
    %32 = vector.shape_cast %31 : vector<4x8xf32> to vector<4x8x1xf32>
    %33 = tpu.reciprocal %32 {approx = true} : vector<4x8x1xf32> -> vector<4x8x1xf32>
    %34 = vector.broadcast %33 : vector<4x8x1xf32> to vector<4x8x8xf32>
    %35 = arith.mulf %30, %34 : vector<4x8x8xf32>
    %36 = arith.truncf %35 : vector<4x8x8xf32> to vector<4x8x8xbf16>
    "tpu.trace_start"() <{level = 10 : i32, message = "hqk,hkd->hqd"}> : () -> ()
    %cst_9 = arith.constant dense<0.000000e+00> : vector<4x8x8xf32>
    %37 = tpu.matmul %36, %13, %cst_9 {dimension_numbers = #tpu.dot_dimension_numbers<[2], [1], [1], [2], [0, 0, 0, 1, 1, 2], [0], [0]>} : vector<4x8x8xbf16>, vector<4x8x8xbf16>, vector<4x8x8xf32> -> vector<4x8x8xf32>
    "tpu.trace_stop"() : () -> ()
    %38 = tpu.transpose %37, [1, 0, 2] : vector<4x8x8xf32> -> vector<8x4x8xf32>
    %39 = vector.shape_cast %38 : vector<8x4x8xf32> to vector<8x32xf32>
    %40 = arith.truncf %39 : vector<8x32xf32> to vector<8x32xbf16>
    %c0_10 = arith.constant 0 : index
    %c0_11 = arith.constant 0 : index
    %c0_12 = arith.constant 0 : index
    %41 = vector.load %arg4[%c0_10, %c0_11, %c0_12] : memref<1x8x32xbf16, #tpu.memory_space<vmem>>, vector<1x8x32xbf16>
    %42 = vector.shape_cast %41 : vector<1x8x32xbf16> to vector<8x32xbf16>
    %43 = vector.shape_cast %40 : vector<8x32xbf16> to vector<1x8x32xbf16>
    tpu.vector_store %arg4[%c0_10, %c0_11, %c0_12], %43 {strides = array<i32>} : memref<1x8x32xbf16, #tpu.memory_space<vmem>>, vector<1x8x32xbf16>,
    return
  }
  func.func @transform_0(%arg0: i32, %arg1: i32) -> (i32, i32, i32) {
    %c0_i32 = arith.constant 0 : i32
    %c0_i32_0 = arith.constant 0 : i32
    return %arg0, %arg1, %c0_i32 : i32, i32, i32
  }
  func.func @transform_1(%arg0: i32, %arg1: i32) -> (i32, i32, i32) {
    %c0_i32 = arith.constant 0 : i32
    %c0_i32_0 = arith.constant 0 : i32
    %c0_i32_1 = arith.constant 0 : i32
    return %arg0, %c0_i32, %c0_i32_0 : i32, i32, i32
  }
  func.func @transform_2(%arg0: i32, %arg1: i32) -> (i32, i32, i32) {
    %c0_i32 = arith.constant 0 : i32
    %c0_i32_0 = arith.constant 0 : i32
    return %arg0, %arg1, %c0_i32 : i32, i32, i32
  }
}

module attributes {stable_mosaic.version = 11 : i64} {
  func.func @_cross_attn_kernel(%arg0: i32, %arg1: i32, %arg2: memref<1x8x32xbf16, #tpu.memory_space<vmem>>, %arg3: memref<1x8x64xbf16, #tpu.memory_space<vmem>>, %arg4: memref<1x8x32xbf16, #tpu.memory_space<vmem>>) attributes {dimension_semantics = [#tpu.dimension_semantics<parallel>, #tpu.dimension_semantics<parallel>], iteration_bounds = array<i64: 2, 1>, scalar_prefetch = 0 : i64, scratch_operands = 0 : i64, tpu.core_type = #tpu.core_type<tc>, window_params = [{transform_indices = @transform_0, window_bounds = array<i64: 1, 8, 32>}, {transform_indices = @transform_1, window_bounds = array<i64: 1, 8, 64>}, {transform_indices = @transform_2, window_bounds = array<i64: 1, 8, 32>}]} {
    %c0 = arith.constant 0 : index
    %c0_0 = arith.constant 0 : index
    %c0_1 = arith.constant 0 : index
    %0 = vector.load %arg2[%c0, %c0_0, %c0_1] : memref<1x8x32xbf16, #tpu.memory_space<vmem>>, vector<1x8x32xbf16>
    %1 = vector.shape_cast %0 : vector<1x8x32xbf16> to vector<8x32xbf16>
    %c0_2 = arith.constant 0 : index
    %c0_3 = arith.constant 0 : index
    %c0_4 = arith.constant 0 : index
    %2 = vector.load %arg3[%c0_2, %c0_3, %c0_4] : memref<1x8x64xbf16, #tpu.memory_space<vmem>>, vector<1x8x64xbf16>
    %3 = vector.shape_cast %2 : vector<1x8x64xbf16> to vector<8x64xbf16>
    %4 = vector.extract_strided_slice %3 {offsets = [0, 0], sizes = [8, 32], strides = [1, 1]} : vector<8x64xbf16> to vector<8x32xbf16>
    %5 = vector.extract_strided_slice %3 {offsets = [0, 32], sizes = [8, 32], strides = [1, 1]} : vector<8x64xbf16> to vector<8x32xbf16>
    %6 = vector.shape_cast %1 : vector<8x32xbf16> to vector<8x4x8xbf16>
    %7 = tpu.transpose %6, [1, 0, 2] : vector<8x4x8xbf16> -> vector<4x8x8xbf16>
    %8 = vector.shape_cast %4 : vector<8x32xbf16> to vector<8x4x8xbf16>
    %9 = tpu.transpose %8, [1, 0, 2] : vector<8x4x8xbf16> -> vector<4x8x8xbf16>
    %10 = vector.shape_cast %5 : vector<8x32xbf16> to vector<8x4x8xbf16>
    %11 = tpu.transpose %10, [1, 0, 2] : vector<8x4x8xbf16> -> vector<4x8x8xbf16>
    "tpu.trace_start"() <{level = 10 : i32, message = "hqd,hkd->hqk"}> : () -> ()
    %cst = arith.constant dense<0.000000e+00> : vector<4x8x8xf32>
    %12 = tpu.matmul %7, %9, %cst {dimension_numbers = #tpu.dot_dimension_numbers<[2], [2], [1], [1], [0, 0, 0, 1, 1, 1], [0], [0]>} : vector<4x8x8xbf16>, vector<4x8x8xbf16>, vector<4x8x8xf32> -> vector<4x8x8xf32>
    "tpu.trace_stop"() : () -> ()
    %cst_5 = arith.constant 0.353553385 : f32
    %13 = vector.broadcast %cst_5 : f32 to vector<4x8x8xf32>
    %14 = arith.mulf %12, %13 : vector<4x8x8xf32>
    %cst_6 = arith.constant dense<0xFF800000> : vector<4x8xf32>
    %15 = vector.multi_reduction <maximumf>, %14, %cst_6 [2] : vector<4x8x8xf32> to vector<4x8xf32>
    %16 = vector.shape_cast %15 : vector<4x8xf32> to vector<4x8x1xf32>
    %17 = vector.broadcast %16 : vector<4x8x1xf32> to vector<4x8x8xf32>
    %18 = arith.subf %14, %17 : vector<4x8x8xf32>
    %19 = math.exp %18 : vector<4x8x8xf32>
    %cst_7 = arith.constant dense<0.000000e+00> : vector<4x8xf32>
    %20 = vector.multi_reduction <add>, %19, %cst_7 [2] : vector<4x8x8xf32> to vector<4x8xf32>
    %21 = vector.shape_cast %20 : vector<4x8xf32> to vector<4x8x1xf32>
    %22 = tpu.reciprocal %21 {approx = true} : vector<4x8x1xf32> -> vector<4x8x1xf32>
    %23 = vector.broadcast %22 : vector<4x8x1xf32> to vector<4x8x8xf32>
    %24 = arith.mulf %19, %23 : vector<4x8x8xf32>
    %25 = arith.truncf %24 : vector<4x8x8xf32> to vector<4x8x8xbf16>
    "tpu.trace_start"() <{level = 10 : i32, message = "hqk,hkd->hqd"}> : () -> ()
    %cst_8 = arith.constant dense<0.000000e+00> : vector<4x8x8xf32>
    %26 = tpu.matmul %25, %11, %cst_8 {dimension_numbers = #tpu.dot_dimension_numbers<[2], [1], [1], [2], [0, 0, 0, 1, 1, 2], [0], [0]>} : vector<4x8x8xbf16>, vector<4x8x8xbf16>, vector<4x8x8xf32> -> vector<4x8x8xf32>
    "tpu.trace_stop"() : () -> ()
    %27 = tpu.transpose %26, [1, 0, 2] : vector<4x8x8xf32> -> vector<8x4x8xf32>
    %28 = vector.shape_cast %27 : vector<8x4x8xf32> to vector<8x32xf32>
    %29 = arith.truncf %28 : vector<8x32xf32> to vector<8x32xbf16>
    %c0_9 = arith.constant 0 : index
    %c0_10 = arith.constant 0 : index
    %c0_11 = arith.constant 0 : index
    %30 = vector.load %arg4[%c0_9, %c0_10, %c0_11] : memref<1x8x32xbf16, #tpu.memory_space<vmem>>, vector<1x8x32xbf16>
    %31 = vector.shape_cast %30 : vector<1x8x32xbf16> to vector<8x32xbf16>
    %32 = vector.shape_cast %29 : vector<8x32xbf16> to vector<1x8x32xbf16>
    tpu.vector_store %arg4[%c0_9, %c0_10, %c0_11], %32 {strides = array<i32>} : memref<1x8x32xbf16, #tpu.memory_space<vmem>>, vector<1x8x32xbf16>,
    return
  }
  func.func @transform_0(%arg0: i32, %arg1: i32) -> (i32, i32, i32) {
    %c0_i32 = arith.constant 0 : i32
    %c0_i32_0 = arith.constant 0 : i32
    return %arg0, %arg1, %c0_i32 : i32, i32, i32
  }
  func.func @transform_1(%arg0: i32, %arg1: i32) -> (i32, i32, i32) {
    %c0_i32 = arith.constant 0 : i32
    %c0_i32_0 = arith.constant 0 : i32
    %c0_i32_1 = arith.constant 0 : i32
    return %arg0, %c0_i32, %c0_i32_0 : i32, i32, i32
  }
  func.func @transform_2(%arg0: i32, %arg1: i32) -> (i32, i32, i32) {
    %c0_i32 = arith.constant 0 : i32
    %c0_i32_0 = arith.constant 0 : i32
    return %arg0, %arg1, %c0_i32 : i32, i32, i32
  }
}

module attributes {stable_mosaic.version = 11 : i64} {
  func.func @_ln_matmul_kernel(%arg0: i32, %arg1: i32, %arg2: memref<16x32xf32, #tpu.memory_space<vmem>>, %arg3: memref<1x32xf32, #tpu.memory_space<vmem>>, %arg4: memref<1x32xf32, #tpu.memory_space<vmem>>, %arg5: memref<32x32xbf16, #tpu.memory_space<vmem>>, %arg6: memref<1x32xf32, #tpu.memory_space<vmem>>, %arg7: memref<16x32xbf16, #tpu.memory_space<vmem>>, %arg8: memref<16x32xbf16, #tpu.memory_space<vmem>>) attributes {dimension_semantics = [#tpu.dimension_semantics<parallel>, #tpu.dimension_semantics<arbitrary>], iteration_bounds = array<i64: 1, 1>, scalar_prefetch = 0 : i64, scratch_operands = 1 : i64, tpu.core_type = #tpu.core_type<tc>, window_params = [{transform_indices = @transform_0, window_bounds = array<i64: 16, 32>}, {pipeline_mode = #tpu.pipeline_mode<synchronous>, transform_indices = @transform_1, window_bounds = array<i64: 1, 32>}, {pipeline_mode = #tpu.pipeline_mode<synchronous>, transform_indices = @transform_2, window_bounds = array<i64: 1, 32>}, {transform_indices = @transform_3, window_bounds = array<i64: 32, 32>}, {transform_indices = @transform_4, window_bounds = array<i64: 1, 32>}, {transform_indices = @transform_5, window_bounds = array<i64: 16, 32>}]} {
    %c0_i32 = arith.constant 0 : i32
    %0 = arith.cmpi eq, %arg1, %c0_i32 : i32
    %1 = arith.extui %0 : i1 to i32
    %c0_i32_0 = arith.constant 0 : i32
    %2 = arith.cmpi ne, %1, %c0_i32_0 : i32
    scf.if %2 {
      %c0_8 = arith.constant 0 : index
      %c0_9 = arith.constant 0 : index
      %11 = vector.load %arg2[%c0_8, %c0_9] : memref<16x32xf32, #tpu.memory_space<vmem>>, vector<16x32xf32>
      %cst_10 = arith.constant dense<0.000000e+00> : vector<16xf32>
      %12 = vector.multi_reduction <add>, %11, %cst_10 [1] : vector<16x32xf32> to vector<16xf32>
      %13 = vector.shape_cast %12 : vector<16xf32> to vector<16x1xf32>
      %cst_11 = arith.constant 3.200000e+01 : f32
      %14 = vector.broadcast %cst_11 : f32 to vector<16x1xf32>
      %15 = arith.divf %13, %14 : vector<16x1xf32>
      %16 = vector.broadcast %15 : vector<16x1xf32> to vector<16x32xf32>
      %17 = arith.subf %11, %16 : vector<16x32xf32>
      %18 = arith.mulf %17, %17 : vector<16x32xf32>
      %cst_12 = arith.constant dense<0.000000e+00> : vector<16xf32>
      %19 = vector.multi_reduction <add>, %18, %cst_12 [1] : vector<16x32xf32> to vector<16xf32>
      %20 = vector.shape_cast %19 : vector<16xf32> to vector<16x1xf32>
      %cst_13 = arith.constant 3.200000e+01 : f32
      %21 = vector.broadcast %cst_13 : f32 to vector<16x1xf32>
      %22 = arith.divf %20, %21 : vector<16x1xf32>
      %23 = vector.broadcast %15 : vector<16x1xf32> to vector<16x32xf32>
      %24 = arith.subf %11, %23 : vector<16x32xf32>
      %cst_14 = arith.constant 9.99999974E-6 : f32
      %25 = vector.broadcast %cst_14 : f32 to vector<16x1xf32>
      %26 = arith.addf %22, %25 : vector<16x1xf32>
      %27 = math.rsqrt %26 : vector<16x1xf32>
      %28 = vector.broadcast %27 : vector<16x1xf32> to vector<16x32xf32>
      %29 = arith.mulf %24, %28 : vector<16x32xf32>
      %c0_15 = arith.constant 0 : index
      %c0_16 = arith.constant 0 : index
      %30 = vector.load %arg3[%c0_15, %c0_16] : memref<1x32xf32, #tpu.memory_space<vmem>>, vector<1x32xf32>
      %31 = vector.broadcast %30 : vector<1x32xf32> to vector<16x32xf32>
      %32 = arith.mulf %29, %31 : vector<16x32xf32>
      %c0_17 = arith.constant 0 : index
      %c0_18 = arith.constant 0 : index
      %33 = vector.load %arg4[%c0_17, %c0_18] : memref<1x32xf32, #tpu.memory_space<vmem>>, vector<1x32xf32>
      %34 = vector.broadcast %33 : vector<1x32xf32> to vector<16x32xf32>
      %35 = arith.addf %32, %34 : vector<16x32xf32>
      %36 = arith.truncf %35 : vector<16x32xf32> to vector<16x32xbf16>
      %c0_19 = arith.constant 0 : index
      %c0_20 = arith.constant 0 : index
      %37 = vector.load %arg8[%c0_19, %c0_20] : memref<16x32xbf16, #tpu.memory_space<vmem>>, vector<16x32xbf16>
      tpu.vector_store %arg8[%c0_19, %c0_20], %36 {strides = array<i32>} : memref<16x32xbf16, #tpu.memory_space<vmem>>, vector<16x32xbf16>,
    } else {
    }
    %c0 = arith.constant 0 : index
    %c0_1 = arith.constant 0 : index
    %3 = vector.load %arg8[%c0, %c0_1] : memref<16x32xbf16, #tpu.memory_space<vmem>>, vector<16x32xbf16>
    %c0_2 = arith.constant 0 : index
    %c0_3 = arith.constant 0 : index
    %4 = vector.load %arg5[%c0_2, %c0_3] : memref<32x32xbf16, #tpu.memory_space<vmem>>, vector<32x32xbf16>
    %cst = arith.constant dense<0.000000e+00> : vector<16x32xf32>
    %5 = tpu.matmul %3, %4, %cst {dimension_numbers = #tpu.dot_dimension_numbers<[1], [0], [0], [1], [0, 0, 1, 1], [], []>} : vector<16x32xbf16>, vector<32x32xbf16>, vector<16x32xf32> -> vector<16x32xf32>
    %c0_4 = arith.constant 0 : index
    %c0_5 = arith.constant 0 : index
    %6 = vector.load %arg6[%c0_4, %c0_5] : memref<1x32xf32, #tpu.memory_space<vmem>>, vector<1x32xf32>
    %7 = vector.broadcast %6 : vector<1x32xf32> to vector<16x32xf32>
    %8 = arith.addf %5, %7 : vector<16x32xf32>
    %9 = arith.truncf %8 : vector<16x32xf32> to vector<16x32xbf16>
    %c0_6 = arith.constant 0 : index
    %c0_7 = arith.constant 0 : index
    %10 = vector.load %arg7[%c0_6, %c0_7] : memref<16x32xbf16, #tpu.memory_space<vmem>>, vector<16x32xbf16>
    tpu.vector_store %arg7[%c0_6, %c0_7], %9 {strides = array<i32>} : memref<16x32xbf16, #tpu.memory_space<vmem>>, vector<16x32xbf16>,
    return
  }
  func.func @transform_0(%arg0: i32, %arg1: i32) -> (i32, i32) {
    %c0_i32 = arith.constant 0 : i32
    %c0_i32_0 = arith.constant 0 : i32
    return %arg0, %c0_i32 : i32, i32
  }
  func.func @transform_1(%arg0: i32, %arg1: i32) -> (i32, i32) {
    %c0_i32 = arith.constant 0 : i32
    %c0_i32_0 = arith.constant 0 : i32
    %c0_i32_1 = arith.constant 0 : i32
    return %c0_i32, %c0_i32_0 : i32, i32
  }
  func.func @transform_2(%arg0: i32, %arg1: i32) -> (i32, i32) {
    %c0_i32 = arith.constant 0 : i32
    %c0_i32_0 = arith.constant 0 : i32
    %c0_i32_1 = arith.constant 0 : i32
    return %c0_i32, %c0_i32_0 : i32, i32
  }
  func.func @transform_3(%arg0: i32, %arg1: i32) -> (i32, i32) {
    %c0_i32 = arith.constant 0 : i32
    %c0_i32_0 = arith.constant 0 : i32
    return %c0_i32, %arg1 : i32, i32
  }
  func.func @transform_4(%arg0: i32, %arg1: i32) -> (i32, i32) {
    %c0_i32 = arith.constant 0 : i32
    %c0_i32_0 = arith.constant 0 : i32
    return %c0_i32, %arg1 : i32, i32
  }
  func.func @transform_5(%arg0: i32, %arg1: i32) -> (i32, i32) {
    %c0_i32 = arith.constant 0 : i32
    return %arg0, %arg1 : i32, i32
  }
}

module attributes {stable_mosaic.version = 11 : i64} {
  func.func @_ln_matmul_kernel(%arg0: i32, %arg1: i32, %arg2: memref<16x32xf32, #tpu.memory_space<vmem>>, %arg3: memref<1x32xf32, #tpu.memory_space<vmem>>, %arg4: memref<1x32xf32, #tpu.memory_space<vmem>>, %arg5: memref<32x64xbf16, #tpu.memory_space<vmem>>, %arg6: memref<1x64xf32, #tpu.memory_space<vmem>>, %arg7: memref<16x64xf32, #tpu.memory_space<vmem>>, %arg8: memref<16x32xbf16, #tpu.memory_space<vmem>>) attributes {dimension_semantics = [#tpu.dimension_semantics<parallel>, #tpu.dimension_semantics<arbitrary>], iteration_bounds = array<i64: 1, 1>, scalar_prefetch = 0 : i64, scratch_operands = 1 : i64, tpu.core_type = #tpu.core_type<tc>, window_params = [{transform_indices = @transform_0, window_bounds = array<i64: 16, 32>}, {pipeline_mode = #tpu.pipeline_mode<synchronous>, transform_indices = @transform_1, window_bounds = array<i64: 1, 32>}, {pipeline_mode = #tpu.pipeline_mode<synchronous>, transform_indices = @transform_2, window_bounds = array<i64: 1, 32>}, {transform_indices = @transform_3, window_bounds = array<i64: 32, 64>}, {transform_indices = @transform_4, window_bounds = array<i64: 1, 64>}, {transform_indices = @transform_5, window_bounds = array<i64: 16, 64>}]} {
    %c0_i32 = arith.constant 0 : i32
    %0 = arith.cmpi eq, %arg1, %c0_i32 : i32
    %1 = arith.extui %0 : i1 to i32
    %c0_i32_0 = arith.constant 0 : i32
    %2 = arith.cmpi ne, %1, %c0_i32_0 : i32
    scf.if %2 {
      %c0_8 = arith.constant 0 : index
      %c0_9 = arith.constant 0 : index
      %10 = vector.load %arg2[%c0_8, %c0_9] : memref<16x32xf32, #tpu.memory_space<vmem>>, vector<16x32xf32>
      %cst_10 = arith.constant dense<0.000000e+00> : vector<16xf32>
      %11 = vector.multi_reduction <add>, %10, %cst_10 [1] : vector<16x32xf32> to vector<16xf32>
      %12 = vector.shape_cast %11 : vector<16xf32> to vector<16x1xf32>
      %cst_11 = arith.constant 3.200000e+01 : f32
      %13 = vector.broadcast %cst_11 : f32 to vector<16x1xf32>
      %14 = arith.divf %12, %13 : vector<16x1xf32>
      %15 = vector.broadcast %14 : vector<16x1xf32> to vector<16x32xf32>
      %16 = arith.subf %10, %15 : vector<16x32xf32>
      %17 = arith.mulf %16, %16 : vector<16x32xf32>
      %cst_12 = arith.constant dense<0.000000e+00> : vector<16xf32>
      %18 = vector.multi_reduction <add>, %17, %cst_12 [1] : vector<16x32xf32> to vector<16xf32>
      %19 = vector.shape_cast %18 : vector<16xf32> to vector<16x1xf32>
      %cst_13 = arith.constant 3.200000e+01 : f32
      %20 = vector.broadcast %cst_13 : f32 to vector<16x1xf32>
      %21 = arith.divf %19, %20 : vector<16x1xf32>
      %22 = vector.broadcast %14 : vector<16x1xf32> to vector<16x32xf32>
      %23 = arith.subf %10, %22 : vector<16x32xf32>
      %cst_14 = arith.constant 9.99999974E-6 : f32
      %24 = vector.broadcast %cst_14 : f32 to vector<16x1xf32>
      %25 = arith.addf %21, %24 : vector<16x1xf32>
      %26 = math.rsqrt %25 : vector<16x1xf32>
      %27 = vector.broadcast %26 : vector<16x1xf32> to vector<16x32xf32>
      %28 = arith.mulf %23, %27 : vector<16x32xf32>
      %c0_15 = arith.constant 0 : index
      %c0_16 = arith.constant 0 : index
      %29 = vector.load %arg3[%c0_15, %c0_16] : memref<1x32xf32, #tpu.memory_space<vmem>>, vector<1x32xf32>
      %30 = vector.broadcast %29 : vector<1x32xf32> to vector<16x32xf32>
      %31 = arith.mulf %28, %30 : vector<16x32xf32>
      %c0_17 = arith.constant 0 : index
      %c0_18 = arith.constant 0 : index
      %32 = vector.load %arg4[%c0_17, %c0_18] : memref<1x32xf32, #tpu.memory_space<vmem>>, vector<1x32xf32>
      %33 = vector.broadcast %32 : vector<1x32xf32> to vector<16x32xf32>
      %34 = arith.addf %31, %33 : vector<16x32xf32>
      %35 = arith.truncf %34 : vector<16x32xf32> to vector<16x32xbf16>
      %c0_19 = arith.constant 0 : index
      %c0_20 = arith.constant 0 : index
      %36 = vector.load %arg8[%c0_19, %c0_20] : memref<16x32xbf16, #tpu.memory_space<vmem>>, vector<16x32xbf16>
      tpu.vector_store %arg8[%c0_19, %c0_20], %35 {strides = array<i32>} : memref<16x32xbf16, #tpu.memory_space<vmem>>, vector<16x32xbf16>,
    } else {
    }
    %c0 = arith.constant 0 : index
    %c0_1 = arith.constant 0 : index
    %3 = vector.load %arg8[%c0, %c0_1] : memref<16x32xbf16, #tpu.memory_space<vmem>>, vector<16x32xbf16>
    %c0_2 = arith.constant 0 : index
    %c0_3 = arith.constant 0 : index
    %4 = vector.load %arg5[%c0_2, %c0_3] : memref<32x64xbf16, #tpu.memory_space<vmem>>, vector<32x64xbf16>
    %cst = arith.constant dense<0.000000e+00> : vector<16x64xf32>
    %5 = tpu.matmul %3, %4, %cst {dimension_numbers = #tpu.dot_dimension_numbers<[1], [0], [0], [1], [0, 0, 1, 1], [], []>} : vector<16x32xbf16>, vector<32x64xbf16>, vector<16x64xf32> -> vector<16x64xf32>
    %c0_4 = arith.constant 0 : index
    %c0_5 = arith.constant 0 : index
    %6 = vector.load %arg6[%c0_4, %c0_5] : memref<1x64xf32, #tpu.memory_space<vmem>>, vector<1x64xf32>
    %7 = vector.broadcast %6 : vector<1x64xf32> to vector<16x64xf32>
    %8 = arith.addf %5, %7 : vector<16x64xf32>
    %c0_6 = arith.constant 0 : index
    %c0_7 = arith.constant 0 : index
    %9 = vector.load %arg7[%c0_6, %c0_7] : memref<16x64xf32, #tpu.memory_space<vmem>>, vector<16x64xf32>
    tpu.vector_store %arg7[%c0_6, %c0_7], %8 {strides = array<i32>} : memref<16x64xf32, #tpu.memory_space<vmem>>, vector<16x64xf32>,
    return
  }
  func.func @transform_0(%arg0: i32, %arg1: i32) -> (i32, i32) {
    %c0_i32 = arith.constant 0 : i32
    %c0_i32_0 = arith.constant 0 : i32
    return %arg0, %c0_i32 : i32, i32
  }
  func.func @transform_1(%arg0: i32, %arg1: i32) -> (i32, i32) {
    %c0_i32 = arith.constant 0 : i32
    %c0_i32_0 = arith.constant 0 : i32
    %c0_i32_1 = arith.constant 0 : i32
    return %c0_i32, %c0_i32_0 : i32, i32
  }
  func.func @transform_2(%arg0: i32, %arg1: i32) -> (i32, i32) {
    %c0_i32 = arith.constant 0 : i32
    %c0_i32_0 = arith.constant 0 : i32
    %c0_i32_1 = arith.constant 0 : i32
    return %c0_i32, %c0_i32_0 : i32, i32
  }
  func.func @transform_3(%arg0: i32, %arg1: i32) -> (i32, i32) {
    %c0_i32 = arith.constant 0 : i32
    %c0_i32_0 = arith.constant 0 : i32
    return %c0_i32, %arg1 : i32, i32
  }
  func.func @transform_4(%arg0: i32, %arg1: i32) -> (i32, i32) {
    %c0_i32 = arith.constant 0 : i32
    %c0_i32_0 = arith.constant 0 : i32
    return %c0_i32, %arg1 : i32, i32
  }
  func.func @transform_5(%arg0: i32, %arg1: i32) -> (i32, i32) {
    %c0_i32 = arith.constant 0 : i32
    return %arg0, %arg1 : i32, i32
  }
}

</mosaic_0001>

<llo_original>
// kernel: transformer_forward.28
$region0: #{transformer_forward.28}
  #allocation0 [shape = 'u32[]', space=smem, size = 0x4, offset = 0x4, fixed_abs, tag = 'smem constant byte address 0x4 - core index']
  #allocation1 [shape = 'u32[144,128]{1,0:T(1,128)}', space=vmem, size = 0x12000, scoped, tag = 'internal scratch']
  #allocation2 [shape = 'bf16[16,32]{1,0:T(8,128)(2,1)}', space=vmem, size = 0x1000, scoped, tag = 'scratch operand']
  %s0 = inlined_call_operand.vmem [shape: f32[16,32], index: 0, kind: input, shape index: {}]
  %s1 = inlined_call_operand.vmem [shape: f32[1,32], index: 1, kind: input, shape index: {}]
  %s2 = inlined_call_operand.vmem [shape: f32[1,32], index: 2, kind: input, shape index: {}]
  %s3 = inlined_call_operand.vmem [shape: bf16[32,64], index: 3, kind: input, shape index: {}]
  %s4 = inlined_call_operand.vmem [shape: f32[1,64], index: 4, kind: input, shape index: {}]
  %s5 = inlined_call_operand.vmem [shape: bf16[64,32], index: 5, kind: input, shape index: {}]
  %s6 = inlined_call_operand.vmem [shape: f32[1,32], index: 6, kind: input, shape index: {}]
  %s7 = inlined_call_operand.vmem [shape: f32[16,32], index: 7, kind: output, shape index: {}]
  %s8 = sld [smem:[#allocation0]]
  $region50: #{transformer_forward.28} parent=0
    _
  %s10 = ssub.s32 1, %s8
  %s11 = scalar_select 0, %s10, %s8
  // Predicated region
  $region2: #{transformer_forward.28} parent=0 // pred_check
    _
  $region3: #{transformer_forward.28} parent=0 // pred_check_branch
    %13 = sbr.rel (0) target = $region5
  $region4: #{transformer_forward.28} parent=0 // pred_region
    _
  $region5: #{transformer_forward.28} parent=0 // pred_fallthru
    _
  // Predicated region
  $region6: #{transformer_forward.28} parent=0 // pred_check
    _
  $region7: #{transformer_forward.28} parent=0 // pred_check_branch
    %15 = sbr.rel (0) target = $region9
  $region8: #{transformer_forward.28} parent=0 // pred_region
    _
  $region9: #{transformer_forward.28} parent=0 // pred_fallthru
    _
  // Predicated region
  $region10: #{transformer_forward.28} parent=0 // pred_check
    _
  $region11: #{transformer_forward.28} parent=0 // pred_check_branch
    %17 = sbr.rel (0) target = $region13
  $region12: #{transformer_forward.28} parent=0 // pred_region
    _
  $region13: #{transformer_forward.28} parent=0 // pred_fallthru
    _
  // Predicated region
  $region14: #{transformer_forward.28} parent=0 // pred_check
    _
  $region15: #{transformer_forward.28} parent=0 // pred_check_branch
    %19 = sbr.rel (0) target = $region17
  $region16: #{transformer_forward.28} parent=0 // pred_region
    _
  $region17: #{transformer_forward.28} parent=0 // pred_fallthru
    _
  // Predicated region
  $region18: #{transformer_forward.28} parent=0 // pred_check
    _
  $region19: #{transformer_forward.28} parent=0 // pred_check_branch
    %21 = sbr.rel (0) target = $region21
  $region20: #{transformer_forward.28} parent=0 // pred_region
    _
  $region21: #{transformer_forward.28} parent=0 // pred_fallthru
    _
  // Predicated region
  $region22: #{transformer_forward.28} parent=0 // pred_check
    _
  $region23: #{transformer_forward.28} parent=0 // pred_check_branch
    %23 = sbr.rel (0) target = $region25
  $region24: #{transformer_forward.28} parent=0 // pred_region
    _
  $region25: #{transformer_forward.28} parent=0 // pred_fallthru
    _
  // Predicated region
  $region26: #{transformer_forward.28} parent=0 // pred_check
    _
  $region27: #{transformer_forward.28} parent=0 // pred_check_branch
    %25 = sbr.rel (0) target = $region29
  $region28: #{transformer_forward.28} parent=0 // pred_region
    _
  $region29: #{transformer_forward.28} parent=0 // pred_fallthru
    _
  %p27 = scmp.eq.s32.totalorder 0, 0
  // Predicated region
  $region30: #{transformer_forward.28} parent=0 // pred_check
    %p28 = pneg %p27
  $region31: #{transformer_forward.28} parent=0 // pred_check_branch
    %30 = sbr.rel (%p28) target = $region33
  $region32: #{transformer_forward.28} parent=0 // pred_region
    %v31 = vld [vmem:[%s0] sm:$0xff]
    %v32 = vld [vmem:[%s0 + $0x8] sm:$0xff]
    %vm33 = vcmask 261120
    %v34 = vsel %vm33, %v31, 0.0
    %35 = vadd.xlane.f32.xlu0 %v34
    %v36 = vpop.xlane.xlu0 %35
    %v37 = vsel %vm33, %v32, 0.0
    %38 = vadd.xlane.f32.xlu0 %v37
    %v39 = vpop.xlane.xlu0 %38
    %v40 = vrcp.pop 32.0
    %v41 = vmul.f32 %v36, %v40
    %v42 = vmul.f32 %v39, %v40
    %v43 = vsub.f32 %v31, %v41
    %v44 = vsub.f32 %v32, %v42
    %v45 = vmul.f32 %v43, %v43
    %v46 = vmul.f32 %v44, %v44
    %v47 = vsel %vm33, %v45, 0.0
    %48 = vadd.xlane.f32.xlu0 %v47
    %v49 = vpop.xlane.xlu0 %48
    %v50 = vsel %vm33, %v46, 0.0
    %51 = vadd.xlane.f32.xlu0 %v50
    %v52 = vpop.xlane.xlu0 %51
    %v53 = vmul.f32 %v49, %v40
    %v54 = vmul.f32 %v52, %v40
    %v55 = vadd.f32 %v53, 1e-05
    %v56 = vadd.f32 %v54, 1e-05
    %v57 = vrsqrt.pop %v55
    %v58 = vrsqrt.pop %v56
    %v59 = vmul.f32 %v43, %v57
    %v60 = vmul.f32 %v44, %v58
    %v61 = vld [vmem:[%s1] sm:$0x1]
    %v63 = vlaneseq
    %v64 = vshrl.u32 %v63, 7
    %v65 = vsub.s32 0, %v64
    %v66 = vrot.slane %v61, %v65
    %v68 = vmul.f32 %v59, %v66
    %v69 = vmul.f32 %v60, %v66
    %v70 = vld [vmem:[%s2] sm:$0x1]
    %v72 = vlaneseq
    %v73 = vshrl.u32 %v72, 7
    %v74 = vsub.s32 0, %v73
    %v75 = vrot.slane %v70, %v74
    %v77 = vadd.f32 %v68, %v75
    %v78 = vadd.f32 %v69, %v75
    %v79 = vpack.c.bf16 %v78, %v77
    %v81 = vunpack.c.l.b16 %v79
    %v82 = vunpack.c.h.b16 %v79
    %v83 = vpack.c.b16 %v81, %v81
    %v84 = vpack.c.b16 %v82, %v82
    %vm87 = vcmask 257024
    %88 = vst.msk [vmem:[#allocation2] sm:$0xf] %vm87, %v83
    %89 = vst.msk [vmem:[#allocation2 + $0x4] sm:$0xf] %vm87, %v84
  $region33: #{transformer_forward.28} parent=0 // pred_fallthru
    _
  %v90 = vld [vmem:[#allocation2] sm:$0xf]
  %v91 = vld [vmem:[#allocation2 + $0x4] sm:$0xf]
  %v92 = vld [vmem:[%s3] sm:$0xf]
  %v93 = vld [vmem:[%s3 + $0x4] sm:$0xf]
  %v94 = vld [vmem:[%s3 + $0x8] sm:$0xf]
  %v95 = vld [vmem:[%s3 + $0xc] sm:$0xf]
  %v96 = vld [vmem:[%s4] sm:$0x1]
  %v98 = vlaneseq
  %v99 = vshrl.u32 %v98, 7
  %v100 = vsub.s32 0, %v99
  %v101 = vrot.slane %v96, %v100
  %v105 = vunpack.c.l.b16 %v90
  %v106 = vunpack.c.l.b16 %v91
  %v107 = vpack.c.b16 %v106, %v105
  %v112 = vunpack.c.l.b16 %v92
  %v113 = vunpack.c.l.b16 %v93
  %v114 = vunpack.c.l.b16 %v94
  %v115 = vunpack.c.l.b16 %v95
  %v116 = vpack.c.b16 %v113, %v112
  %v117 = vpack.c.b16 %v115, %v114
  %vm120 = vcmask 261120
  %v122 = vsel %vm120, %v107, 0
  %124 = vmatprep.subr.bf16.mxu0 0
  %125 = vmatpush1.bf16.msra.mxu0 0
  %126 = vmatprep.subr.bf16.mxu0 0
  %127 = vmatpush1.bf16.msra.mxu0 0
  %128 = vmatprep.subr.bf16.mxu0 0
  %129 = vmatpush1.bf16.msra.mxu0 0
  %130 = vmatprep.subr.bf16.mxu0 0
  %131 = vmatpush1.bf16.msra.mxu0 0
  %132 = vmatprep.subr.bf16.mxu0 0
  %133 = vmatpush1.bf16.msra.mxu0 0
  %134 = vmatprep.subr.bf16.mxu0 0
  %135 = vmatpush1.bf16.msra.mxu0 0
  %136 = vmatprep.subr.bf16.mxu0 0
  %137 = vmatpush1.bf16.msra.mxu0 %v117
  %138 = vmatprep.subr.bf16.mxu0 0
  %139 = vmatpush1.bf16.msra.mxu0 %v116
  %140 = vmatprep.subr.bf16.mxu0 0
  %141 = vmatpush2.bf16.msra.mxu0 0
  %142 = vmatprep.subr.bf16.mxu0 0
  %143 = vmatpush2.bf16.msra.mxu0 0
  %144 = vmatprep.subr.bf16.mxu0 0
  %145 = vmatpush2.bf16.msra.mxu0 0
  %146 = vmatprep.subr.bf16.mxu0 0
  %147 = vmatpush2.bf16.msra.mxu0 0
  %148 = vmatprep.subr.bf16.mxu0 0
  %149 = vmatpush2.bf16.msra.mxu0 0
  %150 = vmatprep.subr.bf16.mxu0 0
  %151 = vmatpush2.bf16.msra.mxu0 0
  %152 = vmatprep.subr.bf16.mxu0 0
  %153 = vmatpush2.bf16.msra.mxu0 0
  %154 = vmatprep.subr.bf16.mxu0 0
  %155 = vmatpush2.bf16.msra.mxu0 0
  %156 = vmatprep.mubr.bf16.mxu0 0
  %157 = vmatmul.mubr.bf16.gmra.mxu0 %v122
  %v158 = vpop.f32.mrf.mxu0
  %v159 = vadd.f32 %v101, %v158
  %v160 = vpop.f32.mrf.mxu0
  %v161 = vpop.f32.mrf.mxu0
  %v162 = vadd.f32 %v101, %v161
  %v163 = vpop.f32.mrf.mxu0
  %164 = vdwg.mxu0
  %v165 = vxor.u32 %v159, 2147483648
  %v166 = vxor.u32 %v162, 2147483648
  %v167 = vmul.f32 %v165, 1.442695
  %v168 = vpow.pop %v167
  %v169 = vmul.f32 %v166, 1.442695
  %v170 = vpow.pop %v169
  %v171 = vadd.f32 %v168, 1.0
  %v172 = vadd.f32 %v170, 1.0
  %v173 = vrcp.pop %v171
  %v174 = vmul.f32 1.0, %v173
  %v175 = vrcp.pop %v172
  %v176 = vmul.f32 1.0, %v175
  %v177 = vmul.f32 %v159, %v174
  %v178 = vmul.f32 %v162, %v176
  %v179 = vpack.c.bf16 %v178, %v177
  %v180 = vld [vmem:[%s5] sm:$0xf]
  %v181 = vld [vmem:[%s5 + $0x4] sm:$0xf]
  %v182 = vld [vmem:[%s5 + $0x8] sm:$0xf]
  %v183 = vld [vmem:[%s5 + $0xc] sm:$0xf]
  %v184 = vld [vmem:[%s5 + $0x10] sm:$0xf]
  %v185 = vld [vmem:[%s5 + $0x14] sm:$0xf]
  %v186 = vld [vmem:[%s5 + $0x18] sm:$0xf]
  %v187 = vld [vmem:[%s5 + $0x1c] sm:$0xf]
  %v196 = vunpack.c.l.b16 %v180
  %v197 = vunpack.c.l.b16 %v181
  %v198 = vunpack.c.l.b16 %v182
  %v199 = vunpack.c.l.b16 %v183
  %v200 = vunpack.c.l.b16 %v184
  %v201 = vunpack.c.l.b16 %v185
  %v202 = vunpack.c.l.b16 %v186
  %v203 = vunpack.c.l.b16 %v187
  %v204 = vpack.c.b16 %v197, %v196
  %v205 = vpack.c.b16 %v199, %v198
  %v206 = vpack.c.b16 %v201, %v200
  %v207 = vpack.c.b16 %v203, %v202
  %vm212 = vcmask 523264
  %v214 = vsel %vm212, %v179, 0
  %216 = vmatprep.subr.bf16.mxu0 0
  %217 = vmatpush1.bf16.msra.mxu0 0
  %218 = vmatprep.subr.bf16.mxu0 0
  %219 = vmatpush1.bf16.msra.mxu0 0
  %220 = vmatprep.subr.bf16.mxu0 0
  %221 = vmatpush1.bf16.msra.mxu0 0
  %222 = vmatprep.subr.bf16.mxu0 0
  %223 = vmatpush1.bf16.msra.mxu0 0
  %224 = vmatprep.subr.bf16.mxu0 0
  %225 = vmatpush1.bf16.msra.mxu0 %v207
  %226 = vmatprep.subr.bf16.mxu0 0
  %227 = vmatpush1.bf16.msra.mxu0 %v206
  %228 = vmatprep.subr.bf16.mxu0 0
  %229 = vmatpush1.bf16.msra.mxu0 %v205
  %230 = vmatprep.subr.bf16.mxu0 0
  %231 = vmatpush1.bf16.msra.mxu0 %v204
  %232 = vmatprep.subr.bf16.mxu0 0
  %233 = vmatpush2.bf16.msra.mxu0 0
  %234 = vmatprep.subr.bf16.mxu0 0
  %235 = vmatpush2.bf16.msra.mxu0 0
  %236 = vmatprep.subr.bf16.mxu0 0
  %237 = vmatpush2.bf16.msra.mxu0 0
  %238 = vmatprep.subr.bf16.mxu0 0
  %239 = vmatpush2.bf16.msra.mxu0 0
  %240 = vmatprep.subr.bf16.mxu0 0
  %241 = vmatpush2.bf16.msra.mxu0 0
  %242 = vmatprep.subr.bf16.mxu0 0
  %243 = vmatpush2.bf16.msra.mxu0 0
  %244 = vmatprep.subr.bf16.mxu0 0
  %245 = vmatpush2.bf16.msra.mxu0 0
  %246 = vmatprep.subr.bf16.mxu0 0
  %247 = vmatpush2.bf16.msra.mxu0 0
  %248 = vmatprep.mubr.bf16.mxu0 0
  %249 = vmatmul.mubr.bf16.gmra.mxu0 %v214
  %v250 = vpop.f32.mrf.mxu0
  %v251 = vadd.f32 0.0, %v250
  %v252 = vpop.f32.mrf.mxu0
  %v253 = vpop.f32.mrf.mxu0
  %v254 = vadd.f32 0.0, %v253
  %v255 = vpop.f32.mrf.mxu0
  %256 = vdwg.mxu0
  // Predicated region
  $region34: #{transformer_forward.28} parent=0 // pred_check
    %p257 = pneg %p27
  $region35: #{transformer_forward.28} parent=0 // pred_check_branch
    %259 = sbr.rel (%p257) target = $region37
  $region36: #{transformer_forward.28} parent=0 // pred_region
    %v260 = vld [vmem:[%s0] sm:$0xff]
    %v261 = vld [vmem:[%s0 + $0x8] sm:$0xff]
    %v262 = vld [vmem:[%s6] sm:$0x1]
    %v264 = vlaneseq
    %v265 = vshrl.u32 %v264, 7
    %v266 = vsub.s32 0, %v265
    %v267 = vrot.slane %v262, %v266
    %v269 = vadd.f32 %v260, %v267
    %v270 = vadd.f32 %v261, %v267
    %v271 = vadd.f32 %v269, %v251
    %v272 = vadd.f32 %v270, %v254
    %273 = vst.msk [vmem:[%s7] sm:$0xff] %vm120, %v271
    %274 = vst.msk [vmem:[%s7 + $0x8] sm:$0xff] %vm120, %v272
  $region37: #{transformer_forward.28} parent=0 // pred_fallthru
    _
  %p275 = scmp.ne.s32.totalorder 0, 0
  // Predicated region
  $region38: #{transformer_forward.28} parent=0 // pred_check
    %p276 = pneg %p275
  $region39: #{transformer_forward.28} parent=0 // pred_check_branch
    %278 = sbr.rel (%p276) target = $region41
  $region40: #{transformer_forward.28} parent=0 // pred_region
    %v279 = vld [vmem:[%s7] sm:$0xff]
    %v280 = vld [vmem:[%s7 + $0x8] sm:$0xff]
    %v281 = vadd.f32 %v279, %v251
    %v282 = vadd.f32 %v280, %v254
    %283 = vst.msk [vmem:[%s7] sm:$0xff] %vm120, %v281
    %284 = vst.msk [vmem:[%s7 + $0x8] sm:$0xff] %vm120, %v282
  $region41: #{transformer_forward.28} parent=0 // pred_fallthru
    _
  // Predicated region
  $region42: #{transformer_forward.28} parent=0 // pred_check
    _
  $region43: #{transformer_forward.28} parent=0 // pred_check_branch
    %286 = sbr.rel (0) target = $region45
  $region44: #{transformer_forward.28} parent=0 // pred_region
    _
  $region45: #{transformer_forward.28} parent=0 // pred_fallthru
    _
  // Predicated region
  $region46: #{transformer_forward.28} parent=0 // pred_check
    _
  $region47: #{transformer_forward.28} parent=0 // pred_check_branch
    %288 = sbr.rel (0) target = $region49
  $region48: #{transformer_forward.28} parent=0 // pred_region
    _
  $region49: #{transformer_forward.28} parent=0 // pred_fallthru
    _

// kernel: transformer_forward.25
$region0: #{transformer_forward.25}
  #allocation0 [shape = 'u32[]', space=smem, size = 0x4, offset = 0x4, fixed_abs, tag = 'smem constant byte address 0x4 - core index']
  #allocation1 [shape = 'u32[144,128]{1,0:T(1,128)}', space=vmem, size = 0x12000, scoped, tag = 'internal scratch']
  #allocation2 [shape = 'bf16[16,32]{1,0:T(8,128)(2,1)}', space=vmem, size = 0x1000, scoped, tag = 'scratch operand']
  %s0 = inlined_call_operand.vmem [shape: f32[16,32], index: 0, kind: input, shape index: {}]
  %s1 = inlined_call_operand.vmem [shape: f32[1,32], index: 1, kind: input, shape index: {}]
  %s2 = inlined_call_operand.vmem [shape: f32[1,32], index: 2, kind: input, shape index: {}]
  %s3 = inlined_call_operand.vmem [shape: bf16[32,96], index: 3, kind: input, shape index: {}]
  %s4 = inlined_call_operand.vmem [shape: f32[1,96], index: 4, kind: input, shape index: {}]
  %s5 = inlined_call_operand.vmem [shape: bf16[16,96], index: 5, kind: output, shape index: {}]
  %s6 = sld [smem:[#allocation0]]
  $region34: #{transformer_forward.25} parent=0
    _
  %s8 = ssub.s32 1, %s6
  %s9 = scalar_select 0, %s8, %s6
  // Predicated region
  $region2: #{transformer_forward.25} parent=0 // pred_check
    _
  $region3: #{transformer_forward.25} parent=0 // pred_check_branch
    %11 = sbr.rel (0) target = $region5
  $region4: #{transformer_forward.25} parent=0 // pred_region
    _
  $region5: #{transformer_forward.25} parent=0 // pred_fallthru
    _
  // Predicated region
  $region6: #{transformer_forward.25} parent=0 // pred_check
    _
  $region7: #{transformer_forward.25} parent=0 // pred_check_branch
    %13 = sbr.rel (0) target = $region9
  $region8: #{transformer_forward.25} parent=0 // pred_region
    _
  $region9: #{transformer_forward.25} parent=0 // pred_fallthru
    _
  // Predicated region
  $region10: #{transformer_forward.25} parent=0 // pred_check
    _
  $region11: #{transformer_forward.25} parent=0 // pred_check_branch
    %15 = sbr.rel (0) target = $region13
  $region12: #{transformer_forward.25} parent=0 // pred_region
    _
  $region13: #{transformer_forward.25} parent=0 // pred_fallthru
    _
  // Predicated region
  $region14: #{transformer_forward.25} parent=0 // pred_check
    _
  $region15: #{transformer_forward.25} parent=0 // pred_check_branch
    %17 = sbr.rel (0) target = $region17
  $region16: #{transformer_forward.25} parent=0 // pred_region
    _
  $region17: #{transformer_forward.25} parent=0 // pred_fallthru
    _
  // Predicated region
  $region18: #{transformer_forward.25} parent=0 // pred_check
    _
  $region19: #{transformer_forward.25} parent=0 // pred_check_branch
    %19 = sbr.rel (0) target = $region21
  $region20: #{transformer_forward.25} parent=0 // pred_region
    _
  $region21: #{transformer_forward.25} parent=0 // pred_fallthru
    _
  %p21 = scmp.eq.s32.totalorder 0, 0
  // Predicated region
  $region22: #{transformer_forward.25} parent=0 // pred_check
    %p22 = pneg %p21
  $region23: #{transformer_forward.25} parent=0 // pred_check_branch
    %24 = sbr.rel (%p22) target = $region25
  $region24: #{transformer_forward.25} parent=0 // pred_region
    %v25 = vld [vmem:[%s0] sm:$0xff]
    %v26 = vld [vmem:[%s0 + $0x8] sm:$0xff]
    %vm27 = vcmask 261120
    %v28 = vsel %vm27, %v25, 0.0
    %29 = vadd.xlane.f32.xlu0 %v28
    %v30 = vpop.xlane.xlu0 %29
    %v31 = vsel %vm27, %v26, 0.0
    %32 = vadd.xlane.f32.xlu0 %v31
    %v33 = vpop.xlane.xlu0 %32
    %v34 = vrcp.pop 32.0
    %v35 = vmul.f32 %v30, %v34
    %v36 = vmul.f32 %v33, %v34
    %v37 = vsub.f32 %v25, %v35
    %v38 = vsub.f32 %v26, %v36
    %v39 = vmul.f32 %v37, %v37
    %v40 = vmul.f32 %v38, %v38
    %v41 = vsel %vm27, %v39, 0.0
    %42 = vadd.xlane.f32.xlu0 %v41
    %v43 = vpop.xlane.xlu0 %42
    %v44 = vsel %vm27, %v40, 0.0
    %45 = vadd.xlane.f32.xlu0 %v44
    %v46 = vpop.xlane.xlu0 %45
    %v47 = vmul.f32 %v43, %v34
    %v48 = vmul.f32 %v46, %v34
    %v49 = vadd.f32 %v47, 1e-05
    %v50 = vadd.f32 %v48, 1e-05
    %v51 = vrsqrt.pop %v49
    %v52 = vrsqrt.pop %v50
    %v53 = vmul.f32 %v37, %v51
    %v54 = vmul.f32 %v38, %v52
    %v55 = vld [vmem:[%s1] sm:$0x1]
    %v57 = vlaneseq
    %v58 = vshrl.u32 %v57, 7
    %v59 = vsub.s32 0, %v58
    %v60 = vrot.slane %v55, %v59
    %v62 = vmul.f32 %v53, %v60
    %v63 = vmul.f32 %v54, %v60
    %v64 = vld [vmem:[%s2] sm:$0x1]
    %v66 = vlaneseq
    %v67 = vshrl.u32 %v66, 7
    %v68 = vsub.s32 0, %v67
    %v69 = vrot.slane %v64, %v68
    %v71 = vadd.f32 %v62, %v69
    %v72 = vadd.f32 %v63, %v69
    %v73 = vpack.c.bf16 %v72, %v71
    %v75 = vunpack.c.l.b16 %v73
    %v76 = vunpack.c.h.b16 %v73
    %v77 = vpack.c.b16 %v75, %v75
    %v78 = vpack.c.b16 %v76, %v76
    %vm81 = vcmask 257024
    %82 = vst.msk [vmem:[#allocation2] sm:$0xf] %vm81, %v77
    %83 = vst.msk [vmem:[#allocation2 + $0x4] sm:$0xf] %vm81, %v78
  $region25: #{transformer_forward.25} parent=0 // pred_fallthru
    _
  %v84 = vld [vmem:[#allocation2] sm:$0xf]
  %v85 = vld [vmem:[#allocation2 + $0x4] sm:$0xf]
  %v86 = vld [vmem:[%s3] sm:$0xf]
  %v87 = vld [vmem:[%s3 + $0x4] sm:$0xf]
  %v88 = vld [vmem:[%s3 + $0x8] sm:$0xf]
  %v89 = vld [vmem:[%s3 + $0xc] sm:$0xf]
  %v90 = vld [vmem:[%s4] sm:$0x1]
  %v92 = vlaneseq
  %v93 = vshrl.u32 %v92, 7
  %v94 = vsub.s32 0, %v93
  %v95 = vrot.slane %v90, %v94
  %v99 = vunpack.c.l.b16 %v84
  %v100 = vunpack.c.l.b16 %v85
  %v101 = vpack.c.b16 %v100, %v99
  %v106 = vunpack.c.l.b16 %v86
  %v107 = vunpack.c.l.b16 %v87
  %v108 = vunpack.c.l.b16 %v88
  %v109 = vunpack.c.l.b16 %v89
  %v110 = vpack.c.b16 %v107, %v106
  %v111 = vpack.c.b16 %v109, %v108
  %vm114 = vcmask 261120
  %v116 = vsel %vm114, %v101, 0
  %118 = vmatprep.subr.bf16.mxu0 0
  %119 = vmatpush1.bf16.msra.mxu0 0
  %120 = vmatprep.subr.bf16.mxu0 0
  %121 = vmatpush1.bf16.msra.mxu0 0
  %122 = vmatprep.subr.bf16.mxu0 0
  %123 = vmatpush1.bf16.msra.mxu0 0
  %124 = vmatprep.subr.bf16.mxu0 0
  %125 = vmatpush1.bf16.msra.mxu0 0
  %126 = vmatprep.subr.bf16.mxu0 0
  %127 = vmatpush1.bf16.msra.mxu0 0
  %128 = vmatprep.subr.bf16.mxu0 0
  %129 = vmatpush1.bf16.msra.mxu0 0
  %130 = vmatprep.subr.bf16.mxu0 0
  %131 = vmatpush1.bf16.msra.mxu0 %v111
  %132 = vmatprep.subr.bf16.mxu0 0
  %133 = vmatpush1.bf16.msra.mxu0 %v110
  %134 = vmatprep.subr.bf16.mxu0 0
  %135 = vmatpush2.bf16.msra.mxu0 0
  %136 = vmatprep.subr.bf16.mxu0 0
  %137 = vmatpush2.bf16.msra.mxu0 0
  %138 = vmatprep.subr.bf16.mxu0 0
  %139 = vmatpush2.bf16.msra.mxu0 0
  %140 = vmatprep.subr.bf16.mxu0 0
  %141 = vmatpush2.bf16.msra.mxu0 0
  %142 = vmatprep.subr.bf16.mxu0 0
  %143 = vmatpush2.bf16.msra.mxu0 0
  %144 = vmatprep.subr.bf16.mxu0 0
  %145 = vmatpush2.bf16.msra.mxu0 0
  %146 = vmatprep.subr.bf16.mxu0 0
  %147 = vmatpush2.bf16.msra.mxu0 0
  %148 = vmatprep.subr.bf16.mxu0 0
  %149 = vmatpush2.bf16.msra.mxu0 0
  %150 = vmatprep.mubr.bf16.mxu0 0
  %151 = vmatmul.mubr.bf16.gmra.mxu0 %v116
  %v152 = vpop.f32.mrf.mxu0
  %v153 = vadd.f32 %v95, %v152
  %v154 = vpop.f32.mrf.mxu0
  %v155 = vpop.f32.mrf.mxu0
  %v156 = vadd.f32 %v95, %v155
  %v157 = vpop.f32.mrf.mxu0
  %158 = vdwg.mxu0
  %v159 = vpack.c.bf16 %v156, %v153
  %v161 = vunpack.c.l.b16 %v159
  %v162 = vunpack.c.h.b16 %v159
  %v163 = vpack.c.b16 %v161, %v161
  %v164 = vpack.c.b16 %v162, %v162
  %vm167 = vcmask 781312
  %168 = vst.msk [vmem:[%s5] sm:$0xf] %vm167, %v163
  %169 = vst.msk [vmem:[%s5 + $0x4] sm:$0xf] %vm167, %v164
  // Predicated region
  $region26: #{transformer_forward.25} parent=0 // pred_check
    _
  $region27: #{transformer_forward.25} parent=0 // pred_check_branch
    %171 = sbr.rel (0) target = $region29
  $region28: #{transformer_forward.25} parent=0 // pred_region
    _
  $region29: #{transformer_forward.25} parent=0 // pred_fallthru
    _
  // Predicated region
  $region30: #{transformer_forward.25} parent=0 // pred_check
    _
  $region31: #{transformer_forward.25} parent=0 // pred_check_branch
    %173 = sbr.rel (0) target = $region33
  $region32: #{transformer_forward.25} parent=0 // pred_region
    _
  $region33: #{transformer_forward.25} parent=0 // pred_fallthru
    _

// kernel: transformer_forward.27
$region0: #{transformer_forward.27}
  #allocation0 [shape = 'u32[]', space=smem, size = 0x4, offset = 0x4, fixed_abs, tag = 'smem constant byte address 0x4 - core index']
  #allocation1 [shape = 'u32[144,128]{1,0:T(1,128)}', space=vmem, size = 0x12000, scoped, tag = 'internal scratch']
  #allocation2 [shape = 'f32[16,32]{1,0:T(8,128)}', space=vmem, size = 0x2000, scoped, tag = 'scratch operand']
  %s0 = inlined_call_operand.vmem [shape: bf16[16,32], index: 0, kind: input, shape index: {}]
  %s1 = inlined_call_operand.vmem [shape: bf16[32,32], index: 1, kind: input, shape index: {}]
  %s2 = inlined_call_operand.vmem [shape: f32[1,32], index: 2, kind: input, shape index: {}]
  %s3 = inlined_call_operand.vmem [shape: f32[16,32], index: 3, kind: input, shape index: {}]
  %s4 = inlined_call_operand.vmem [shape: f32[16,32], index: 4, kind: output, shape index: {}]
  %s5 = sld [smem:[#allocation0]]
  $region34: #{transformer_forward.27} parent=0
    _
  %s7 = ssub.s32 1, %s5
  %s8 = scalar_select 0, %s7, %s5
  // Predicated region
  $region2: #{transformer_forward.27} parent=0 // pred_check
    _
  $region3: #{transformer_forward.27} parent=0 // pred_check_branch
    %10 = sbr.rel (0) target = $region5
  $region4: #{transformer_forward.27} parent=0 // pred_region
    _
  $region5: #{transformer_forward.27} parent=0 // pred_fallthru
    _
  // Predicated region
  $region6: #{transformer_forward.27} parent=0 // pred_check
    _
  $region7: #{transformer_forward.27} parent=0 // pred_check_branch
    %12 = sbr.rel (0) target = $region9
  $region8: #{transformer_forward.27} parent=0 // pred_region
    _
  $region9: #{transformer_forward.27} parent=0 // pred_fallthru
    _
  // Predicated region
  $region10: #{transformer_forward.27} parent=0 // pred_check
    _
  $region11: #{transformer_forward.27} parent=0 // pred_check_branch
    %14 = sbr.rel (0) target = $region13
  $region12: #{transformer_forward.27} parent=0 // pred_region
    _
  $region13: #{transformer_forward.27} parent=0 // pred_fallthru
    _
  // Predicated region
  $region14: #{transformer_forward.27} parent=0 // pred_check
    _
  $region15: #{transformer_forward.27} parent=0 // pred_check_branch
    %16 = sbr.rel (0) target = $region17
  $region16: #{transformer_forward.27} parent=0 // pred_region
    _
  $region17: #{transformer_forward.27} parent=0 // pred_fallthru
    _
  %p18 = scmp.eq.s32.totalorder 0, 0
  // Predicated region
  $region18: #{transformer_forward.27} parent=0 // pred_check
    %p19 = pneg %p18
  $region19: #{transformer_forward.27} parent=0 // pred_check_branch
    %21 = sbr.rel (%p19) target = $region21
  $region20: #{transformer_forward.27} parent=0 // pred_region
    %vm22 = vcmask 261120
    %23 = vst.msk [vmem:[#allocation2] sm:$0xff] %vm22, 0.0
    %24 = vst.msk [vmem:[#allocation2 + $0x8] sm:$0xff] %vm22, 0.0
  $region21: #{transformer_forward.27} parent=0 // pred_fallthru
    _
  %v25 = vld [vmem:[#allocation2] sm:$0xff]
  %v26 = vld [vmem:[#allocation2 + $0x8] sm:$0xff]
  %v27 = vld [vmem:[%s0] sm:$0xf]
  %v28 = vld [vmem:[%s0 + $0x4] sm:$0xf]
  %v29 = vld [vmem:[%s1] sm:$0xf]
  %v30 = vld [vmem:[%s1 + $0x4] sm:$0xf]
  %v31 = vld [vmem:[%s1 + $0x8] sm:$0xf]
  %v32 = vld [vmem:[%s1 + $0xc] sm:$0xf]
  %v35 = vunpack.c.l.b16 %v27
  %v36 = vunpack.c.l.b16 %v28
  %v37 = vpack.c.b16 %v36, %v35
  %v42 = vunpack.c.l.b16 %v29
  %v43 = vunpack.c.l.b16 %v30
  %v44 = vunpack.c.l.b16 %v31
  %v45 = vunpack.c.l.b16 %v32
  %v46 = vpack.c.b16 %v43, %v42
  %v47 = vpack.c.b16 %v45, %v44
  %vm50 = vcmask 261120
  %v52 = vsel %vm50, %v37, 0
  %54 = vmatprep.subr.bf16.mxu0 0
  %55 = vmatpush1.bf16.msra.mxu0 0
  %56 = vmatprep.subr.bf16.mxu0 0
  %57 = vmatpush1.bf16.msra.mxu0 0
  %58 = vmatprep.subr.bf16.mxu0 0
  %59 = vmatpush1.bf16.msra.mxu0 0
  %60 = vmatprep.subr.bf16.mxu0 0
  %61 = vmatpush1.bf16.msra.mxu0 0
  %62 = vmatprep.subr.bf16.mxu0 0
  %63 = vmatpush1.bf16.msra.mxu0 0
  %64 = vmatprep.subr.bf16.mxu0 0
  %65 = vmatpush1.bf16.msra.mxu0 0
  %66 = vmatprep.subr.bf16.mxu0 0
  %67 = vmatpush1.bf16.msra.mxu0 %v47
  %68 = vmatprep.subr.bf16.mxu0 0
  %69 = vmatpush1.bf16.msra.mxu0 %v46
  %70 = vmatprep.subr.bf16.mxu0 0
  %71 = vmatpush2.bf16.msra.mxu0 0
  %72 = vmatprep.subr.bf16.mxu0 0
  %73 = vmatpush2.bf16.msra.mxu0 0
  %74 = vmatprep.subr.bf16.mxu0 0
  %75 = vmatpush2.bf16.msra.mxu0 0
  %76 = vmatprep.subr.bf16.mxu0 0
  %77 = vmatpush2.bf16.msra.mxu0 0
  %78 = vmatprep.subr.bf16.mxu0 0
  %79 = vmatpush2.bf16.msra.mxu0 0
  %80 = vmatprep.subr.bf16.mxu0 0
  %81 = vmatpush2.bf16.msra.mxu0 0
  %82 = vmatprep.subr.bf16.mxu0 0
  %83 = vmatpush2.bf16.msra.mxu0 0
  %84 = vmatprep.subr.bf16.mxu0 0
  %85 = vmatpush2.bf16.msra.mxu0 0
  %86 = vmatprep.mubr.bf16.mxu0 0
  %87 = vmatmul.mubr.bf16.gmra.mxu0 %v52
  %v88 = vpop.f32.mrf.mxu0
  %v89 = vadd.f32 0.0, %v88
  %v90 = vpop.f32.mrf.mxu0
  %v91 = vpop.f32.mrf.mxu0
  %v92 = vadd.f32 0.0, %v91
  %v93 = vpop.f32.mrf.mxu0
  %94 = vdwg.mxu0
  %v95 = vadd.f32 %v25, %v89
  %v96 = vadd.f32 %v26, %v92
  %97 = vst.msk [vmem:[#allocation2] sm:$0xff] %vm50, %v95
  %98 = vst.msk [vmem:[#allocation2 + $0x8] sm:$0xff] %vm50, %v96
  // Predicated region
  $region22: #{transformer_forward.27} parent=0 // pred_check
    %p99 = pneg %p18
  $region23: #{transformer_forward.27} parent=0 // pred_check_branch
    %101 = sbr.rel (%p99) target = $region25
  $region24: #{transformer_forward.27} parent=0 // pred_region
    %v102 = vld [vmem:[#allocation2] sm:$0xff]
    %v103 = vld [vmem:[#allocation2 + $0x8] sm:$0xff]
    %v104 = vld [vmem:[%s2] sm:$0x1]
    %v106 = vlaneseq
    %v107 = vshrl.u32 %v106, 7
    %v108 = vsub.s32 0, %v107
    %v109 = vrot.slane %v104, %v108
    %v111 = vadd.f32 %v102, %v109
    %v112 = vadd.f32 %v103, %v109
    %v113 = vld [vmem:[%s3] sm:$0xff]
    %v114 = vld [vmem:[%s3 + $0x8] sm:$0xff]
    %v115 = vadd.f32 %v111, %v113
    %v116 = vadd.f32 %v112, %v114
    %117 = vst.msk [vmem:[%s4] sm:$0xff] %vm50, %v115
    %118 = vst.msk [vmem:[%s4 + $0x8] sm:$0xff] %vm50, %v116
  $region25: #{transformer_forward.27} parent=0 // pred_fallthru
    _
  // Predicated region
  $region26: #{transformer_forward.27} parent=0 // pred_check
    _
  $region27: #{transformer_forward.27} parent=0 // pred_check_branch
    %120 = sbr.rel (0) target = $region29
  $region28: #{transformer_forward.27} parent=0 // pred_region
    _
  $region29: #{transformer_forward.27} parent=0 // pred_fallthru
    _
  // Predicated region
  $region30: #{transformer_forward.27} parent=0 // pred_check
    _
  $region31: #{transformer_forward.27} parent=0 // pred_check_branch
    %122 = sbr.rel (0) target = $region33
  $region32: #{transformer_forward.27} parent=0 // pred_region
    _
  $region33: #{transformer_forward.27} parent=0 // pred_fallthru
    _

// kernel: transformer_forward.26
$region0: #{transformer_forward.26}
  #allocation0 [shape = 'u32[]', space=smem, size = 0x4, offset = 0x4, fixed_abs, tag = 'smem constant byte address 0x4 - core index']
  #allocation1 [shape = 'u32[144,128]{1,0:T(1,128)}', space=vmem, size = 0x12000, scoped, tag = 'internal scratch']
  %s0 = inlined_call_operand.vmem [shape: bf16[2,8,96], index: 0, kind: input, shape index: {}, may-alias: {0,1}]
  %s1 = inlined_call_operand.vmem [shape: bf16[2,8,96], index: 1, kind: input, shape index: {}, may-alias: {0,1}]
  %s2 = inlined_call_operand.vmem [shape: bf16[2,8,32], index: 2, kind: output, shape index: {}]
  %s3 = sld [smem:[#allocation0]]
  $region41: #{transformer_forward.26} parent=0
    _
  %s5 = ssub.s32 1, %s3
  %s6 = scalar_select 0, %s5, %s3
  loop: start=0, step=1, limit=4
  $region2: #{transformer_forward.26} parent=0 // loop_pre_header
    _
  $region3: #{transformer_forward.26} parent=0 // loop_header
    %s8 = sphi 0, %s12
    %p9 = scmp.ge.s32.totalorder %s8, 4
    %s15 = sphi 0, %s27
    %s16 = sphi 0, %s23
    %s17 = sphi 0, %s15
    %s18 = sphi 0, %s16
    %s19 = sphi 0, %s17
    %s20 = sphi 0, %s18
    %s32 = sphi 0, %s34
    %s35 = sphi 0, %s32
    %s36 = sphi 0, %s35
    %s52 = sphi 0, %s36
    %s58 = sphi 0, %s60
    %s61 = sphi 0, %s58
    %s62 = sphi 0, %s61
    %s78 = sphi 0, %s62
    %s86 = sphi 0, %s88
    %s89 = sphi 0, %s86
    %s90 = sphi 0, %s89
    %s106 = sphi 0, %s90
  $region4: #{transformer_forward.26} parent=0 // loop_header_branch
    %11 = sbr.rel (%p9) target = $region8
  $region5: #{transformer_forward.26} parent=0 // loop_body
    %s13 = ssub.s32 %s8, 1
    %s14 = ssub.s32 %s8, 2
    %s21 = sadd.s32 1, %s16
    %p22 = scmp.ge.s32.totalorder %s21, 1
    %s23 = scalar_select %p22, 0, %s21
    %s24 = sadd.s32 1, %s15
    %s25 = scalar_select %p22, %s24, %s15
    %p26 = scmp.ge.s32.totalorder %s25, 2
    %s27 = scalar_select %p26, 0, %s25
    %s28 = ssub.s32 %s15, %s27
    %s29 = ssub.s32 %s16, %s23
    %s30 = sor.u32 %s28, %s29
    %p31 = scmp.eq.s32.totalorder %s30, 0
    %s33 = sadd.s32 %s32, 1
    %s34 = scalar_select %p31, %s32, %s33
    %p37 = pneg %p31
    %p38 = scmp.eq.s32.totalorder %s8, 1
    %p39 = por %p37, %p38
    %p40 = scmp.ne.s32.totalorder %s32, %s35
    %p41 = scmp.eq.s32.totalorder %s8, 0
    %p42 = por %p40, %p41
    %p43 = scmp.ne.s32.totalorder %s32, %s35
    %p44 = scmp.eq.s32.totalorder %s13, 1
    %p45 = por %p43, %p44
    %p46 = scmp.ne.s32.totalorder %s35, %s36
    %p47 = scmp.eq.s32.totalorder %s13, 0
    %p48 = por %p46, %p47
    %p49 = scmp.ne.s32.totalorder %s35, %s36
    %p50 = scmp.eq.s32.totalorder %s14, 1
    %p51 = por %p49, %p50
    %p53 = scmp.ne.s32.totalorder %s36, %s52
    %p54 = scmp.eq.s32.totalorder %s14, 0
    %p55 = por %p53, %p54
    %s56 = ssub.s32 %s15, %s27
    %p57 = scmp.eq.s32.totalorder %s56, 0
    %s59 = sadd.s32 %s58, 1
    %s60 = scalar_select %p57, %s58, %s59
    %p63 = pneg %p57
    %p64 = scmp.eq.s32.totalorder %s8, 1
    %p65 = por %p63, %p64
    %p66 = scmp.ne.s32.totalorder %s58, %s61
    %p67 = scmp.eq.s32.totalorder %s8, 0
    %p68 = por %p66, %p67
    %p69 = scmp.ne.s32.totalorder %s58, %s61
    %p70 = scmp.eq.s32.totalorder %s13, 1
    %p71 = por %p69, %p70
    %p72 = scmp.ne.s32.totalorder %s61, %s62
    %p73 = scmp.eq.s32.totalorder %s13, 0
    %p74 = por %p72, %p73
    %p75 = scmp.ne.s32.totalorder %s61, %s62
    %p76 = scmp.eq.s32.totalorder %s14, 1
    %p77 = por %p75, %p76
    %p79 = scmp.ne.s32.totalorder %s62, %s78
    %p80 = scmp.eq.s32.totalorder %s14, 0
    %p81 = por %p79, %p80
    %s82 = ssub.s32 %s15, %s27
    %s83 = ssub.s32 %s16, %s23
    %s84 = sor.u32 %s82, %s83
    %p85 = scmp.eq.s32.totalorder %s84, 0
    %s87 = sadd.s32 %s86, 1
    %s88 = scalar_select %p85, %s86, %s87
    %p91 = pneg %p85
    %p92 = scmp.eq.s32.totalorder %s8, 1
    %p93 = por %p91, %p92
    %p94 = scmp.ne.s32.totalorder %s86, %s89
    %p95 = scmp.eq.s32.totalorder %s8, 0
    %p96 = por %p94, %p95
    %p97 = scmp.ne.s32.totalorder %s86, %s89
    %p98 = scmp.eq.s32.totalorder %s13, 1
    %p99 = por %p97, %p98
    %p100 = scmp.ne.s32.totalorder %s89, %s90
    %p101 = scmp.eq.s32.totalorder %s13, 0
    %p102 = por %p100, %p101
    %p103 = scmp.ne.s32.totalorder %s89, %s90
    %p104 = scmp.eq.s32.totalorder %s14, 1
    %p105 = por %p103, %p104
    %p107 = scmp.ne.s32.totalorder %s90, %s106
    %p108 = scmp.eq.s32.totalorder %s14, 0
    %p109 = por %p107, %p108
    %p110 = scmp.le.s32.totalorder 1, %s8
    %p111 = scmp.lt.s32.totalorder %s8, 3
    %p112 = pnand %p110, %p111
    %p113 = pneg %p112
    // Predicated region
    $region9: #{transformer_forward.26} parent=5 // pred_check
      _
    $region10: #{transformer_forward.26} parent=5 // pred_check_branch
      %115 = sbr.rel (%p112) target = $region12
    $region11: #{transformer_forward.26} parent=5 // pred_region
      %s116 = ssub.s32 %s8, 1
    $region12: #{transformer_forward.26} parent=5 // pred_fallthru
      _
    %p117 = scmp.lt.s32.totalorder %s8, 2
    // Predicated region
    $region13: #{transformer_forward.26} parent=5 // pred_check
      %p118 = pneg %p117
    $region14: #{transformer_forward.26} parent=5 // pred_check_branch
      %120 = sbr.rel (%p118) target = $region16
    $region15: #{transformer_forward.26} parent=5 // pred_region
      // Predicated region
      $region17: #{transformer_forward.26} parent=15 // pred_check
        %p121 = pneg %p42
      $region18: #{transformer_forward.26} parent=15 // pred_check_branch
        %123 = sbr.rel (%p121) target = $region20
      $region19: #{transformer_forward.26} parent=15 // pred_region
        %p124 = scmp.lt.s32.totalorder %s15, 1
        %s125 = scalar_select %p124, %s15, 1
        %p126 = scmp.lt.s32.totalorder %s16, 0
        %s127 = scalar_select %p126, %s16, 0
        %s128 = sadd.s32 %s127, %s125
        %s129 = smul.addr %s128, 4
        %s130 = scalar_lea.vmem %s0, %s129
      $region20: #{transformer_forward.26} parent=15 // pred_fallthru
        _
      // Predicated region
      $region21: #{transformer_forward.26} parent=15 // pred_check
        %p131 = pneg %p68
      $region22: #{transformer_forward.26} parent=15 // pred_check_branch
        %133 = sbr.rel (%p131) target = $region24
      $region23: #{transformer_forward.26} parent=15 // pred_region
        %p134 = scmp.lt.s32.totalorder %s15, 1
        %s135 = scalar_select %p134, %s15, 1
        %s136 = smul.addr %s135, 4
        %s137 = scalar_lea.vmem %s1, %s136
      $region24: #{transformer_forward.26} parent=15 // pred_fallthru
        _
    $region16: #{transformer_forward.26} parent=5 // pred_fallthru
      _
    %p138 = scmp.le.s32.totalorder 1, %s8
    %p139 = scmp.lt.s32.totalorder %s8, 3
    %p140 = pnand %p138, %p139
    %p141 = pneg %p140
    // Predicated region
    $region25: #{transformer_forward.26} parent=5 // pred_check
      _
    $region26: #{transformer_forward.26} parent=5 // pred_check_branch
      %143 = sbr.rel (%p140) target = $region28
    $region27: #{transformer_forward.26} parent=5 // pred_region
      %s144 = ssub.s32 %s8, 1
      %p145 = scmp.lt.s32.totalorder %s17, 1
      %s146 = scalar_select %p145, %s17, 1
      %p147 = scmp.lt.s32.totalorder %s18, 0
      %s148 = scalar_select %p147, %s18, 0
      %s149 = sadd.s32 %s148, %s146
      %s150 = smul.addr %s149, 4
      %s151 = scalar_lea.vmem %s0, %s150
      %p152 = pneg %p48
      %p153 = pneg %p45
      %p154 = scmp.lt.s32.totalorder %s17, 1
      %s155 = scalar_select %p154, %s17, 1
      %s156 = smul.addr %s155, 4
      %s157 = scalar_lea.vmem %s1, %s156
      %p158 = pneg %p74
      %p159 = pneg %p71
      %p160 = pneg %p102
      %p161 = pneg %p99
      %p162 = scmp.lt.s32.totalorder %s17, 1
      %s163 = scalar_select %p162, %s17, 1
      %p164 = scmp.lt.s32.totalorder %s18, 0
      %s165 = scalar_select %p164, %s18, 0
      %s166 = sadd.s32 %s165, %s163
      %s167 = smul.addr %s166, 4
      %s168 = scalar_lea.vmem %s2, %s167
      %p169 = scmp.lt.s32.totalorder %s17, 1
      %s170 = scalar_select %p169, %s17, 1
      %p171 = scmp.lt.s32.totalorder %s18, 0
      %s172 = scalar_select %p171, %s18, 0
      %s173 = sadd.s32 %s172, %s170
      %s174 = smul.addr %s173, 4
      %s175 = scalar_lea.vmem %s0, %s174
      %p176 = scmp.lt.s32.totalorder %s17, 1
      %s177 = scalar_select %p176, %s17, 1
      %s178 = smul.addr %s177, 4
      %s179 = scalar_lea.vmem %s1, %s178
      %p180 = scmp.lt.s32.totalorder %s17, 1
      %s181 = scalar_select %p180, %s17, 1
      %p182 = scmp.lt.s32.totalorder %s18, 0
      %s183 = scalar_select %p182, %s18, 0
      %s184 = sadd.s32 %s183, %s181
      %s185 = smul.addr %s184, 4
      %s186 = scalar_lea.vmem %s2, %s185
      %v188 = vld [vmem:[%s175] sm:$0xf]
      %v189 = vld [vmem:[%s179] sm:$0xf]
      %191 = vrot.lane.b32.xlu0 %v188, 120
      %v192 = vpop.permute.xlu0 %191
      %193 = vrot.lane.b32.xlu0 %v188, 112
      %v194 = vpop.permute.xlu0 %193
      %195 = vrot.lane.b32.xlu0 %v188, 104
      %v196 = vpop.permute.xlu0 %195
      %v199 = vpack.i.b16 %v192, %v188
      %v200 = vshrl.u32 %v188, 16
      %v201 = vshrl.u32 %v192, 16
      %v202 = vpack.i.b16 %v201, %v200
      %v205 = vpack.i.b16 %v196, %v194
      %v206 = vshrl.u32 %v194, 16
      %v207 = vshrl.u32 %v196, 16
      %v208 = vpack.i.b16 %v207, %v206
      %v211 = vunpack.c.l.s4 1983009808
      %v212 = vunpack.c.0.s8 %v211
      %v213 = vlaneseq
      %v214 = vshrl.u32 %v213, 7
      %v215 = vsub.s32 %v212, %v214
      %v216 = vrot.slane %v199, %v215
      %v219 = vunpack.c.l.s4 1983009808
      %v220 = vunpack.c.0.s8 %v219
      %v221 = vlaneseq
      %v222 = vshrl.u32 %v221, 7
      %v223 = vsub.s32 %v220, %v222
      %v224 = vrot.slane %v205, %v223
      %v225 = vcombine.low %v216, %v224
      %v226 = vcombine.high %v216, %v224
      %v228 = vunpack.c.l.s4 1934713408
      %v229 = vunpack.c.0.s8 %v228
      %v230 = vlaneseq
      %v231 = vshrl.u32 %v230, 7
      %v232 = vsub.s32 %v229, %v231
      %v233 = vrot.slane %v225, %v232
      %v235 = vunpack.c.l.s4 1934713408
      %v236 = vunpack.c.0.s8 %v235
      %v237 = vlaneseq
      %v238 = vshrl.u32 %v237, 7
      %v239 = vsub.s32 %v236, %v238
      %v240 = vrot.slane %v226, %v239
      %v241 = vcombine.high %v233, 0
      %v242 = vcombine.high %v240, 0
      %v245 = vunpack.c.l.s4 1983009808
      %v246 = vunpack.c.0.s8 %v245
      %v247 = vlaneseq
      %v248 = vshrl.u32 %v247, 7
      %v249 = vsub.s32 %v246, %v248
      %v250 = vrot.slane %v202, %v249
      %v253 = vunpack.c.l.s4 1983009808
      %v254 = vunpack.c.0.s8 %v253
      %v255 = vlaneseq
      %v256 = vshrl.u32 %v255, 7
      %v257 = vsub.s32 %v254, %v256
      %v258 = vrot.slane %v208, %v257
      %v259 = vcombine.low %v250, %v258
      %v260 = vcombine.high %v250, %v258
      %v262 = vunpack.c.l.s4 1934713408
      %v263 = vunpack.c.0.s8 %v262
      %v264 = vlaneseq
      %v265 = vshrl.u32 %v264, 7
      %v266 = vsub.s32 %v263, %v265
      %v267 = vrot.slane %v259, %v266
      %v269 = vunpack.c.l.s4 1934713408
      %v270 = vunpack.c.0.s8 %v269
      %v271 = vlaneseq
      %v272 = vshrl.u32 %v271, 7
      %v273 = vsub.s32 %v270, %v272
      %v274 = vrot.slane %v260, %v273
      %v275 = vcombine.high %v267, 0
      %v276 = vcombine.high %v274, 0
      %v277 = vcombine.low %v233, %v240
      %v279 = vunpack.c.l.s4 1983009808
      %v280 = vunpack.c.0.s8 %v279
      %v281 = vlaneseq
      %v282 = vshrl.u32 %v281, 7
      %v283 = vsub.s32 %v280, %v282
      %v284 = vrot.slane %v277, %v283
      %v285 = vcombine.low %v241, %v242
      %v287 = vunpack.c.l.s4 1983009808
      %v288 = vunpack.c.0.s8 %v287
      %v289 = vlaneseq
      %v290 = vshrl.u32 %v289, 7
      %v291 = vsub.s32 %v288, %v290
      %v292 = vrot.slane %v285, %v291
      %v293 = vcombine.low %v284, %v292
      %v295 = vunpack.c.l.s4 1934713408
      %v296 = vunpack.c.0.s8 %v295
      %v297 = vlaneseq
      %v298 = vshrl.u32 %v297, 7
      %v299 = vsub.s32 %v296, %v298
      %v300 = vrot.slane %v293, %v299
      %v301 = vcombine.high %v300, 0
      %v302 = vcombine.low %v267, %v274
      %v304 = vunpack.c.l.s4 1983009808
      %v305 = vunpack.c.0.s8 %v304
      %v306 = vlaneseq
      %v307 = vshrl.u32 %v306, 7
      %v308 = vsub.s32 %v305, %v307
      %v309 = vrot.slane %v302, %v308
      %v310 = vcombine.low %v275, %v276
      %v312 = vunpack.c.l.s4 1983009808
      %v313 = vunpack.c.0.s8 %v312
      %v314 = vlaneseq
      %v315 = vshrl.u32 %v314, 7
      %v316 = vsub.s32 %v313, %v315
      %v317 = vrot.slane %v310, %v316
      %v318 = vcombine.low %v309, %v317
      %v320 = vunpack.c.l.s4 1934713408
      %v321 = vunpack.c.0.s8 %v320
      %v322 = vlaneseq
      %v323 = vshrl.u32 %v322, 7
      %v324 = vsub.s32 %v321, %v323
      %v325 = vrot.slane %v318, %v324
      %v326 = vcombine.high %v325, 0
      %v329 = vpack.i.b16 %v325, %v300
      %v330 = vshrl.u32 %v300, 16
      %v331 = vshrl.u32 %v325, 16
      %v332 = vpack.i.b16 %v331, %v330
      %v335 = vpack.i.b16 %v326, %v301
      %v336 = vshrl.u32 %v301, 16
      %v337 = vshrl.u32 %v326, 16
      %v338 = vpack.i.b16 %v337, %v336
      %340 = vrot.lane.b32.xlu0 %v189, 120
      %v341 = vpop.permute.xlu0 %340
      %342 = vrot.lane.b32.xlu0 %v189, 112
      %v343 = vpop.permute.xlu0 %342
      %344 = vrot.lane.b32.xlu0 %v189, 104
      %v345 = vpop.permute.xlu0 %344
      %346 = vrot.lane.b32.xlu0 %v189, 96
      %v347 = vpop.permute.xlu0 %346
      %348 = vrot.lane.b32.xlu0 %v341, 96
      %v349 = vpop.permute.xlu0 %348
      %350 = vrot.lane.b32.xlu0 %v343, 96
      %v351 = vpop.permute.xlu0 %350
      %352 = vrot.lane.b32.xlu0 %v345, 96
      %v353 = vpop.permute.xlu0 %352
      %v356 = vpack.i.b16 %v349, %v347
      %v357 = vshrl.u32 %v347, 16
      %v358 = vshrl.u32 %v349, 16
      %v359 = vpack.i.b16 %v358, %v357
      %v362 = vpack.i.b16 %v353, %v351
      %v363 = vshrl.u32 %v351, 16
      %v364 = vshrl.u32 %v353, 16
      %v365 = vpack.i.b16 %v364, %v363
      %v368 = vunpack.c.l.s4 1983009808
      %v369 = vunpack.c.0.s8 %v368
      %v370 = vlaneseq
      %v371 = vshrl.u32 %v370, 7
      %v372 = vsub.s32 %v369, %v371
      %v373 = vrot.slane %v356, %v372
      %v376 = vunpack.c.l.s4 1983009808
      %v377 = vunpack.c.0.s8 %v376
      %v378 = vlaneseq
      %v379 = vshrl.u32 %v378, 7
      %v380 = vsub.s32 %v377, %v379
      %v381 = vrot.slane %v362, %v380
      %v382 = vcombine.low %v373, %v381
      %v383 = vcombine.high %v373, %v381
      %v385 = vunpack.c.l.s4 1934713408
      %v386 = vunpack.c.0.s8 %v385
      %v387 = vlaneseq
      %v388 = vshrl.u32 %v387, 7
      %v389 = vsub.s32 %v386, %v388
      %v390 = vrot.slane %v382, %v389
      %v392 = vunpack.c.l.s4 1934713408
      %v393 = vunpack.c.0.s8 %v392
      %v394 = vlaneseq
      %v395 = vshrl.u32 %v394, 7
      %v396 = vsub.s32 %v393, %v395
      %v397 = vrot.slane %v383, %v396
      %v398 = vcombine.high %v390, 0
      %v399 = vcombine.high %v397, 0
      %v402 = vunpack.c.l.s4 1983009808
      %v403 = vunpack.c.0.s8 %v402
      %v404 = vlaneseq
      %v405 = vshrl.u32 %v404, 7
      %v406 = vsub.s32 %v403, %v405
      %v407 = vrot.slane %v359, %v406
      %v410 = vunpack.c.l.s4 1983009808
      %v411 = vunpack.c.0.s8 %v410
      %v412 = vlaneseq
      %v413 = vshrl.u32 %v412, 7
      %v414 = vsub.s32 %v411, %v413
      %v415 = vrot.slane %v365, %v414
      %v416 = vcombine.low %v407, %v415
      %v417 = vcombine.high %v407, %v415
      %v419 = vunpack.c.l.s4 1934713408
      %v420 = vunpack.c.0.s8 %v419
      %v421 = vlaneseq
      %v422 = vshrl.u32 %v421, 7
      %v423 = vsub.s32 %v420, %v422
      %v424 = vrot.slane %v416, %v423
      %v426 = vunpack.c.l.s4 1934713408
      %v427 = vunpack.c.0.s8 %v426
      %v428 = vlaneseq
      %v429 = vshrl.u32 %v428, 7
      %v430 = vsub.s32 %v427, %v429
      %v431 = vrot.slane %v417, %v430
      %v432 = vcombine.high %v424, 0
      %v433 = vcombine.high %v431, 0
      %v434 = vcombine.low %v390, %v397
      %v436 = vunpack.c.l.s4 1983009808
      %v437 = vunpack.c.0.s8 %v436
      %v438 = vlaneseq
      %v439 = vshrl.u32 %v438, 7
      %v440 = vsub.s32 %v437, %v439
      %v441 = vrot.slane %v434, %v440
      %v442 = vcombine.low %v398, %v399
      %v444 = vunpack.c.l.s4 1983009808
      %v445 = vunpack.c.0.s8 %v444
      %v446 = vlaneseq
      %v447 = vshrl.u32 %v446, 7
      %v448 = vsub.s32 %v445, %v447
      %v449 = vrot.slane %v442, %v448
      %v450 = vcombine.low %v441, %v449
      %v452 = vunpack.c.l.s4 1934713408
      %v453 = vunpack.c.0.s8 %v452
      %v454 = vlaneseq
      %v455 = vshrl.u32 %v454, 7
      %v456 = vsub.s32 %v453, %v455
      %v457 = vrot.slane %v450, %v456
      %v458 = vcombine.high %v457, 0
      %v459 = vcombine.low %v424, %v431
      %v461 = vunpack.c.l.s4 1983009808
      %v462 = vunpack.c.0.s8 %v461
      %v463 = vlaneseq
      %v464 = vshrl.u32 %v463, 7
      %v465 = vsub.s32 %v462, %v464
      %v466 = vrot.slane %v459, %v465
      %v467 = vcombine.low %v432, %v433
      %v469 = vunpack.c.l.s4 1983009808
      %v470 = vunpack.c.0.s8 %v469
      %v471 = vlaneseq
      %v472 = vshrl.u32 %v471, 7
      %v473 = vsub.s32 %v470, %v472
      %v474 = vrot.slane %v467, %v473
      %v475 = vcombine.low %v466, %v474
      %v477 = vunpack.c.l.s4 1934713408
      %v478 = vunpack.c.0.s8 %v477
      %v479 = vlaneseq
      %v480 = vshrl.u32 %v479, 7
      %v481 = vsub.s32 %v478, %v480
      %v482 = vrot.slane %v475, %v481
      %v483 = vcombine.high %v482, 0
      %v486 = vpack.i.b16 %v482, %v457
      %v487 = vshrl.u32 %v457, 16
      %v488 = vshrl.u32 %v482, 16
      %v489 = vpack.i.b16 %v488, %v487
      %v492 = vpack.i.b16 %v483, %v458
      %v493 = vshrl.u32 %v458, 16
      %v494 = vshrl.u32 %v483, 16
      %v495 = vpack.i.b16 %v494, %v493
      %496 = vrot.lane.b32.xlu0 %v189, 64
      %v497 = vpop.permute.xlu0 %496
      %498 = vrot.lane.b32.xlu0 %v341, 64
      %v499 = vpop.permute.xlu0 %498
      %500 = vrot.lane.b32.xlu0 %v343, 64
      %v501 = vpop.permute.xlu0 %500
      %502 = vrot.lane.b32.xlu0 %v345, 64
      %v503 = vpop.permute.xlu0 %502
      %v506 = vpack.i.b16 %v499, %v497
      %v507 = vshrl.u32 %v497, 16
      %v508 = vshrl.u32 %v499, 16
      %v509 = vpack.i.b16 %v508, %v507
      %v512 = vpack.i.b16 %v503, %v501
      %v513 = vshrl.u32 %v501, 16
      %v514 = vshrl.u32 %v503, 16
      %v515 = vpack.i.b16 %v514, %v513
      %v518 = vunpack.c.l.s4 1983009808
      %v519 = vunpack.c.0.s8 %v518
      %v520 = vlaneseq
      %v521 = vshrl.u32 %v520, 7
      %v522 = vsub.s32 %v519, %v521
      %v523 = vrot.slane %v506, %v522
      %v526 = vunpack.c.l.s4 1983009808
      %v527 = vunpack.c.0.s8 %v526
      %v528 = vlaneseq
      %v529 = vshrl.u32 %v528, 7
      %v530 = vsub.s32 %v527, %v529
      %v531 = vrot.slane %v512, %v530
      %v532 = vcombine.low %v523, %v531
      %v533 = vcombine.high %v523, %v531
      %v535 = vunpack.c.l.s4 1934713408
      %v536 = vunpack.c.0.s8 %v535
      %v537 = vlaneseq
      %v538 = vshrl.u32 %v537, 7
      %v539 = vsub.s32 %v536, %v538
      %v540 = vrot.slane %v532, %v539
      %v542 = vunpack.c.l.s4 1934713408
      %v543 = vunpack.c.0.s8 %v542
      %v544 = vlaneseq
      %v545 = vshrl.u32 %v544, 7
      %v546 = vsub.s32 %v543, %v545
      %v547 = vrot.slane %v533, %v546
      %v548 = vcombine.high %v540, 0
      %v549 = vcombine.high %v547, 0
      %v552 = vunpack.c.l.s4 1983009808
      %v553 = vunpack.c.0.s8 %v552
      %v554 = vlaneseq
      %v555 = vshrl.u32 %v554, 7
      %v556 = vsub.s32 %v553, %v555
      %v557 = vrot.slane %v509, %v556
      %v560 = vunpack.c.l.s4 1983009808
      %v561 = vunpack.c.0.s8 %v560
      %v562 = vlaneseq
      %v563 = vshrl.u32 %v562, 7
      %v564 = vsub.s32 %v561, %v563
      %v565 = vrot.slane %v515, %v564
      %v566 = vcombine.low %v557, %v565
      %v567 = vcombine.high %v557, %v565
      %v569 = vunpack.c.l.s4 1934713408
      %v570 = vunpack.c.0.s8 %v569
      %v571 = vlaneseq
      %v572 = vshrl.u32 %v571, 7
      %v573 = vsub.s32 %v570, %v572
      %v574 = vrot.slane %v566, %v573
      %v576 = vunpack.c.l.s4 1934713408
      %v577 = vunpack.c.0.s8 %v576
      %v578 = vlaneseq
      %v579 = vshrl.u32 %v578, 7
      %v580 = vsub.s32 %v577, %v579
      %v581 = vrot.slane %v567, %v580
      %v582 = vcombine.high %v574, 0
      %v583 = vcombine.high %v581, 0
      %v584 = vcombine.low %v540, %v547
      %v586 = vunpack.c.l.s4 1983009808
      %v587 = vunpack.c.0.s8 %v586
      %v588 = vlaneseq
      %v589 = vshrl.u32 %v588, 7
      %v590 = vsub.s32 %v587, %v589
      %v591 = vrot.slane %v584, %v590
      %v592 = vcombine.low %v548, %v549
      %v594 = vunpack.c.l.s4 1983009808
      %v595 = vunpack.c.0.s8 %v594
      %v596 = vlaneseq
      %v597 = vshrl.u32 %v596, 7
      %v598 = vsub.s32 %v595, %v597
      %v599 = vrot.slane %v592, %v598
      %v600 = vcombine.low %v591, %v599
      %v602 = vunpack.c.l.s4 1934713408
      %v603 = vunpack.c.0.s8 %v602
      %v604 = vlaneseq
      %v605 = vshrl.u32 %v604, 7
      %v606 = vsub.s32 %v603, %v605
      %v607 = vrot.slane %v600, %v606
      %v608 = vcombine.high %v607, 0
      %v609 = vcombine.low %v574, %v581
      %v611 = vunpack.c.l.s4 1983009808
      %v612 = vunpack.c.0.s8 %v611
      %v613 = vlaneseq
      %v614 = vshrl.u32 %v613, 7
      %v615 = vsub.s32 %v612, %v614
      %v616 = vrot.slane %v609, %v615
      %v617 = vcombine.low %v582, %v583
      %v619 = vunpack.c.l.s4 1983009808
      %v620 = vunpack.c.0.s8 %v619
      %v621 = vlaneseq
      %v622 = vshrl.u32 %v621, 7
      %v623 = vsub.s32 %v620, %v622
      %v624 = vrot.slane %v617, %v623
      %v625 = vcombine.low %v616, %v624
      %v627 = vunpack.c.l.s4 1934713408
      %v628 = vunpack.c.0.s8 %v627
      %v629 = vlaneseq
      %v630 = vshrl.u32 %v629, 7
      %v631 = vsub.s32 %v628, %v630
      %v632 = vrot.slane %v625, %v631
      %v633 = vcombine.high %v632, 0
      %v636 = vpack.i.b16 %v632, %v607
      %v637 = vshrl.u32 %v607, 16
      %v638 = vshrl.u32 %v632, 16
      %v639 = vpack.i.b16 %v638, %v637
      %v642 = vpack.i.b16 %v633, %v608
      %v643 = vshrl.u32 %v608, 16
      %v644 = vshrl.u32 %v633, 16
      %v645 = vpack.i.b16 %v644, %v643
      %vm646 = vcmask 64512
      %v648 = vsel %vm646, %v329, 0
      %v651 = vsel %vm646, %v486, 0
      %653 = vmatprep.subr.bf16.mxu0 0
      %654 = vmatpush1.bf16.xpose.msra.mxu0 0
      %655 = vmatprep.subr.bf16.mxu0 0
      %656 = vmatpush1.bf16.xpose.msra.mxu0 0
      %657 = vmatprep.subr.bf16.mxu0 0
      %658 = vmatpush1.bf16.xpose.msra.mxu0 0
      %659 = vmatprep.subr.bf16.mxu0 0
      %660 = vmatpush1.bf16.xpose.msra.mxu0 0
      %661 = vmatprep.subr.bf16.mxu0 0
      %662 = vmatpush1.bf16.xpose.msra.mxu0 0
      %663 = vmatprep.subr.bf16.mxu0 0
      %664 = vmatpush1.bf16.xpose.msra.mxu0 0
      %665 = vmatprep.subr.bf16.mxu0 0
      %666 = vmatpush1.bf16.xpose.msra.mxu0 0
      %667 = vmatprep.subr.bf16.mxu0 0
      %668 = vmatpush1.bf16.xpose.msra.mxu0 %v651
      %669 = vmatprep.subr.bf16.mxu0 0
      %670 = vmatpush2.bf16.xpose.msra.mxu0 0
      %671 = vmatprep.subr.bf16.mxu0 0
      %672 = vmatpush2.bf16.xpose.msra.mxu0 0
      %673 = vmatprep.subr.bf16.mxu0 0
      %674 = vmatpush2.bf16.xpose.msra.mxu0 0
      %675 = vmatprep.subr.bf16.mxu0 0
      %676 = vmatpush2.bf16.xpose.msra.mxu0 0
      %677 = vmatprep.subr.bf16.mxu0 0
      %678 = vmatpush2.bf16.xpose.msra.mxu0 0
      %679 = vmatprep.subr.bf16.mxu0 0
      %680 = vmatpush2.bf16.xpose.msra.mxu0 0
      %681 = vmatprep.subr.bf16.mxu0 0
      %682 = vmatpush2.bf16.xpose.msra.mxu0 0
      %683 = vmatprep.subr.bf16.mxu0 0
      %684 = vmatpush2.bf16.xpose.msra.mxu0 0
      %685 = vmatprep.mubr.bf16.mxu0 0
      %686 = vmatmul.mubr.bf16.gmra.mxu0 %v648
      %v687 = vpop.f32.mrf.mxu0
      %v688 = vadd.f32 0.0, %v687
      %v689 = vpop.f32.mrf.mxu0
      %v690 = vpop.f32.mrf.mxu0
      %v691 = vpop.f32.mrf.mxu0
      %692 = vdwg.mxu0
      %v694 = vsel %vm646, %v332, 0
      %v697 = vsel %vm646, %v489, 0
      %699 = vmatprep.subr.bf16.mxu0 0
      %700 = vmatpush1.bf16.xpose.msra.mxu0 0
      %701 = vmatprep.subr.bf16.mxu0 0
      %702 = vmatpush1.bf16.xpose.msra.mxu0 0
      %703 = vmatprep.subr.bf16.mxu0 0
      %704 = vmatpush1.bf16.xpose.msra.mxu0 0
      %705 = vmatprep.subr.bf16.mxu0 0
      %706 = vmatpush1.bf16.xpose.msra.mxu0 0
      %707 = vmatprep.subr.bf16.mxu0 0
      %708 = vmatpush1.bf16.xpose.msra.mxu0 0
      %709 = vmatprep.subr.bf16.mxu0 0
      %710 = vmatpush1.bf16.xpose.msra.mxu0 0
      %711 = vmatprep.subr.bf16.mxu0 0
      %712 = vmatpush1.bf16.xpose.msra.mxu0 0
      %713 = vmatprep.subr.bf16.mxu0 0
      %714 = vmatpush1.bf16.xpose.msra.mxu0 %v697
      %715 = vmatprep.subr.bf16.mxu0 0
      %716 = vmatpush2.bf16.xpose.msra.mxu0 0
      %717 = vmatprep.subr.bf16.mxu0 0
      %718 = vmatpush2.bf16.xpose.msra.mxu0 0
      %719 = vmatprep.subr.bf16.mxu0 0
      %720 = vmatpush2.bf16.xpose.msra.mxu0 0
      %721 = vmatprep.subr.bf16.mxu0 0
      %722 = vmatpush2.bf16.xpose.msra.mxu0 0
      %723 = vmatprep.subr.bf16.mxu0 0
      %724 = vmatpush2.bf16.xpose.msra.mxu0 0
      %725 = vmatprep.subr.bf16.mxu0 0
      %726 = vmatpush2.bf16.xpose.msra.mxu0 0
      %727 = vmatprep.subr.bf16.mxu0 0
      %728 = vmatpush2.bf16.xpose.msra.mxu0 0
      %729 = vmatprep.subr.bf16.mxu0 0
      %730 = vmatpush2.bf16.xpose.msra.mxu0 0
      %731 = vmatprep.mubr.bf16.mxu0 0
      %732 = vmatmul.mubr.bf16.gmra.mxu0 %v694
      %v733 = vpop.f32.mrf.mxu0
      %v734 = vadd.f32 0.0, %v733
      %v735 = vpop.f32.mrf.mxu0
      %v736 = vpop.f32.mrf.mxu0
      %v737 = vpop.f32.mrf.mxu0
      %738 = vdwg.mxu0
      %v740 = vsel %vm646, %v335, 0
      %v743 = vsel %vm646, %v492, 0
      %745 = vmatprep.subr.bf16.mxu0 0
      %746 = vmatpush1.bf16.xpose.msra.mxu0 0
      %747 = vmatprep.subr.bf16.mxu0 0
      %748 = vmatpush1.bf16.xpose.msra.mxu0 0
      %749 = vmatprep.subr.bf16.mxu0 0
      %750 = vmatpush1.bf16.xpose.msra.mxu0 0
      %751 = vmatprep.subr.bf16.mxu0 0
      %752 = vmatpush1.bf16.xpose.msra.mxu0 0
      %753 = vmatprep.subr.bf16.mxu0 0
      %754 = vmatpush1.bf16.xpose.msra.mxu0 0
      %755 = vmatprep.subr.bf16.mxu0 0
      %756 = vmatpush1.bf16.xpose.msra.mxu0 0
      %757 = vmatprep.subr.bf16.mxu0 0
      %758 = vmatpush1.bf16.xpose.msra.mxu0 0
      %759 = vmatprep.subr.bf16.mxu0 0
      %760 = vmatpush1.bf16.xpose.msra.mxu0 %v743
      %761 = vmatprep.subr.bf16.mxu0 0
      %762 = vmatpush2.bf16.xpose.msra.mxu0 0
      %763 = vmatprep.subr.bf16.mxu0 0
      %764 = vmatpush2.bf16.xpose.msra.mxu0 0
      %765 = vmatprep.subr.bf16.mxu0 0
      %766 = vmatpush2.bf16.xpose.msra.mxu0 0
      %767 = vmatprep.subr.bf16.mxu0 0
      %768 = vmatpush2.bf16.xpose.msra.mxu0 0
      %769 = vmatprep.subr.bf16.mxu0 0
      %770 = vmatpush2.bf16.xpose.msra.mxu0 0
      %771 = vmatprep.subr.bf16.mxu0 0
      %772 = vmatpush2.bf16.xpose.msra.mxu0 0
      %773 = vmatprep.subr.bf16.mxu0 0
      %774 = vmatpush2.bf16.xpose.msra.mxu0 0
      %775 = vmatprep.subr.bf16.mxu0 0
      %776 = vmatpush2.bf16.xpose.msra.mxu0 0
      %777 = vmatprep.mubr.bf16.mxu0 0
      %778 = vmatmul.mubr.bf16.gmra.mxu0 %v740
      %v779 = vpop.f32.mrf.mxu0
      %v780 = vadd.f32 0.0, %v779
      %v781 = vpop.f32.mrf.mxu0
      %v782 = vpop.f32.mrf.mxu0
      %v783 = vpop.f32.mrf.mxu0
      %784 = vdwg.mxu0
      %v786 = vsel %vm646, %v338, 0
      %v789 = vsel %vm646, %v495, 0
      %791 = vmatprep.subr.bf16.mxu0 0
      %792 = vmatpush1.bf16.xpose.msra.mxu0 0
      %793 = vmatprep.subr.bf16.mxu0 0
      %794 = vmatpush1.bf16.xpose.msra.mxu0 0
      %795 = vmatprep.subr.bf16.mxu0 0
      %796 = vmatpush1.bf16.xpose.msra.mxu0 0
      %797 = vmatprep.subr.bf16.mxu0 0
      %798 = vmatpush1.bf16.xpose.msra.mxu0 0
      %799 = vmatprep.subr.bf16.mxu0 0
      %800 = vmatpush1.bf16.xpose.msra.mxu0 0
      %801 = vmatprep.subr.bf16.mxu0 0
      %802 = vmatpush1.bf16.xpose.msra.mxu0 0
      %803 = vmatprep.subr.bf16.mxu0 0
      %804 = vmatpush1.bf16.xpose.msra.mxu0 0
      %805 = vmatprep.subr.bf16.mxu0 0
      %806 = vmatpush1.bf16.xpose.msra.mxu0 %v789
      %807 = vmatprep.subr.bf16.mxu0 0
      %808 = vmatpush2.bf16.xpose.msra.mxu0 0
      %809 = vmatprep.subr.bf16.mxu0 0
      %810 = vmatpush2.bf16.xpose.msra.mxu0 0
      %811 = vmatprep.subr.bf16.mxu0 0
      %812 = vmatpush2.bf16.xpose.msra.mxu0 0
      %813 = vmatprep.subr.bf16.mxu0 0
      %814 = vmatpush2.bf16.xpose.msra.mxu0 0
      %815 = vmatprep.subr.bf16.mxu0 0
      %816 = vmatpush2.bf16.xpose.msra.mxu0 0
      %817 = vmatprep.subr.bf16.mxu0 0
      %818 = vmatpush2.bf16.xpose.msra.mxu0 0
      %819 = vmatprep.subr.bf16.mxu0 0
      %820 = vmatpush2.bf16.xpose.msra.mxu0 0
      %821 = vmatprep.subr.bf16.mxu0 0
      %822 = vmatpush2.bf16.xpose.msra.mxu0 0
      %823 = vmatprep.mubr.bf16.mxu0 0
      %824 = vmatmul.mubr.bf16.gmra.mxu0 %v786
      %v825 = vpop.f32.mrf.mxu0
      %v826 = vadd.f32 0.0, %v825
      %v827 = vpop.f32.mrf.mxu0
      %v828 = vpop.f32.mrf.mxu0
      %v829 = vpop.f32.mrf.mxu0
      %830 = vdwg.mxu0
      %v831 = vmul.f32 %v688, 0.35355338
      %v832 = vmul.f32 %v734, 0.35355338
      %v833 = vmul.f32 %v780, 0.35355338
      %v834 = vmul.f32 %v826, 0.35355338
      %v835 = vsel %vm646, %v831, -inf
      %836 = vmax.xlane.f32.xlu0 %v835
      %v837 = vpop.xlane.xlu0 %836
      %v838 = vsel %vm646, %v832, -inf
      %839 = vmax.xlane.f32.xlu0 %v838
      %v840 = vpop.xlane.xlu0 %839
      %v841 = vsel %vm646, %v833, -inf
      %842 = vmax.xlane.f32.xlu0 %v841
      %v843 = vpop.xlane.xlu0 %842
      %v844 = vsel %vm646, %v834, -inf
      %845 = vmax.xlane.f32.xlu0 %v844
      %v846 = vpop.xlane.xlu0 %845
      %v847 = vsub.f32 %v831, %v837
      %v848 = vsub.f32 %v832, %v840
      %v849 = vsub.f32 %v833, %v843
      %v850 = vsub.f32 %v834, %v846
      %v851 = vmul.f32 %v847, 1.442695
      %v852 = vpow.pop %v851
      %v853 = vmul.f32 %v848, 1.442695
      %v854 = vpow.pop %v853
      %v855 = vmul.f32 %v849, 1.442695
      %v856 = vpow.pop %v855
      %v857 = vmul.f32 %v850, 1.442695
      %v858 = vpow.pop %v857
      %v859 = vsel %vm646, %v852, 0.0
      %860 = vadd.xlane.f32.xlu0 %v859
      %v861 = vpop.xlane.xlu0 %860
      %v862 = vsel %vm646, %v854, 0.0
      %863 = vadd.xlane.f32.xlu0 %v862
      %v864 = vpop.xlane.xlu0 %863
      %v865 = vsel %vm646, %v856, 0.0
      %866 = vadd.xlane.f32.xlu0 %v865
      %v867 = vpop.xlane.xlu0 %866
      %v868 = vsel %vm646, %v858, 0.0
      %869 = vadd.xlane.f32.xlu0 %v868
      %v870 = vpop.xlane.xlu0 %869
      %v871 = vrcp.pop %v861
      %v872 = vrcp.pop %v864
      %v873 = vrcp.pop %v867
      %v874 = vrcp.pop %v870
      %v875 = vmul.f32 %v852, %v871
      %v876 = vmul.f32 %v854, %v872
      %v877 = vmul.f32 %v856, %v873
      %v878 = vmul.f32 %v858, %v874
      %v879 = vpack.c.bf16 %v875, %v875
      %v880 = vpack.c.bf16 %v876, %v876
      %v881 = vpack.c.bf16 %v877, %v877
      %v882 = vpack.c.bf16 %v878, %v878
      %v884 = vsel %vm646, %v879, 0
      %vm886 = vcmask 1043456
      %v888 = vsel %vm886, %v636, 0
      %890 = vmatprep.subr.bf16.mxu0 0
      %891 = vmatpush1.bf16.msra.mxu0 0
      %892 = vmatprep.subr.bf16.mxu0 0
      %893 = vmatpush1.bf16.msra.mxu0 0
      %894 = vmatprep.subr.bf16.mxu0 0
      %895 = vmatpush1.bf16.msra.mxu0 0
      %896 = vmatprep.subr.bf16.mxu0 0
      %897 = vmatpush1.bf16.msra.mxu0 0
      %898 = vmatprep.subr.bf16.mxu0 0
      %899 = vmatpush1.bf16.msra.mxu0 0
      %900 = vmatprep.subr.bf16.mxu0 0
      %901 = vmatpush1.bf16.msra.mxu0 0
      %902 = vmatprep.subr.bf16.mxu0 0
      %903 = vmatpush1.bf16.msra.mxu0 0
      %904 = vmatprep.subr.bf16.mxu0 0
      %905 = vmatpush1.bf16.msra.mxu0 %v888
      %906 = vmatprep.subr.bf16.mxu0 0
      %907 = vmatpush2.bf16.msra.mxu0 0
      %908 = vmatprep.subr.bf16.mxu0 0
      %909 = vmatpush2.bf16.msra.mxu0 0
      %910 = vmatprep.subr.bf16.mxu0 0
      %911 = vmatpush2.bf16.msra.mxu0 0
      %912 = vmatprep.subr.bf16.mxu0 0
      %913 = vmatpush2.bf16.msra.mxu0 0
      %914 = vmatprep.subr.bf16.mxu0 0
      %915 = vmatpush2.bf16.msra.mxu0 0
      %916 = vmatprep.subr.bf16.mxu0 0
      %917 = vmatpush2.bf16.msra.mxu0 0
      %918 = vmatprep.subr.bf16.mxu0 0
      %919 = vmatpush2.bf16.msra.mxu0 0
      %920 = vmatprep.subr.bf16.mxu0 0
      %921 = vmatpush2.bf16.msra.mxu0 0
      %922 = vmatprep.mubr.bf16.mxu0 0
      %923 = vmatmul.mubr.bf16.gmra.mxu0 %v884
      %v924 = vpop.f32.mrf.mxu0
      %v925 = vadd.f32 0.0, %v924
      %v926 = vpop.f32.mrf.mxu0
      %v927 = vpop.f32.mrf.mxu0
      %v928 = vpop.f32.mrf.mxu0
      %929 = vdwg.mxu0
      %v931 = vsel %vm646, %v880, 0
      %v934 = vsel %vm886, %v639, 0
      %936 = vmatprep.subr.bf16.mxu0 0
      %937 = vmatpush1.bf16.msra.mxu0 0
      %938 = vmatprep.subr.bf16.mxu0 0
      %939 = vmatpush1.bf16.msra.mxu0 0
      %940 = vmatprep.subr.bf16.mxu0 0
      %941 = vmatpush1.bf16.msra.mxu0 0
      %942 = vmatprep.subr.bf16.mxu0 0
      %943 = vmatpush1.bf16.msra.mxu0 0
      %944 = vmatprep.subr.bf16.mxu0 0
      %945 = vmatpush1.bf16.msra.mxu0 0
      %946 = vmatprep.subr.bf16.mxu0 0
      %947 = vmatpush1.bf16.msra.mxu0 0
      %948 = vmatprep.subr.bf16.mxu0 0
      %949 = vmatpush1.bf16.msra.mxu0 0
      %950 = vmatprep.subr.bf16.mxu0 0
      %951 = vmatpush1.bf16.msra.mxu0 %v934
      %952 = vmatprep.subr.bf16.mxu0 0
      %953 = vmatpush2.bf16.msra.mxu0 0
      %954 = vmatprep.subr.bf16.mxu0 0
      %955 = vmatpush2.bf16.msra.mxu0 0
      %956 = vmatprep.subr.bf16.mxu0 0
      %957 = vmatpush2.bf16.msra.mxu0 0
      %958 = vmatprep.subr.bf16.mxu0 0
      %959 = vmatpush2.bf16.msra.mxu0 0
      %960 = vmatprep.subr.bf16.mxu0 0
      %961 = vmatpush2.bf16.msra.mxu0 0
      %962 = vmatprep.subr.bf16.mxu0 0
      %963 = vmatpush2.bf16.msra.mxu0 0
      %964 = vmatprep.subr.bf16.mxu0 0
      %965 = vmatpush2.bf16.msra.mxu0 0
      %966 = vmatprep.subr.bf16.mxu0 0
      %967 = vmatpush2.bf16.msra.mxu0 0
      %968 = vmatprep.mubr.bf16.mxu0 0
      %969 = vmatmul.mubr.bf16.gmra.mxu0 %v931
      %v970 = vpop.f32.mrf.mxu0
      %v971 = vadd.f32 0.0, %v970
      %v972 = vpop.f32.mrf.mxu0
      %v973 = vpop.f32.mrf.mxu0
      %v974 = vpop.f32.mrf.mxu0
      %975 = vdwg.mxu0
      %v977 = vsel %vm646, %v881, 0
      %v980 = vsel %vm886, %v642, 0
      %982 = vmatprep.subr.bf16.mxu0 0
      %983 = vmatpush1.bf16.msra.mxu0 0
      %984 = vmatprep.subr.bf16.mxu0 0
      %985 = vmatpush1.bf16.msra.mxu0 0
      %986 = vmatprep.subr.bf16.mxu0 0
      %987 = vmatpush1.bf16.msra.mxu0 0
      %988 = vmatprep.subr.bf16.mxu0 0
      %989 = vmatpush1.bf16.msra.mxu0 0
      %990 = vmatprep.subr.bf16.mxu0 0
      %991 = vmatpush1.bf16.msra.mxu0 0
      %992 = vmatprep.subr.bf16.mxu0 0
      %993 = vmatpush1.bf16.msra.mxu0 0
      %994 = vmatprep.subr.bf16.mxu0 0
      %995 = vmatpush1.bf16.msra.mxu0 0
      %996 = vmatprep.subr.bf16.mxu0 0
      %997 = vmatpush1.bf16.msra.mxu0 %v980
      %998 = vmatprep.subr.bf16.mxu0 0
      %999 = vmatpush2.bf16.msra.mxu0 0
      %1000 = vmatprep.subr.bf16.mxu0 0
      %1001 = vmatpush2.bf16.msra.mxu0 0
      %1002 = vmatprep.subr.bf16.mxu0 0
      %1003 = vmatpush2.bf16.msra.mxu0 0
      %1004 = vmatprep.subr.bf16.mxu0 0
      %1005 = vmatpush2.bf16.msra.mxu0 0
      %1006 = vmatprep.subr.bf16.mxu0 0
      %1007 = vmatpush2.bf16.msra.mxu0 0
      %1008 = vmatprep.subr.bf16.mxu0 0
      %1009 = vmatpush2.bf16.msra.mxu0 0
      %1010 = vmatprep.subr.bf16.mxu0 0
      %1011 = vmatpush2.bf16.msra.mxu0 0
      %1012 = vmatprep.subr.bf16.mxu0 0
      %1013 = vmatpush2.bf16.msra.mxu0 0
      %1014 = vmatprep.mubr.bf16.mxu0 0
      %1015 = vmatmul.mubr.bf16.gmra.mxu0 %v977
      %v1016 = vpop.f32.mrf.mxu0
      %v1017 = vadd.f32 0.0, %v1016
      %v1018 = vpop.f32.mrf.mxu0
      %v1019 = vpop.f32.mrf.mxu0
      %v1020 = vpop.f32.mrf.mxu0
      %1021 = vdwg.mxu0
      %v1023 = vsel %vm646, %v882, 0
      %v1026 = vsel %vm886, %v645, 0
      %1028 = vmatprep.subr.bf16.mxu0 0
      %1029 = vmatpush1.bf16.msra.mxu0 0
      %1030 = vmatprep.subr.bf16.mxu0 0
      %1031 = vmatpush1.bf16.msra.mxu0 0
      %1032 = vmatprep.subr.bf16.mxu0 0
      %1033 = vmatpush1.bf16.msra.mxu0 0
      %1034 = vmatprep.subr.bf16.mxu0 0
      %1035 = vmatpush1.bf16.msra.mxu0 0
      %1036 = vmatprep.subr.bf16.mxu0 0
      %1037 = vmatpush1.bf16.msra.mxu0 0
      %1038 = vmatprep.subr.bf16.mxu0 0
      %1039 = vmatpush1.bf16.msra.mxu0 0
      %1040 = vmatprep.subr.bf16.mxu0 0
      %1041 = vmatpush1.bf16.msra.mxu0 0
      %1042 = vmatprep.subr.bf16.mxu0 0
      %1043 = vmatpush1.bf16.msra.mxu0 %v1026
      %1044 = vmatprep.subr.bf16.mxu0 0
      %1045 = vmatpush2.bf16.msra.mxu0 0
      %1046 = vmatprep.subr.bf16.mxu0 0
      %1047 = vmatpush2.bf16.msra.mxu0 0
      %1048 = vmatprep.subr.bf16.mxu0 0
      %1049 = vmatpush2.bf16.msra.mxu0 0
      %1050 = vmatprep.subr.bf16.mxu0 0
      %1051 = vmatpush2.bf16.msra.mxu0 0
      %1052 = vmatprep.subr.bf16.mxu0 0
      %1053 = vmatpush2.bf16.msra.mxu0 0
      %1054 = vmatprep.subr.bf16.mxu0 0
      %1055 = vmatpush2.bf16.msra.mxu0 0
      %1056 = vmatprep.subr.bf16.mxu0 0
      %1057 = vmatpush2.bf16.msra.mxu0 0
      %1058 = vmatprep.subr.bf16.mxu0 0
      %1059 = vmatpush2.bf16.msra.mxu0 0
      %1060 = vmatprep.mubr.bf16.mxu0 0
      %1061 = vmatmul.mubr.bf16.gmra.mxu0 %v1023
      %v1062 = vpop.f32.mrf.mxu0
      %v1063 = vadd.f32 0.0, %v1062
      %v1064 = vpop.f32.mrf.mxu0
      %v1065 = vpop.f32.mrf.mxu0
      %v1066 = vpop.f32.mrf.mxu0
      %1067 = vdwg.mxu0
      %v1068 = vcombine.low %v925, %v1017
      %v1069 = vcombine.high %v925, %v1017
      %v1071 = vunpack.c.l.s4 1983009808
      %v1072 = vunpack.c.0.s8 %v1071
      %v1073 = vlaneseq
      %v1074 = vshrl.u32 %v1073, 7
      %v1075 = vsub.s32 %v1072, %v1074
      %v1076 = vrot.slane %v1068, %v1075
      %v1078 = vunpack.c.l.s4 1983009808
      %v1079 = vunpack.c.0.s8 %v1078
      %v1080 = vlaneseq
      %v1081 = vshrl.u32 %v1080, 7
      %v1082 = vsub.s32 %v1079, %v1081
      %v1083 = vrot.slane %v1069, %v1082
      %v1084 = vcombine.low %v971, %v1063
      %v1085 = vcombine.high %v971, %v1063
      %v1087 = vunpack.c.l.s4 1983009808
      %v1088 = vunpack.c.0.s8 %v1087
      %v1089 = vlaneseq
      %v1090 = vshrl.u32 %v1089, 7
      %v1091 = vsub.s32 %v1088, %v1090
      %v1092 = vrot.slane %v1084, %v1091
      %v1094 = vunpack.c.l.s4 1983009808
      %v1095 = vunpack.c.0.s8 %v1094
      %v1096 = vlaneseq
      %v1097 = vshrl.u32 %v1096, 7
      %v1098 = vsub.s32 %v1095, %v1097
      %v1099 = vrot.slane %v1085, %v1098
      %v1100 = vcombine.low %v1076, %v1092
      %v1101 = vcombine.high %v1076, %v1092
      %v1103 = vunpack.c.l.s4 1934713408
      %v1104 = vunpack.c.0.s8 %v1103
      %v1105 = vlaneseq
      %v1106 = vshrl.u32 %v1105, 7
      %v1107 = vsub.s32 %v1104, %v1106
      %v1108 = vrot.slane %v1100, %v1107
      %v1110 = vunpack.c.l.s4 1934713408
      %v1111 = vunpack.c.0.s8 %v1110
      %v1112 = vlaneseq
      %v1113 = vshrl.u32 %v1112, 7
      %v1114 = vsub.s32 %v1111, %v1113
      %v1115 = vrot.slane %v1101, %v1114
      %v1116 = vcombine.low %v1083, %v1099
      %v1117 = vcombine.high %v1083, %v1099
      %v1119 = vunpack.c.l.s4 1934713408
      %v1120 = vunpack.c.0.s8 %v1119
      %v1121 = vlaneseq
      %v1122 = vshrl.u32 %v1121, 7
      %v1123 = vsub.s32 %v1120, %v1122
      %v1124 = vrot.slane %v1116, %v1123
      %v1126 = vunpack.c.l.s4 1934713408
      %v1127 = vunpack.c.0.s8 %v1126
      %v1128 = vlaneseq
      %v1129 = vshrl.u32 %v1128, 7
      %v1130 = vsub.s32 %v1127, %v1129
      %v1131 = vrot.slane %v1117, %v1130
      %v1132 = vcombine.high %v1108, 0.0
      %v1133 = vcombine.high %v1115, 0.0
      %v1134 = vcombine.high %v1124, 0.0
      %v1135 = vcombine.high %v1131, 0.0
      %v1136 = vcombine.low %v1108, %v1115
      %v1138 = vunpack.c.l.s4 1983009808
      %v1139 = vunpack.c.0.s8 %v1138
      %v1140 = vlaneseq
      %v1141 = vshrl.u32 %v1140, 7
      %v1142 = vsub.s32 %v1139, %v1141
      %v1143 = vrot.slane %v1136, %v1142
      %v1144 = vcombine.low %v1132, %v1133
      %v1146 = vunpack.c.l.s4 1983009808
      %v1147 = vunpack.c.0.s8 %v1146
      %v1148 = vlaneseq
      %v1149 = vshrl.u32 %v1148, 7
      %v1150 = vsub.s32 %v1147, %v1149
      %v1151 = vrot.slane %v1144, %v1150
      %v1152 = vcombine.low %v1124, %v1131
      %v1154 = vunpack.c.l.s4 1983009808
      %v1155 = vunpack.c.0.s8 %v1154
      %v1156 = vlaneseq
      %v1157 = vshrl.u32 %v1156, 7
      %v1158 = vsub.s32 %v1155, %v1157
      %v1159 = vrot.slane %v1152, %v1158
      %v1160 = vcombine.low %v1134, %v1135
      %v1162 = vunpack.c.l.s4 1983009808
      %v1163 = vunpack.c.0.s8 %v1162
      %v1164 = vlaneseq
      %v1165 = vshrl.u32 %v1164, 7
      %v1166 = vsub.s32 %v1163, %v1165
      %v1167 = vrot.slane %v1160, %v1166
      %v1168 = vcombine.low %v1143, %v1151
      %v1169 = vcombine.high %v1143, %v1151
      %v1171 = vunpack.c.l.s4 1934713408
      %v1172 = vunpack.c.0.s8 %v1171
      %v1173 = vlaneseq
      %v1174 = vshrl.u32 %v1173, 7
      %v1175 = vsub.s32 %v1172, %v1174
      %v1176 = vrot.slane %v1168, %v1175
      %v1178 = vunpack.c.l.s4 1934713408
      %v1179 = vunpack.c.0.s8 %v1178
      %v1180 = vlaneseq
      %v1181 = vshrl.u32 %v1180, 7
      %v1182 = vsub.s32 %v1179, %v1181
      %v1183 = vrot.slane %v1169, %v1182
      %v1184 = vcombine.low %v1159, %v1167
      %v1185 = vcombine.high %v1159, %v1167
      %v1187 = vunpack.c.l.s4 1934713408
      %v1188 = vunpack.c.0.s8 %v1187
      %v1189 = vlaneseq
      %v1190 = vshrl.u32 %v1189, 7
      %v1191 = vsub.s32 %v1188, %v1190
      %v1192 = vrot.slane %v1184, %v1191
      %v1194 = vunpack.c.l.s4 1934713408
      %v1195 = vunpack.c.0.s8 %v1194
      %v1196 = vlaneseq
      %v1197 = vshrl.u32 %v1196, 7
      %v1198 = vsub.s32 %v1195, %v1197
      %v1199 = vrot.slane %v1185, %v1198
      %v1200 = vcombine.low %v1176, %v1192
      %v1201 = vcombine.high %v1176, %v1192
      %v1202 = vcombine.low %v1183, %v1199
      %v1203 = vcombine.high %v1183, %v1199
      %1205 = vrot.lane.b32.xlu0 %v1201, 8
      %v1206 = vpop.permute.xlu0 %1205
      %1209 = vrot.lane.b32.xlu0 %v1202, 16
      %v1210 = vpop.permute.xlu0 %1209
      %1213 = vrot.lane.b32.xlu0 %v1203, 24
      %v1214 = vpop.permute.xlu0 %1213
      %v1216 = vsel %vm646, %v1200, %v1206
      %vm1217 = vcmask 130048
      %v1218 = vsel %vm1217, %v1216, %v1210
      %vm1219 = vcmask 195584
      %v1220 = vsel %vm1219, %v1218, %v1214
      %v1221 = vpack.c.bf16 %v1220, %v1220
      %vm1222 = vcmask 257024
      %1223 = vst.msk [vmem:[%s186] sm:$0xf] %vm1222, %v1221
      %p1224 = scmp.lt.s32.totalorder %s17, 1
      %s1225 = scalar_select %p1224, %s17, 1
      %p1226 = scmp.lt.s32.totalorder %s18, 0
      %s1227 = scalar_select %p1226, %s18, 0
      %s1228 = sadd.s32 %s1227, %s1225
      %s1229 = smul.addr %s1228, 4
      %s1230 = scalar_lea.vmem %s2, %s1229
      // Predicated region
      $region29: #{transformer_forward.26} parent=27 // pred_check
        %p1231 = pneg %p99
      $region30: #{transformer_forward.26} parent=27 // pred_check_branch
        %1233 = sbr.rel (%p1231) target = $region32
      $region31: #{transformer_forward.26} parent=27 // pred_region
        _
      $region32: #{transformer_forward.26} parent=27 // pred_fallthru
        _
    $region28: #{transformer_forward.26} parent=5 // pred_fallthru
      _
    %p1234 = scmp.le.s32.totalorder 2, %s8
    // Predicated region
    $region33: #{transformer_forward.26} parent=5 // pred_check
      %p1235 = pneg %p1234
    $region34: #{transformer_forward.26} parent=5 // pred_check_branch
      %1237 = sbr.rel (%p1235) target = $region36
    $region35: #{transformer_forward.26} parent=5 // pred_region
      %s1238 = ssub.s32 %s8, 2
      // Predicated region
      $region37: #{transformer_forward.26} parent=35 // pred_check
        %p1239 = pneg %p105
      $region38: #{transformer_forward.26} parent=35 // pred_check_branch
        %1241 = sbr.rel (%p1239) target = $region40
      $region39: #{transformer_forward.26} parent=35 // pred_region
        %p1242 = scmp.lt.s32.totalorder %s19, 1
        %s1243 = scalar_select %p1242, %s19, 1
        %p1244 = scmp.lt.s32.totalorder %s20, 0
        %s1245 = scalar_select %p1244, %s20, 0
        %s1246 = sadd.s32 %s1245, %s1243
        %s1247 = smul.addr %s1246, 4
        %s1248 = scalar_lea.vmem %s2, %s1247
      $region40: #{transformer_forward.26} parent=35 // pred_fallthru
        _
    $region36: #{transformer_forward.26} parent=5 // pred_fallthru
      _
  $region6: #{transformer_forward.26} parent=0 // loop_footer
    %s12 = sadd.s32 1, %s8
  $region7: #{transformer_forward.26} parent=0 // loop_footer_branch
    %7 = sbr.rel target = $region3
  $region8: #{transformer_forward.26} parent=0 // loop_exit
    _

// kernel: transformer_forward.37
$region0: #{transformer_forward.37}
  #allocation0 [shape = 'u32[]', space=smem, size = 0x4, offset = 0x4, fixed_abs, tag = 'smem constant byte address 0x4 - core index']
  #allocation1 [shape = 'u32[144,128]{1,0:T(1,128)}', space=vmem, size = 0x12000, scoped, tag = 'internal scratch']
  #allocation2 [shape = 'f32[16,64]{1,0:T(8,128)}', space=vmem, size = 0x2000, scoped, tag = 'scratch operand']
  %s0 = inlined_call_operand.vmem [shape: f32[16,32], index: 0, kind: input, shape index: {}]
  %s1 = inlined_call_operand.vmem [shape: bf16[32,64], index: 1, kind: input, shape index: {}]
  %s2 = inlined_call_operand.vmem [shape: f32[1,64], index: 2, kind: input, shape index: {}]
  %s3 = inlined_call_operand.vmem [shape: bf16[16,64], index: 3, kind: output, shape index: {}]
  %s4 = sld [smem:[#allocation0]]
  $region30: #{transformer_forward.37} parent=0
    _
  %s6 = ssub.s32 1, %s4
  %s7 = scalar_select 0, %s6, %s4
  // Predicated region
  $region2: #{transformer_forward.37} parent=0 // pred_check
    _
  $region3: #{transformer_forward.37} parent=0 // pred_check_branch
    %9 = sbr.rel (0) target = $region5
  $region4: #{transformer_forward.37} parent=0 // pred_region
    _
  $region5: #{transformer_forward.37} parent=0 // pred_fallthru
    _
  // Predicated region
  $region6: #{transformer_forward.37} parent=0 // pred_check
    _
  $region7: #{transformer_forward.37} parent=0 // pred_check_branch
    %11 = sbr.rel (0) target = $region9
  $region8: #{transformer_forward.37} parent=0 // pred_region
    _
  $region9: #{transformer_forward.37} parent=0 // pred_fallthru
    _
  // Predicated region
  $region10: #{transformer_forward.37} parent=0 // pred_check
    _
  $region11: #{transformer_forward.37} parent=0 // pred_check_branch
    %13 = sbr.rel (0) target = $region13
  $region12: #{transformer_forward.37} parent=0 // pred_region
    _
  $region13: #{transformer_forward.37} parent=0 // pred_fallthru
    _
  %p15 = scmp.eq.s32.totalorder 0, 0
  // Predicated region
  $region14: #{transformer_forward.37} parent=0 // pred_check
    %p16 = pneg %p15
  $region15: #{transformer_forward.37} parent=0 // pred_check_branch
    %18 = sbr.rel (%p16) target = $region17
  $region16: #{transformer_forward.37} parent=0 // pred_region
    %vm19 = vcmask 523264
    %20 = vst.msk [vmem:[#allocation2] sm:$0xff] %vm19, 0.0
    %21 = vst.msk [vmem:[#allocation2 + $0x8] sm:$0xff] %vm19, 0.0
  $region17: #{transformer_forward.37} parent=0 // pred_fallthru
    _
  %v22 = vld [vmem:[#allocation2] sm:$0xff]
  %v23 = vld [vmem:[#allocation2 + $0x8] sm:$0xff]
  %v24 = vld [vmem:[%s0] sm:$0xff]
  %v25 = vld [vmem:[%s0 + $0x8] sm:$0xff]
  %v26 = vpack.c.bf16 %v25, %v24
  %v27 = vld [vmem:[%s1] sm:$0xf]
  %v28 = vld [vmem:[%s1 + $0x4] sm:$0xf]
  %v29 = vld [vmem:[%s1 + $0x8] sm:$0xf]
  %v30 = vld [vmem:[%s1 + $0xc] sm:$0xf]
  %v35 = vunpack.c.l.b16 %v27
  %v36 = vunpack.c.l.b16 %v28
  %v37 = vunpack.c.l.b16 %v29
  %v38 = vunpack.c.l.b16 %v30
  %v39 = vpack.c.b16 %v36, %v35
  %v40 = vpack.c.b16 %v38, %v37
  %vm43 = vcmask 261120
  %v45 = vsel %vm43, %v26, 0
  %47 = vmatprep.subr.bf16.mxu0 0
  %48 = vmatpush1.bf16.msra.mxu0 0
  %49 = vmatprep.subr.bf16.mxu0 0
  %50 = vmatpush1.bf16.msra.mxu0 0
  %51 = vmatprep.subr.bf16.mxu0 0
  %52 = vmatpush1.bf16.msra.mxu0 0
  %53 = vmatprep.subr.bf16.mxu0 0
  %54 = vmatpush1.bf16.msra.mxu0 0
  %55 = vmatprep.subr.bf16.mxu0 0
  %56 = vmatpush1.bf16.msra.mxu0 0
  %57 = vmatprep.subr.bf16.mxu0 0
  %58 = vmatpush1.bf16.msra.mxu0 0
  %59 = vmatprep.subr.bf16.mxu0 0
  %60 = vmatpush1.bf16.msra.mxu0 %v40
  %61 = vmatprep.subr.bf16.mxu0 0
  %62 = vmatpush1.bf16.msra.mxu0 %v39
  %63 = vmatprep.subr.bf16.mxu0 0
  %64 = vmatpush2.bf16.msra.mxu0 0
  %65 = vmatprep.subr.bf16.mxu0 0
  %66 = vmatpush2.bf16.msra.mxu0 0
  %67 = vmatprep.subr.bf16.mxu0 0
  %68 = vmatpush2.bf16.msra.mxu0 0
  %69 = vmatprep.subr.bf16.mxu0 0
  %70 = vmatpush2.bf16.msra.mxu0 0
  %71 = vmatprep.subr.bf16.mxu0 0
  %72 = vmatpush2.bf16.msra.mxu0 0
  %73 = vmatprep.subr.bf16.mxu0 0
  %74 = vmatpush2.bf16.msra.mxu0 0
  %75 = vmatprep.subr.bf16.mxu0 0
  %76 = vmatpush2.bf16.msra.mxu0 0
  %77 = vmatprep.subr.bf16.mxu0 0
  %78 = vmatpush2.bf16.msra.mxu0 0
  %79 = vmatprep.mubr.bf16.mxu0 0
  %80 = vmatmul.mubr.bf16.gmra.mxu0 %v45
  %v81 = vpop.f32.mrf.mxu0
  %v82 = vadd.f32 0.0, %v81
  %v83 = vpop.f32.mrf.mxu0
  %v84 = vpop.f32.mrf.mxu0
  %v85 = vadd.f32 0.0, %v84
  %v86 = vpop.f32.mrf.mxu0
  %87 = vdwg.mxu0
  %v88 = vadd.f32 %v22, %v82
  %v89 = vadd.f32 %v23, %v85
  %vm90 = vcmask 523264
  %91 = vst.msk [vmem:[#allocation2] sm:$0xff] %vm90, %v88
  %92 = vst.msk [vmem:[#allocation2 + $0x8] sm:$0xff] %vm90, %v89
  // Predicated region
  $region18: #{transformer_forward.37} parent=0 // pred_check
    %p93 = pneg %p15
  $region19: #{transformer_forward.37} parent=0 // pred_check_branch
    %95 = sbr.rel (%p93) target = $region21
  $region20: #{transformer_forward.37} parent=0 // pred_region
    %v96 = vld [vmem:[#allocation2] sm:$0xff]
    %v97 = vld [vmem:[#allocation2 + $0x8] sm:$0xff]
    %v98 = vld [vmem:[%s2] sm:$0x1]
    %v100 = vlaneseq
    %v101 = vshrl.u32 %v100, 7
    %v102 = vsub.s32 0, %v101
    %v103 = vrot.slane %v98, %v102
    %v105 = vadd.f32 %v96, %v103
    %v106 = vadd.f32 %v97, %v103
    %v107 = vpack.c.bf16 %v106, %v105
    %v109 = vunpack.c.l.b16 %v107
    %v110 = vunpack.c.h.b16 %v107
    %v111 = vpack.c.b16 %v109, %v109
    %v112 = vpack.c.b16 %v110, %v110
    %vm115 = vcmask 519168
    %116 = vst.msk [vmem:[%s3] sm:$0xf] %vm115, %v111
    %117 = vst.msk [vmem:[%s3 + $0x4] sm:$0xf] %vm115, %v112
  $region21: #{transformer_forward.37} parent=0 // pred_fallthru
    _
  // Predicated region
  $region22: #{transformer_forward.37} parent=0 // pred_check
    _
  $region23: #{transformer_forward.37} parent=0 // pred_check_branch
    %119 = sbr.rel (0) target = $region25
  $region24: #{transformer_forward.37} parent=0 // pred_region
    _
  $region25: #{transformer_forward.37} parent=0 // pred_fallthru
    _
  // Predicated region
  $region26: #{transformer_forward.37} parent=0 // pred_check
    _
  $region27: #{transformer_forward.37} parent=0 // pred_check_branch
    %121 = sbr.rel (0) target = $region29
  $region28: #{transformer_forward.37} parent=0 // pred_region
    _
  $region29: #{transformer_forward.37} parent=0 // pred_fallthru
    _

// kernel: transformer_forward.34
$region0: #{transformer_forward.34}
  #allocation0 [shape = 'u32[]', space=smem, size = 0x4, offset = 0x4, fixed_abs, tag = 'smem constant byte address 0x4 - core index']
  #allocation1 [shape = 'u32[144,128]{1,0:T(1,128)}', space=vmem, size = 0x12000, scoped, tag = 'internal scratch']
  %s0 = inlined_call_operand.vmem [shape: bf16[2,8,96], index: 0, kind: input, shape index: {}, may-alias: {0,1}]
  %s1 = inlined_call_operand.vmem [shape: bf16[2,8,96], index: 1, kind: input, shape index: {}, may-alias: {0,1}]
  %s2 = inlined_call_operand.vmem [shape: bf16[2,8,32], index: 2, kind: output, shape index: {}]
  %s3 = sld [smem:[#allocation0]]
  $region41: #{transformer_forward.34} parent=0
    _
  %s5 = ssub.s32 1, %s3
  %s6 = scalar_select 0, %s5, %s3
  loop: start=0, step=1, limit=4
  $region2: #{transformer_forward.34} parent=0 // loop_pre_header
    _
  $region3: #{transformer_forward.34} parent=0 // loop_header
    %s8 = sphi 0, %s12
    %p9 = scmp.ge.s32.totalorder %s8, 4
    %s15 = sphi 0, %s27
    %s16 = sphi 0, %s23
    %s17 = sphi 0, %s15
    %s18 = sphi 0, %s16
    %s19 = sphi 0, %s17
    %s20 = sphi 0, %s18
    %s32 = sphi 0, %s34
    %s35 = sphi 0, %s32
    %s36 = sphi 0, %s35
    %s52 = sphi 0, %s36
    %s58 = sphi 0, %s60
    %s61 = sphi 0, %s58
    %s62 = sphi 0, %s61
    %s78 = sphi 0, %s62
    %s86 = sphi 0, %s88
    %s89 = sphi 0, %s86
    %s90 = sphi 0, %s89
    %s106 = sphi 0, %s90
  $region4: #{transformer_forward.34} parent=0 // loop_header_branch
    %11 = sbr.rel (%p9) target = $region8
  $region5: #{transformer_forward.34} parent=0 // loop_body
    %s13 = ssub.s32 %s8, 1
    %s14 = ssub.s32 %s8, 2
    %s21 = sadd.s32 1, %s16
    %p22 = scmp.ge.s32.totalorder %s21, 1
    %s23 = scalar_select %p22, 0, %s21
    %s24 = sadd.s32 1, %s15
    %s25 = scalar_select %p22, %s24, %s15
    %p26 = scmp.ge.s32.totalorder %s25, 2
    %s27 = scalar_select %p26, 0, %s25
    %s28 = ssub.s32 %s15, %s27
    %s29 = ssub.s32 %s16, %s23
    %s30 = sor.u32 %s28, %s29
    %p31 = scmp.eq.s32.totalorder %s30, 0
    %s33 = sadd.s32 %s32, 1
    %s34 = scalar_select %p31, %s32, %s33
    %p37 = pneg %p31
    %p38 = scmp.eq.s32.totalorder %s8, 1
    %p39 = por %p37, %p38
    %p40 = scmp.ne.s32.totalorder %s32, %s35
    %p41 = scmp.eq.s32.totalorder %s8, 0
    %p42 = por %p40, %p41
    %p43 = scmp.ne.s32.totalorder %s32, %s35
    %p44 = scmp.eq.s32.totalorder %s13, 1
    %p45 = por %p43, %p44
    %p46 = scmp.ne.s32.totalorder %s35, %s36
    %p47 = scmp.eq.s32.totalorder %s13, 0
    %p48 = por %p46, %p47
    %p49 = scmp.ne.s32.totalorder %s35, %s36
    %p50 = scmp.eq.s32.totalorder %s14, 1
    %p51 = por %p49, %p50
    %p53 = scmp.ne.s32.totalorder %s36, %s52
    %p54 = scmp.eq.s32.totalorder %s14, 0
    %p55 = por %p53, %p54
    %s56 = ssub.s32 %s15, %s27
    %p57 = scmp.eq.s32.totalorder %s56, 0
    %s59 = sadd.s32 %s58, 1
    %s60 = scalar_select %p57, %s58, %s59
    %p63 = pneg %p57
    %p64 = scmp.eq.s32.totalorder %s8, 1
    %p65 = por %p63, %p64
    %p66 = scmp.ne.s32.totalorder %s58, %s61
    %p67 = scmp.eq.s32.totalorder %s8, 0
    %p68 = por %p66, %p67
    %p69 = scmp.ne.s32.totalorder %s58, %s61
    %p70 = scmp.eq.s32.totalorder %s13, 1
    %p71 = por %p69, %p70
    %p72 = scmp.ne.s32.totalorder %s61, %s62
    %p73 = scmp.eq.s32.totalorder %s13, 0
    %p74 = por %p72, %p73
    %p75 = scmp.ne.s32.totalorder %s61, %s62
    %p76 = scmp.eq.s32.totalorder %s14, 1
    %p77 = por %p75, %p76
    %p79 = scmp.ne.s32.totalorder %s62, %s78
    %p80 = scmp.eq.s32.totalorder %s14, 0
    %p81 = por %p79, %p80
    %s82 = ssub.s32 %s15, %s27
    %s83 = ssub.s32 %s16, %s23
    %s84 = sor.u32 %s82, %s83
    %p85 = scmp.eq.s32.totalorder %s84, 0
    %s87 = sadd.s32 %s86, 1
    %s88 = scalar_select %p85, %s86, %s87
    %p91 = pneg %p85
    %p92 = scmp.eq.s32.totalorder %s8, 1
    %p93 = por %p91, %p92
    %p94 = scmp.ne.s32.totalorder %s86, %s89
    %p95 = scmp.eq.s32.totalorder %s8, 0
    %p96 = por %p94, %p95
    %p97 = scmp.ne.s32.totalorder %s86, %s89
    %p98 = scmp.eq.s32.totalorder %s13, 1
    %p99 = por %p97, %p98
    %p100 = scmp.ne.s32.totalorder %s89, %s90
    %p101 = scmp.eq.s32.totalorder %s13, 0
    %p102 = por %p100, %p101
    %p103 = scmp.ne.s32.totalorder %s89, %s90
    %p104 = scmp.eq.s32.totalorder %s14, 1
    %p105 = por %p103, %p104
    %p107 = scmp.ne.s32.totalorder %s90, %s106
    %p108 = scmp.eq.s32.totalorder %s14, 0
    %p109 = por %p107, %p108
    %p110 = scmp.le.s32.totalorder 1, %s8
    %p111 = scmp.lt.s32.totalorder %s8, 3
    %p112 = pnand %p110, %p111
    %p113 = pneg %p112
    // Predicated region
    $region9: #{transformer_forward.34} parent=5 // pred_check
      _
    $region10: #{transformer_forward.34} parent=5 // pred_check_branch
      %115 = sbr.rel (%p112) target = $region12
    $region11: #{transformer_forward.34} parent=5 // pred_region
      %s116 = ssub.s32 %s8, 1
    $region12: #{transformer_forward.34} parent=5 // pred_fallthru
      _
    %p117 = scmp.lt.s32.totalorder %s8, 2
    // Predicated region
    $region13: #{transformer_forward.34} parent=5 // pred_check
      %p118 = pneg %p117
    $region14: #{transformer_forward.34} parent=5 // pred_check_branch
      %120 = sbr.rel (%p118) target = $region16
    $region15: #{transformer_forward.34} parent=5 // pred_region
      // Predicated region
      $region17: #{transformer_forward.34} parent=15 // pred_check
        %p121 = pneg %p42
      $region18: #{transformer_forward.34} parent=15 // pred_check_branch
        %123 = sbr.rel (%p121) target = $region20
      $region19: #{transformer_forward.34} parent=15 // pred_region
        %p124 = scmp.lt.s32.totalorder %s15, 1
        %s125 = scalar_select %p124, %s15, 1
        %p126 = scmp.lt.s32.totalorder %s16, 0
        %s127 = scalar_select %p126, %s16, 0
        %s128 = sadd.s32 %s127, %s125
        %s129 = smul.addr %s128, 4
        %s130 = scalar_lea.vmem %s0, %s129
      $region20: #{transformer_forward.34} parent=15 // pred_fallthru
        _
      // Predicated region
      $region21: #{transformer_forward.34} parent=15 // pred_check
        %p131 = pneg %p68
      $region22: #{transformer_forward.34} parent=15 // pred_check_branch
        %133 = sbr.rel (%p131) target = $region24
      $region23: #{transformer_forward.34} parent=15 // pred_region
        %p134 = scmp.lt.s32.totalorder %s15, 1
        %s135 = scalar_select %p134, %s15, 1
        %s136 = smul.addr %s135, 4
        %s137 = scalar_lea.vmem %s1, %s136
      $region24: #{transformer_forward.34} parent=15 // pred_fallthru
        _
    $region16: #{transformer_forward.34} parent=5 // pred_fallthru
      _
    %p138 = scmp.le.s32.totalorder 1, %s8
    %p139 = scmp.lt.s32.totalorder %s8, 3
    %p140 = pnand %p138, %p139
    %p141 = pneg %p140
    // Predicated region
    $region25: #{transformer_forward.34} parent=5 // pred_check
      _
    $region26: #{transformer_forward.34} parent=5 // pred_check_branch
      %143 = sbr.rel (%p140) target = $region28
    $region27: #{transformer_forward.34} parent=5 // pred_region
      %s144 = ssub.s32 %s8, 1
      %p145 = scmp.lt.s32.totalorder %s17, 1
      %s146 = scalar_select %p145, %s17, 1
      %p147 = scmp.lt.s32.totalorder %s18, 0
      %s148 = scalar_select %p147, %s18, 0
      %s149 = sadd.s32 %s148, %s146
      %s150 = smul.addr %s149, 4
      %s151 = scalar_lea.vmem %s0, %s150
      %p152 = pneg %p48
      %p153 = pneg %p45
      %p154 = scmp.lt.s32.totalorder %s17, 1
      %s155 = scalar_select %p154, %s17, 1
      %s156 = smul.addr %s155, 4
      %s157 = scalar_lea.vmem %s1, %s156
      %p158 = pneg %p74
      %p159 = pneg %p71
      %p160 = pneg %p102
      %p161 = pneg %p99
      %p162 = scmp.lt.s32.totalorder %s17, 1
      %s163 = scalar_select %p162, %s17, 1
      %p164 = scmp.lt.s32.totalorder %s18, 0
      %s165 = scalar_select %p164, %s18, 0
      %s166 = sadd.s32 %s165, %s163
      %s167 = smul.addr %s166, 4
      %s168 = scalar_lea.vmem %s2, %s167
      %p169 = scmp.lt.s32.totalorder %s17, 1
      %s170 = scalar_select %p169, %s17, 1
      %p171 = scmp.lt.s32.totalorder %s18, 0
      %s172 = scalar_select %p171, %s18, 0
      %s173 = sadd.s32 %s172, %s170
      %s174 = smul.addr %s173, 4
      %s175 = scalar_lea.vmem %s0, %s174
      %p176 = scmp.lt.s32.totalorder %s17, 1
      %s177 = scalar_select %p176, %s17, 1
      %s178 = smul.addr %s177, 4
      %s179 = scalar_lea.vmem %s1, %s178
      %p180 = scmp.lt.s32.totalorder %s17, 1
      %s181 = scalar_select %p180, %s17, 1
      %p182 = scmp.lt.s32.totalorder %s18, 0
      %s183 = scalar_select %p182, %s18, 0
      %s184 = sadd.s32 %s183, %s181
      %s185 = smul.addr %s184, 4
      %s186 = scalar_lea.vmem %s2, %s185
      %v188 = vld [vmem:[%s175] sm:$0xf]
      %v189 = vld [vmem:[%s179] sm:$0xf]
      %s190 = smul.u32 %s18, 8
      %192 = vrot.lane.b32.xlu0 %v188, 120
      %v193 = vpop.permute.xlu0 %192
      %194 = vrot.lane.b32.xlu0 %v188, 112
      %v195 = vpop.permute.xlu0 %194
      %196 = vrot.lane.b32.xlu0 %v188, 104
      %v197 = vpop.permute.xlu0 %196
      %v200 = vpack.i.b16 %v193, %v188
      %v201 = vshrl.u32 %v188, 16
      %v202 = vshrl.u32 %v193, 16
      %v203 = vpack.i.b16 %v202, %v201
      %v206 = vpack.i.b16 %v197, %v195
      %v207 = vshrl.u32 %v195, 16
      %v208 = vshrl.u32 %v197, 16
      %v209 = vpack.i.b16 %v208, %v207
      %v212 = vunpack.c.l.s4 1983009808
      %v213 = vunpack.c.0.s8 %v212
      %v214 = vlaneseq
      %v215 = vshrl.u32 %v214, 7
      %v216 = vsub.s32 %v213, %v215
      %v217 = vrot.slane %v200, %v216
      %v220 = vunpack.c.l.s4 1983009808
      %v221 = vunpack.c.0.s8 %v220
      %v222 = vlaneseq
      %v223 = vshrl.u32 %v222, 7
      %v224 = vsub.s32 %v221, %v223
      %v225 = vrot.slane %v206, %v224
      %v226 = vcombine.low %v217, %v225
      %v227 = vcombine.high %v217, %v225
      %v229 = vunpack.c.l.s4 1934713408
      %v230 = vunpack.c.0.s8 %v229
      %v231 = vlaneseq
      %v232 = vshrl.u32 %v231, 7
      %v233 = vsub.s32 %v230, %v232
      %v234 = vrot.slane %v226, %v233
      %v236 = vunpack.c.l.s4 1934713408
      %v237 = vunpack.c.0.s8 %v236
      %v238 = vlaneseq
      %v239 = vshrl.u32 %v238, 7
      %v240 = vsub.s32 %v237, %v239
      %v241 = vrot.slane %v227, %v240
      %v242 = vcombine.high %v234, 0
      %v243 = vcombine.high %v241, 0
      %v246 = vunpack.c.l.s4 1983009808
      %v247 = vunpack.c.0.s8 %v246
      %v248 = vlaneseq
      %v249 = vshrl.u32 %v248, 7
      %v250 = vsub.s32 %v247, %v249
      %v251 = vrot.slane %v203, %v250
      %v254 = vunpack.c.l.s4 1983009808
      %v255 = vunpack.c.0.s8 %v254
      %v256 = vlaneseq
      %v257 = vshrl.u32 %v256, 7
      %v258 = vsub.s32 %v255, %v257
      %v259 = vrot.slane %v209, %v258
      %v260 = vcombine.low %v251, %v259
      %v261 = vcombine.high %v251, %v259
      %v263 = vunpack.c.l.s4 1934713408
      %v264 = vunpack.c.0.s8 %v263
      %v265 = vlaneseq
      %v266 = vshrl.u32 %v265, 7
      %v267 = vsub.s32 %v264, %v266
      %v268 = vrot.slane %v260, %v267
      %v270 = vunpack.c.l.s4 1934713408
      %v271 = vunpack.c.0.s8 %v270
      %v272 = vlaneseq
      %v273 = vshrl.u32 %v272, 7
      %v274 = vsub.s32 %v271, %v273
      %v275 = vrot.slane %v261, %v274
      %v276 = vcombine.high %v268, 0
      %v277 = vcombine.high %v275, 0
      %v278 = vcombine.low %v234, %v241
      %v280 = vunpack.c.l.s4 1983009808
      %v281 = vunpack.c.0.s8 %v280
      %v282 = vlaneseq
      %v283 = vshrl.u32 %v282, 7
      %v284 = vsub.s32 %v281, %v283
      %v285 = vrot.slane %v278, %v284
      %v286 = vcombine.low %v242, %v243
      %v288 = vunpack.c.l.s4 1983009808
      %v289 = vunpack.c.0.s8 %v288
      %v290 = vlaneseq
      %v291 = vshrl.u32 %v290, 7
      %v292 = vsub.s32 %v289, %v291
      %v293 = vrot.slane %v286, %v292
      %v294 = vcombine.low %v285, %v293
      %v296 = vunpack.c.l.s4 1934713408
      %v297 = vunpack.c.0.s8 %v296
      %v298 = vlaneseq
      %v299 = vshrl.u32 %v298, 7
      %v300 = vsub.s32 %v297, %v299
      %v301 = vrot.slane %v294, %v300
      %v302 = vcombine.high %v301, 0
      %v303 = vcombine.low %v268, %v275
      %v305 = vunpack.c.l.s4 1983009808
      %v306 = vunpack.c.0.s8 %v305
      %v307 = vlaneseq
      %v308 = vshrl.u32 %v307, 7
      %v309 = vsub.s32 %v306, %v308
      %v310 = vrot.slane %v303, %v309
      %v311 = vcombine.low %v276, %v277
      %v313 = vunpack.c.l.s4 1983009808
      %v314 = vunpack.c.0.s8 %v313
      %v315 = vlaneseq
      %v316 = vshrl.u32 %v315, 7
      %v317 = vsub.s32 %v314, %v316
      %v318 = vrot.slane %v311, %v317
      %v319 = vcombine.low %v310, %v318
      %v321 = vunpack.c.l.s4 1934713408
      %v322 = vunpack.c.0.s8 %v321
      %v323 = vlaneseq
      %v324 = vshrl.u32 %v323, 7
      %v325 = vsub.s32 %v322, %v324
      %v326 = vrot.slane %v319, %v325
      %v327 = vcombine.high %v326, 0
      %v330 = vpack.i.b16 %v326, %v301
      %v331 = vshrl.u32 %v301, 16
      %v332 = vshrl.u32 %v326, 16
      %v333 = vpack.i.b16 %v332, %v331
      %v336 = vpack.i.b16 %v327, %v302
      %v337 = vshrl.u32 %v302, 16
      %v338 = vshrl.u32 %v327, 16
      %v339 = vpack.i.b16 %v338, %v337
      %341 = vrot.lane.b32.xlu0 %v189, 120
      %v342 = vpop.permute.xlu0 %341
      %343 = vrot.lane.b32.xlu0 %v189, 112
      %v344 = vpop.permute.xlu0 %343
      %345 = vrot.lane.b32.xlu0 %v189, 104
      %v346 = vpop.permute.xlu0 %345
      %347 = vrot.lane.b32.xlu0 %v189, 96
      %v348 = vpop.permute.xlu0 %347
      %349 = vrot.lane.b32.xlu0 %v342, 96
      %v350 = vpop.permute.xlu0 %349
      %351 = vrot.lane.b32.xlu0 %v344, 96
      %v352 = vpop.permute.xlu0 %351
      %353 = vrot.lane.b32.xlu0 %v346, 96
      %v354 = vpop.permute.xlu0 %353
      %v357 = vpack.i.b16 %v350, %v348
      %v358 = vshrl.u32 %v348, 16
      %v359 = vshrl.u32 %v350, 16
      %v360 = vpack.i.b16 %v359, %v358
      %v363 = vpack.i.b16 %v354, %v352
      %v364 = vshrl.u32 %v352, 16
      %v365 = vshrl.u32 %v354, 16
      %v366 = vpack.i.b16 %v365, %v364
      %v369 = vunpack.c.l.s4 1983009808
      %v370 = vunpack.c.0.s8 %v369
      %v371 = vlaneseq
      %v372 = vshrl.u32 %v371, 7
      %v373 = vsub.s32 %v370, %v372
      %v374 = vrot.slane %v357, %v373
      %v377 = vunpack.c.l.s4 1983009808
      %v378 = vunpack.c.0.s8 %v377
      %v379 = vlaneseq
      %v380 = vshrl.u32 %v379, 7
      %v381 = vsub.s32 %v378, %v380
      %v382 = vrot.slane %v363, %v381
      %v383 = vcombine.low %v374, %v382
      %v384 = vcombine.high %v374, %v382
      %v386 = vunpack.c.l.s4 1934713408
      %v387 = vunpack.c.0.s8 %v386
      %v388 = vlaneseq
      %v389 = vshrl.u32 %v388, 7
      %v390 = vsub.s32 %v387, %v389
      %v391 = vrot.slane %v383, %v390
      %v393 = vunpack.c.l.s4 1934713408
      %v394 = vunpack.c.0.s8 %v393
      %v395 = vlaneseq
      %v396 = vshrl.u32 %v395, 7
      %v397 = vsub.s32 %v394, %v396
      %v398 = vrot.slane %v384, %v397
      %v399 = vcombine.high %v391, 0
      %v400 = vcombine.high %v398, 0
      %v403 = vunpack.c.l.s4 1983009808
      %v404 = vunpack.c.0.s8 %v403
      %v405 = vlaneseq
      %v406 = vshrl.u32 %v405, 7
      %v407 = vsub.s32 %v404, %v406
      %v408 = vrot.slane %v360, %v407
      %v411 = vunpack.c.l.s4 1983009808
      %v412 = vunpack.c.0.s8 %v411
      %v413 = vlaneseq
      %v414 = vshrl.u32 %v413, 7
      %v415 = vsub.s32 %v412, %v414
      %v416 = vrot.slane %v366, %v415
      %v417 = vcombine.low %v408, %v416
      %v418 = vcombine.high %v408, %v416
      %v420 = vunpack.c.l.s4 1934713408
      %v421 = vunpack.c.0.s8 %v420
      %v422 = vlaneseq
      %v423 = vshrl.u32 %v422, 7
      %v424 = vsub.s32 %v421, %v423
      %v425 = vrot.slane %v417, %v424
      %v427 = vunpack.c.l.s4 1934713408
      %v428 = vunpack.c.0.s8 %v427
      %v429 = vlaneseq
      %v430 = vshrl.u32 %v429, 7
      %v431 = vsub.s32 %v428, %v430
      %v432 = vrot.slane %v418, %v431
      %v433 = vcombine.high %v425, 0
      %v434 = vcombine.high %v432, 0
      %v435 = vcombine.low %v391, %v398
      %v437 = vunpack.c.l.s4 1983009808
      %v438 = vunpack.c.0.s8 %v437
      %v439 = vlaneseq
      %v440 = vshrl.u32 %v439, 7
      %v441 = vsub.s32 %v438, %v440
      %v442 = vrot.slane %v435, %v441
      %v443 = vcombine.low %v399, %v400
      %v445 = vunpack.c.l.s4 1983009808
      %v446 = vunpack.c.0.s8 %v445
      %v447 = vlaneseq
      %v448 = vshrl.u32 %v447, 7
      %v449 = vsub.s32 %v446, %v448
      %v450 = vrot.slane %v443, %v449
      %v451 = vcombine.low %v442, %v450
      %v453 = vunpack.c.l.s4 1934713408
      %v454 = vunpack.c.0.s8 %v453
      %v455 = vlaneseq
      %v456 = vshrl.u32 %v455, 7
      %v457 = vsub.s32 %v454, %v456
      %v458 = vrot.slane %v451, %v457
      %v459 = vcombine.high %v458, 0
      %v460 = vcombine.low %v425, %v432
      %v462 = vunpack.c.l.s4 1983009808
      %v463 = vunpack.c.0.s8 %v462
      %v464 = vlaneseq
      %v465 = vshrl.u32 %v464, 7
      %v466 = vsub.s32 %v463, %v465
      %v467 = vrot.slane %v460, %v466
      %v468 = vcombine.low %v433, %v434
      %v470 = vunpack.c.l.s4 1983009808
      %v471 = vunpack.c.0.s8 %v470
      %v472 = vlaneseq
      %v473 = vshrl.u32 %v472, 7
      %v474 = vsub.s32 %v471, %v473
      %v475 = vrot.slane %v468, %v474
      %v476 = vcombine.low %v467, %v475
      %v478 = vunpack.c.l.s4 1934713408
      %v479 = vunpack.c.0.s8 %v478
      %v480 = vlaneseq
      %v481 = vshrl.u32 %v480, 7
      %v482 = vsub.s32 %v479, %v481
      %v483 = vrot.slane %v476, %v482
      %v484 = vcombine.high %v483, 0
      %v487 = vpack.i.b16 %v483, %v458
      %v488 = vshrl.u32 %v458, 16
      %v489 = vshrl.u32 %v483, 16
      %v490 = vpack.i.b16 %v489, %v488
      %v493 = vpack.i.b16 %v484, %v459
      %v494 = vshrl.u32 %v459, 16
      %v495 = vshrl.u32 %v484, 16
      %v496 = vpack.i.b16 %v495, %v494
      %497 = vrot.lane.b32.xlu0 %v189, 64
      %v498 = vpop.permute.xlu0 %497
      %499 = vrot.lane.b32.xlu0 %v342, 64
      %v500 = vpop.permute.xlu0 %499
      %501 = vrot.lane.b32.xlu0 %v344, 64
      %v502 = vpop.permute.xlu0 %501
      %503 = vrot.lane.b32.xlu0 %v346, 64
      %v504 = vpop.permute.xlu0 %503
      %v507 = vpack.i.b16 %v500, %v498
      %v508 = vshrl.u32 %v498, 16
      %v509 = vshrl.u32 %v500, 16
      %v510 = vpack.i.b16 %v509, %v508
      %v513 = vpack.i.b16 %v504, %v502
      %v514 = vshrl.u32 %v502, 16
      %v515 = vshrl.u32 %v504, 16
      %v516 = vpack.i.b16 %v515, %v514
      %v519 = vunpack.c.l.s4 1983009808
      %v520 = vunpack.c.0.s8 %v519
      %v521 = vlaneseq
      %v522 = vshrl.u32 %v521, 7
      %v523 = vsub.s32 %v520, %v522
      %v524 = vrot.slane %v507, %v523
      %v527 = vunpack.c.l.s4 1983009808
      %v528 = vunpack.c.0.s8 %v527
      %v529 = vlaneseq
      %v530 = vshrl.u32 %v529, 7
      %v531 = vsub.s32 %v528, %v530
      %v532 = vrot.slane %v513, %v531
      %v533 = vcombine.low %v524, %v532
      %v534 = vcombine.high %v524, %v532
      %v536 = vunpack.c.l.s4 1934713408
      %v537 = vunpack.c.0.s8 %v536
      %v538 = vlaneseq
      %v539 = vshrl.u32 %v538, 7
      %v540 = vsub.s32 %v537, %v539
      %v541 = vrot.slane %v533, %v540
      %v543 = vunpack.c.l.s4 1934713408
      %v544 = vunpack.c.0.s8 %v543
      %v545 = vlaneseq
      %v546 = vshrl.u32 %v545, 7
      %v547 = vsub.s32 %v544, %v546
      %v548 = vrot.slane %v534, %v547
      %v549 = vcombine.high %v541, 0
      %v550 = vcombine.high %v548, 0
      %v553 = vunpack.c.l.s4 1983009808
      %v554 = vunpack.c.0.s8 %v553
      %v555 = vlaneseq
      %v556 = vshrl.u32 %v555, 7
      %v557 = vsub.s32 %v554, %v556
      %v558 = vrot.slane %v510, %v557
      %v561 = vunpack.c.l.s4 1983009808
      %v562 = vunpack.c.0.s8 %v561
      %v563 = vlaneseq
      %v564 = vshrl.u32 %v563, 7
      %v565 = vsub.s32 %v562, %v564
      %v566 = vrot.slane %v516, %v565
      %v567 = vcombine.low %v558, %v566
      %v568 = vcombine.high %v558, %v566
      %v570 = vunpack.c.l.s4 1934713408
      %v571 = vunpack.c.0.s8 %v570
      %v572 = vlaneseq
      %v573 = vshrl.u32 %v572, 7
      %v574 = vsub.s32 %v571, %v573
      %v575 = vrot.slane %v567, %v574
      %v577 = vunpack.c.l.s4 1934713408
      %v578 = vunpack.c.0.s8 %v577
      %v579 = vlaneseq
      %v580 = vshrl.u32 %v579, 7
      %v581 = vsub.s32 %v578, %v580
      %v582 = vrot.slane %v568, %v581
      %v583 = vcombine.high %v575, 0
      %v584 = vcombine.high %v582, 0
      %v585 = vcombine.low %v541, %v548
      %v587 = vunpack.c.l.s4 1983009808
      %v588 = vunpack.c.0.s8 %v587
      %v589 = vlaneseq
      %v590 = vshrl.u32 %v589, 7
      %v591 = vsub.s32 %v588, %v590
      %v592 = vrot.slane %v585, %v591
      %v593 = vcombine.low %v549, %v550
      %v595 = vunpack.c.l.s4 1983009808
      %v596 = vunpack.c.0.s8 %v595
      %v597 = vlaneseq
      %v598 = vshrl.u32 %v597, 7
      %v599 = vsub.s32 %v596, %v598
      %v600 = vrot.slane %v593, %v599
      %v601 = vcombine.low %v592, %v600
      %v603 = vunpack.c.l.s4 1934713408
      %v604 = vunpack.c.0.s8 %v603
      %v605 = vlaneseq
      %v606 = vshrl.u32 %v605, 7
      %v607 = vsub.s32 %v604, %v606
      %v608 = vrot.slane %v601, %v607
      %v609 = vcombine.high %v608, 0
      %v610 = vcombine.low %v575, %v582
      %v612 = vunpack.c.l.s4 1983009808
      %v613 = vunpack.c.0.s8 %v612
      %v614 = vlaneseq
      %v615 = vshrl.u32 %v614, 7
      %v616 = vsub.s32 %v613, %v615
      %v617 = vrot.slane %v610, %v616
      %v618 = vcombine.low %v583, %v584
      %v620 = vunpack.c.l.s4 1983009808
      %v621 = vunpack.c.0.s8 %v620
      %v622 = vlaneseq
      %v623 = vshrl.u32 %v622, 7
      %v624 = vsub.s32 %v621, %v623
      %v625 = vrot.slane %v618, %v624
      %v626 = vcombine.low %v617, %v625
      %v628 = vunpack.c.l.s4 1934713408
      %v629 = vunpack.c.0.s8 %v628
      %v630 = vlaneseq
      %v631 = vshrl.u32 %v630, 7
      %v632 = vsub.s32 %v629, %v631
      %v633 = vrot.slane %v626, %v632
      %v634 = vcombine.high %v633, 0
      %v637 = vpack.i.b16 %v633, %v608
      %v638 = vshrl.u32 %v608, 16
      %v639 = vshrl.u32 %v633, 16
      %v640 = vpack.i.b16 %v639, %v638
      %v643 = vpack.i.b16 %v634, %v609
      %v644 = vshrl.u32 %v609, 16
      %v645 = vshrl.u32 %v634, 16
      %v646 = vpack.i.b16 %v645, %v644
      %vm647 = vcmask 64512
      %v649 = vsel %vm647, %v330, 0
      %v652 = vsel %vm647, %v487, 0
      %654 = vmatprep.subr.bf16.mxu0 0
      %655 = vmatpush1.bf16.xpose.msra.mxu0 0
      %656 = vmatprep.subr.bf16.mxu0 0
      %657 = vmatpush1.bf16.xpose.msra.mxu0 0
      %658 = vmatprep.subr.bf16.mxu0 0
      %659 = vmatpush1.bf16.xpose.msra.mxu0 0
      %660 = vmatprep.subr.bf16.mxu0 0
      %661 = vmatpush1.bf16.xpose.msra.mxu0 0
      %662 = vmatprep.subr.bf16.mxu0 0
      %663 = vmatpush1.bf16.xpose.msra.mxu0 0
      %664 = vmatprep.subr.bf16.mxu0 0
      %665 = vmatpush1.bf16.xpose.msra.mxu0 0
      %666 = vmatprep.subr.bf16.mxu0 0
      %667 = vmatpush1.bf16.xpose.msra.mxu0 0
      %668 = vmatprep.subr.bf16.mxu0 0
      %669 = vmatpush1.bf16.xpose.msra.mxu0 %v652
      %670 = vmatprep.subr.bf16.mxu0 0
      %671 = vmatpush2.bf16.xpose.msra.mxu0 0
      %672 = vmatprep.subr.bf16.mxu0 0
      %673 = vmatpush2.bf16.xpose.msra.mxu0 0
      %674 = vmatprep.subr.bf16.mxu0 0
      %675 = vmatpush2.bf16.xpose.msra.mxu0 0
      %676 = vmatprep.subr.bf16.mxu0 0
      %677 = vmatpush2.bf16.xpose.msra.mxu0 0
      %678 = vmatprep.subr.bf16.mxu0 0
      %679 = vmatpush2.bf16.xpose.msra.mxu0 0
      %680 = vmatprep.subr.bf16.mxu0 0
      %681 = vmatpush2.bf16.xpose.msra.mxu0 0
      %682 = vmatprep.subr.bf16.mxu0 0
      %683 = vmatpush2.bf16.xpose.msra.mxu0 0
      %684 = vmatprep.subr.bf16.mxu0 0
      %685 = vmatpush2.bf16.xpose.msra.mxu0 0
      %686 = vmatprep.mubr.bf16.mxu0 0
      %687 = vmatmul.mubr.bf16.gmra.mxu0 %v649
      %v688 = vpop.f32.mrf.mxu0
      %v689 = vadd.f32 0.0, %v688
      %v690 = vpop.f32.mrf.mxu0
      %v691 = vpop.f32.mrf.mxu0
      %v692 = vpop.f32.mrf.mxu0
      %693 = vdwg.mxu0
      %v695 = vsel %vm647, %v333, 0
      %v698 = vsel %vm647, %v490, 0
      %700 = vmatprep.subr.bf16.mxu0 0
      %701 = vmatpush1.bf16.xpose.msra.mxu0 0
      %702 = vmatprep.subr.bf16.mxu0 0
      %703 = vmatpush1.bf16.xpose.msra.mxu0 0
      %704 = vmatprep.subr.bf16.mxu0 0
      %705 = vmatpush1.bf16.xpose.msra.mxu0 0
      %706 = vmatprep.subr.bf16.mxu0 0
      %707 = vmatpush1.bf16.xpose.msra.mxu0 0
      %708 = vmatprep.subr.bf16.mxu0 0
      %709 = vmatpush1.bf16.xpose.msra.mxu0 0
      %710 = vmatprep.subr.bf16.mxu0 0
      %711 = vmatpush1.bf16.xpose.msra.mxu0 0
      %712 = vmatprep.subr.bf16.mxu0 0
      %713 = vmatpush1.bf16.xpose.msra.mxu0 0
      %714 = vmatprep.subr.bf16.mxu0 0
      %715 = vmatpush1.bf16.xpose.msra.mxu0 %v698
      %716 = vmatprep.subr.bf16.mxu0 0
      %717 = vmatpush2.bf16.xpose.msra.mxu0 0
      %718 = vmatprep.subr.bf16.mxu0 0
      %719 = vmatpush2.bf16.xpose.msra.mxu0 0
      %720 = vmatprep.subr.bf16.mxu0 0
      %721 = vmatpush2.bf16.xpose.msra.mxu0 0
      %722 = vmatprep.subr.bf16.mxu0 0
      %723 = vmatpush2.bf16.xpose.msra.mxu0 0
      %724 = vmatprep.subr.bf16.mxu0 0
      %725 = vmatpush2.bf16.xpose.msra.mxu0 0
      %726 = vmatprep.subr.bf16.mxu0 0
      %727 = vmatpush2.bf16.xpose.msra.mxu0 0
      %728 = vmatprep.subr.bf16.mxu0 0
      %729 = vmatpush2.bf16.xpose.msra.mxu0 0
      %730 = vmatprep.subr.bf16.mxu0 0
      %731 = vmatpush2.bf16.xpose.msra.mxu0 0
      %732 = vmatprep.mubr.bf16.mxu0 0
      %733 = vmatmul.mubr.bf16.gmra.mxu0 %v695
      %v734 = vpop.f32.mrf.mxu0
      %v735 = vadd.f32 0.0, %v734
      %v736 = vpop.f32.mrf.mxu0
      %v737 = vpop.f32.mrf.mxu0
      %v738 = vpop.f32.mrf.mxu0
      %739 = vdwg.mxu0
      %v741 = vsel %vm647, %v336, 0
      %v744 = vsel %vm647, %v493, 0
      %746 = vmatprep.subr.bf16.mxu0 0
      %747 = vmatpush1.bf16.xpose.msra.mxu0 0
      %748 = vmatprep.subr.bf16.mxu0 0
      %749 = vmatpush1.bf16.xpose.msra.mxu0 0
      %750 = vmatprep.subr.bf16.mxu0 0
      %751 = vmatpush1.bf16.xpose.msra.mxu0 0
      %752 = vmatprep.subr.bf16.mxu0 0
      %753 = vmatpush1.bf16.xpose.msra.mxu0 0
      %754 = vmatprep.subr.bf16.mxu0 0
      %755 = vmatpush1.bf16.xpose.msra.mxu0 0
      %756 = vmatprep.subr.bf16.mxu0 0
      %757 = vmatpush1.bf16.xpose.msra.mxu0 0
      %758 = vmatprep.subr.bf16.mxu0 0
      %759 = vmatpush1.bf16.xpose.msra.mxu0 0
      %760 = vmatprep.subr.bf16.mxu0 0
      %761 = vmatpush1.bf16.xpose.msra.mxu0 %v744
      %762 = vmatprep.subr.bf16.mxu0 0
      %763 = vmatpush2.bf16.xpose.msra.mxu0 0
      %764 = vmatprep.subr.bf16.mxu0 0
      %765 = vmatpush2.bf16.xpose.msra.mxu0 0
      %766 = vmatprep.subr.bf16.mxu0 0
      %767 = vmatpush2.bf16.xpose.msra.mxu0 0
      %768 = vmatprep.subr.bf16.mxu0 0
      %769 = vmatpush2.bf16.xpose.msra.mxu0 0
      %770 = vmatprep.subr.bf16.mxu0 0
      %771 = vmatpush2.bf16.xpose.msra.mxu0 0
      %772 = vmatprep.subr.bf16.mxu0 0
      %773 = vmatpush2.bf16.xpose.msra.mxu0 0
      %774 = vmatprep.subr.bf16.mxu0 0
      %775 = vmatpush2.bf16.xpose.msra.mxu0 0
      %776 = vmatprep.subr.bf16.mxu0 0
      %777 = vmatpush2.bf16.xpose.msra.mxu0 0
      %778 = vmatprep.mubr.bf16.mxu0 0
      %779 = vmatmul.mubr.bf16.gmra.mxu0 %v741
      %v780 = vpop.f32.mrf.mxu0
      %v781 = vadd.f32 0.0, %v780
      %v782 = vpop.f32.mrf.mxu0
      %v783 = vpop.f32.mrf.mxu0
      %v784 = vpop.f32.mrf.mxu0
      %785 = vdwg.mxu0
      %v787 = vsel %vm647, %v339, 0
      %v790 = vsel %vm647, %v496, 0
      %792 = vmatprep.subr.bf16.mxu0 0
      %793 = vmatpush1.bf16.xpose.msra.mxu0 0
      %794 = vmatprep.subr.bf16.mxu0 0
      %795 = vmatpush1.bf16.xpose.msra.mxu0 0
      %796 = vmatprep.subr.bf16.mxu0 0
      %797 = vmatpush1.bf16.xpose.msra.mxu0 0
      %798 = vmatprep.subr.bf16.mxu0 0
      %799 = vmatpush1.bf16.xpose.msra.mxu0 0
      %800 = vmatprep.subr.bf16.mxu0 0
      %801 = vmatpush1.bf16.xpose.msra.mxu0 0
      %802 = vmatprep.subr.bf16.mxu0 0
      %803 = vmatpush1.bf16.xpose.msra.mxu0 0
      %804 = vmatprep.subr.bf16.mxu0 0
      %805 = vmatpush1.bf16.xpose.msra.mxu0 0
      %806 = vmatprep.subr.bf16.mxu0 0
      %807 = vmatpush1.bf16.xpose.msra.mxu0 %v790
      %808 = vmatprep.subr.bf16.mxu0 0
      %809 = vmatpush2.bf16.xpose.msra.mxu0 0
      %810 = vmatprep.subr.bf16.mxu0 0
      %811 = vmatpush2.bf16.xpose.msra.mxu0 0
      %812 = vmatprep.subr.bf16.mxu0 0
      %813 = vmatpush2.bf16.xpose.msra.mxu0 0
      %814 = vmatprep.subr.bf16.mxu0 0
      %815 = vmatpush2.bf16.xpose.msra.mxu0 0
      %816 = vmatprep.subr.bf16.mxu0 0
      %817 = vmatpush2.bf16.xpose.msra.mxu0 0
      %818 = vmatprep.subr.bf16.mxu0 0
      %819 = vmatpush2.bf16.xpose.msra.mxu0 0
      %820 = vmatprep.subr.bf16.mxu0 0
      %821 = vmatpush2.bf16.xpose.msra.mxu0 0
      %822 = vmatprep.subr.bf16.mxu0 0
      %823 = vmatpush2.bf16.xpose.msra.mxu0 0
      %824 = vmatprep.mubr.bf16.mxu0 0
      %825 = vmatmul.mubr.bf16.gmra.mxu0 %v787
      %v826 = vpop.f32.mrf.mxu0
      %v827 = vadd.f32 0.0, %v826
      %v828 = vpop.f32.mrf.mxu0
      %v829 = vpop.f32.mrf.mxu0
      %v830 = vpop.f32.mrf.mxu0
      %831 = vdwg.mxu0
      %v832 = vmul.f32 %v689, 0.35355338
      %v833 = vmul.f32 %v735, 0.35355338
      %v834 = vmul.f32 %v781, 0.35355338
      %v835 = vmul.f32 %v827, 0.35355338
      %v836 = vlaneseq
      %v837 = vshrl.u32 %v836, 7
      %v838 = vstv %s190
      %v839 = vadd.s32 %v838, %v837
      %v840 = vlaneseq
      %v841 = vand.u32 %v840, 127
      %vm842 = vcmp.gt.s32.totalorder %v841, %v839
      %v843 = vsel %vm842, 1, 0
      %vm844 = vcmp.eq.s32.totalorder %v843, 1
      %v845 = vsel %vm844, -1e+30, %v832
      %v846 = vsel %vm844, -1e+30, %v833
      %v847 = vsel %vm844, -1e+30, %v834
      %v848 = vsel %vm844, -1e+30, %v835
      %v849 = vsel %vm647, %v845, -inf
      %850 = vmax.xlane.f32.xlu0 %v849
      %v851 = vpop.xlane.xlu0 %850
      %v852 = vsel %vm647, %v846, -inf
      %853 = vmax.xlane.f32.xlu0 %v852
      %v854 = vpop.xlane.xlu0 %853
      %v855 = vsel %vm647, %v847, -inf
      %856 = vmax.xlane.f32.xlu0 %v855
      %v857 = vpop.xlane.xlu0 %856
      %v858 = vsel %vm647, %v848, -inf
      %859 = vmax.xlane.f32.xlu0 %v858
      %v860 = vpop.xlane.xlu0 %859
      %v861 = vsub.f32 %v845, %v851
      %v862 = vsub.f32 %v846, %v854
      %v863 = vsub.f32 %v847, %v857
      %v864 = vsub.f32 %v848, %v860
      %v865 = vmul.f32 %v861, 1.442695
      %v866 = vpow.pop %v865
      %v867 = vmul.f32 %v862, 1.442695
      %v868 = vpow.pop %v867
      %v869 = vmul.f32 %v863, 1.442695
      %v870 = vpow.pop %v869
      %v871 = vmul.f32 %v864, 1.442695
      %v872 = vpow.pop %v871
      %v873 = vsel %vm647, %v866, 0.0
      %874 = vadd.xlane.f32.xlu0 %v873
      %v875 = vpop.xlane.xlu0 %874
      %v876 = vsel %vm647, %v868, 0.0
      %877 = vadd.xlane.f32.xlu0 %v876
      %v878 = vpop.xlane.xlu0 %877
      %v879 = vsel %vm647, %v870, 0.0
      %880 = vadd.xlane.f32.xlu0 %v879
      %v881 = vpop.xlane.xlu0 %880
      %v882 = vsel %vm647, %v872, 0.0
      %883 = vadd.xlane.f32.xlu0 %v882
      %v884 = vpop.xlane.xlu0 %883
      %v885 = vrcp.pop %v875
      %v886 = vrcp.pop %v878
      %v887 = vrcp.pop %v881
      %v888 = vrcp.pop %v884
      %v889 = vmul.f32 %v866, %v885
      %v890 = vmul.f32 %v868, %v886
      %v891 = vmul.f32 %v870, %v887
      %v892 = vmul.f32 %v872, %v888
      %v893 = vpack.c.bf16 %v889, %v889
      %v894 = vpack.c.bf16 %v890, %v890
      %v895 = vpack.c.bf16 %v891, %v891
      %v896 = vpack.c.bf16 %v892, %v892
      %v898 = vsel %vm647, %v893, 0
      %vm900 = vcmask 1043456
      %v902 = vsel %vm900, %v637, 0
      %904 = vmatprep.subr.bf16.mxu0 0
      %905 = vmatpush1.bf16.msra.mxu0 0
      %906 = vmatprep.subr.bf16.mxu0 0
      %907 = vmatpush1.bf16.msra.mxu0 0
      %908 = vmatprep.subr.bf16.mxu0 0
      %909 = vmatpush1.bf16.msra.mxu0 0
      %910 = vmatprep.subr.bf16.mxu0 0
      %911 = vmatpush1.bf16.msra.mxu0 0
      %912 = vmatprep.subr.bf16.mxu0 0
      %913 = vmatpush1.bf16.msra.mxu0 0
      %914 = vmatprep.subr.bf16.mxu0 0
      %915 = vmatpush1.bf16.msra.mxu0 0
      %916 = vmatprep.subr.bf16.mxu0 0
      %917 = vmatpush1.bf16.msra.mxu0 0
      %918 = vmatprep.subr.bf16.mxu0 0
      %919 = vmatpush1.bf16.msra.mxu0 %v902
      %920 = vmatprep.subr.bf16.mxu0 0
      %921 = vmatpush2.bf16.msra.mxu0 0
      %922 = vmatprep.subr.bf16.mxu0 0
      %923 = vmatpush2.bf16.msra.mxu0 0
      %924 = vmatprep.subr.bf16.mxu0 0
      %925 = vmatpush2.bf16.msra.mxu0 0
      %926 = vmatprep.subr.bf16.mxu0 0
      %927 = vmatpush2.bf16.msra.mxu0 0
      %928 = vmatprep.subr.bf16.mxu0 0
      %929 = vmatpush2.bf16.msra.mxu0 0
      %930 = vmatprep.subr.bf16.mxu0 0
      %931 = vmatpush2.bf16.msra.mxu0 0
      %932 = vmatprep.subr.bf16.mxu0 0
      %933 = vmatpush2.bf16.msra.mxu0 0
      %934 = vmatprep.subr.bf16.mxu0 0
      %935 = vmatpush2.bf16.msra.mxu0 0
      %936 = vmatprep.mubr.bf16.mxu0 0
      %937 = vmatmul.mubr.bf16.gmra.mxu0 %v898
      %v938 = vpop.f32.mrf.mxu0
      %v939 = vadd.f32 0.0, %v938
      %v940 = vpop.f32.mrf.mxu0
      %v941 = vpop.f32.mrf.mxu0
      %v942 = vpop.f32.mrf.mxu0
      %943 = vdwg.mxu0
      %v945 = vsel %vm647, %v894, 0
      %v948 = vsel %vm900, %v640, 0
      %950 = vmatprep.subr.bf16.mxu0 0
      %951 = vmatpush1.bf16.msra.mxu0 0
      %952 = vmatprep.subr.bf16.mxu0 0
      %953 = vmatpush1.bf16.msra.mxu0 0
      %954 = vmatprep.subr.bf16.mxu0 0
      %955 = vmatpush1.bf16.msra.mxu0 0
      %956 = vmatprep.subr.bf16.mxu0 0
      %957 = vmatpush1.bf16.msra.mxu0 0
      %958 = vmatprep.subr.bf16.mxu0 0
      %959 = vmatpush1.bf16.msra.mxu0 0
      %960 = vmatprep.subr.bf16.mxu0 0
      %961 = vmatpush1.bf16.msra.mxu0 0
      %962 = vmatprep.subr.bf16.mxu0 0
      %963 = vmatpush1.bf16.msra.mxu0 0
      %964 = vmatprep.subr.bf16.mxu0 0
      %965 = vmatpush1.bf16.msra.mxu0 %v948
      %966 = vmatprep.subr.bf16.mxu0 0
      %967 = vmatpush2.bf16.msra.mxu0 0
      %968 = vmatprep.subr.bf16.mxu0 0
      %969 = vmatpush2.bf16.msra.mxu0 0
      %970 = vmatprep.subr.bf16.mxu0 0
      %971 = vmatpush2.bf16.msra.mxu0 0
      %972 = vmatprep.subr.bf16.mxu0 0
      %973 = vmatpush2.bf16.msra.mxu0 0
      %974 = vmatprep.subr.bf16.mxu0 0
      %975 = vmatpush2.bf16.msra.mxu0 0
      %976 = vmatprep.subr.bf16.mxu0 0
      %977 = vmatpush2.bf16.msra.mxu0 0
      %978 = vmatprep.subr.bf16.mxu0 0
      %979 = vmatpush2.bf16.msra.mxu0 0
      %980 = vmatprep.subr.bf16.mxu0 0
      %981 = vmatpush2.bf16.msra.mxu0 0
      %982 = vmatprep.mubr.bf16.mxu0 0
      %983 = vmatmul.mubr.bf16.gmra.mxu0 %v945
      %v984 = vpop.f32.mrf.mxu0
      %v985 = vadd.f32 0.0, %v984
      %v986 = vpop.f32.mrf.mxu0
      %v987 = vpop.f32.mrf.mxu0
      %v988 = vpop.f32.mrf.mxu0
      %989 = vdwg.mxu0
      %v991 = vsel %vm647, %v895, 0
      %v994 = vsel %vm900, %v643, 0
      %996 = vmatprep.subr.bf16.mxu0 0
      %997 = vmatpush1.bf16.msra.mxu0 0
      %998 = vmatprep.subr.bf16.mxu0 0
      %999 = vmatpush1.bf16.msra.mxu0 0
      %1000 = vmatprep.subr.bf16.mxu0 0
      %1001 = vmatpush1.bf16.msra.mxu0 0
      %1002 = vmatprep.subr.bf16.mxu0 0
      %1003 = vmatpush1.bf16.msra.mxu0 0
      %1004 = vmatprep.subr.bf16.mxu0 0
      %1005 = vmatpush1.bf16.msra.mxu0 0
      %1006 = vmatprep.subr.bf16.mxu0 0
      %1007 = vmatpush1.bf16.msra.mxu0 0
      %1008 = vmatprep.subr.bf16.mxu0 0
      %1009 = vmatpush1.bf16.msra.mxu0 0
      %1010 = vmatprep.subr.bf16.mxu0 0
      %1011 = vmatpush1.bf16.msra.mxu0 %v994
      %1012 = vmatprep.subr.bf16.mxu0 0
      %1013 = vmatpush2.bf16.msra.mxu0 0
      %1014 = vmatprep.subr.bf16.mxu0 0
      %1015 = vmatpush2.bf16.msra.mxu0 0
      %1016 = vmatprep.subr.bf16.mxu0 0
      %1017 = vmatpush2.bf16.msra.mxu0 0
      %1018 = vmatprep.subr.bf16.mxu0 0
      %1019 = vmatpush2.bf16.msra.mxu0 0
      %1020 = vmatprep.subr.bf16.mxu0 0
      %1021 = vmatpush2.bf16.msra.mxu0 0
      %1022 = vmatprep.subr.bf16.mxu0 0
      %1023 = vmatpush2.bf16.msra.mxu0 0
      %1024 = vmatprep.subr.bf16.mxu0 0
      %1025 = vmatpush2.bf16.msra.mxu0 0
      %1026 = vmatprep.subr.bf16.mxu0 0
      %1027 = vmatpush2.bf16.msra.mxu0 0
      %1028 = vmatprep.mubr.bf16.mxu0 0
      %1029 = vmatmul.mubr.bf16.gmra.mxu0 %v991
      %v1030 = vpop.f32.mrf.mxu0
      %v1031 = vadd.f32 0.0, %v1030
      %v1032 = vpop.f32.mrf.mxu0
      %v1033 = vpop.f32.mrf.mxu0
      %v1034 = vpop.f32.mrf.mxu0
      %1035 = vdwg.mxu0
      %v1037 = vsel %vm647, %v896, 0
      %v1040 = vsel %vm900, %v646, 0
      %1042 = vmatprep.subr.bf16.mxu0 0
      %1043 = vmatpush1.bf16.msra.mxu0 0
      %1044 = vmatprep.subr.bf16.mxu0 0
      %1045 = vmatpush1.bf16.msra.mxu0 0
      %1046 = vmatprep.subr.bf16.mxu0 0
      %1047 = vmatpush1.bf16.msra.mxu0 0
      %1048 = vmatprep.subr.bf16.mxu0 0
      %1049 = vmatpush1.bf16.msra.mxu0 0
      %1050 = vmatprep.subr.bf16.mxu0 0
      %1051 = vmatpush1.bf16.msra.mxu0 0
      %1052 = vmatprep.subr.bf16.mxu0 0
      %1053 = vmatpush1.bf16.msra.mxu0 0
      %1054 = vmatprep.subr.bf16.mxu0 0
      %1055 = vmatpush1.bf16.msra.mxu0 0
      %1056 = vmatprep.subr.bf16.mxu0 0
      %1057 = vmatpush1.bf16.msra.mxu0 %v1040
      %1058 = vmatprep.subr.bf16.mxu0 0
      %1059 = vmatpush2.bf16.msra.mxu0 0
      %1060 = vmatprep.subr.bf16.mxu0 0
      %1061 = vmatpush2.bf16.msra.mxu0 0
      %1062 = vmatprep.subr.bf16.mxu0 0
      %1063 = vmatpush2.bf16.msra.mxu0 0
      %1064 = vmatprep.subr.bf16.mxu0 0
      %1065 = vmatpush2.bf16.msra.mxu0 0
      %1066 = vmatprep.subr.bf16.mxu0 0
      %1067 = vmatpush2.bf16.msra.mxu0 0
      %1068 = vmatprep.subr.bf16.mxu0 0
      %1069 = vmatpush2.bf16.msra.mxu0 0
      %1070 = vmatprep.subr.bf16.mxu0 0
      %1071 = vmatpush2.bf16.msra.mxu0 0
      %1072 = vmatprep.subr.bf16.mxu0 0
      %1073 = vmatpush2.bf16.msra.mxu0 0
      %1074 = vmatprep.mubr.bf16.mxu0 0
      %1075 = vmatmul.mubr.bf16.gmra.mxu0 %v1037
      %v1076 = vpop.f32.mrf.mxu0
      %v1077 = vadd.f32 0.0, %v1076
      %v1078 = vpop.f32.mrf.mxu0
      %v1079 = vpop.f32.mrf.mxu0
      %v1080 = vpop.f32.mrf.mxu0
      %1081 = vdwg.mxu0
      %v1082 = vcombine.low %v939, %v1031
      %v1083 = vcombine.high %v939, %v1031
      %v1085 = vunpack.c.l.s4 1983009808
      %v1086 = vunpack.c.0.s8 %v1085
      %v1087 = vlaneseq
      %v1088 = vshrl.u32 %v1087, 7
      %v1089 = vsub.s32 %v1086, %v1088
      %v1090 = vrot.slane %v1082, %v1089
      %v1092 = vunpack.c.l.s4 1983009808
      %v1093 = vunpack.c.0.s8 %v1092
      %v1094 = vlaneseq
      %v1095 = vshrl.u32 %v1094, 7
      %v1096 = vsub.s32 %v1093, %v1095
      %v1097 = vrot.slane %v1083, %v1096
      %v1098 = vcombine.low %v985, %v1077
      %v1099 = vcombine.high %v985, %v1077
      %v1101 = vunpack.c.l.s4 1983009808
      %v1102 = vunpack.c.0.s8 %v1101
      %v1103 = vlaneseq
      %v1104 = vshrl.u32 %v1103, 7
      %v1105 = vsub.s32 %v1102, %v1104
      %v1106 = vrot.slane %v1098, %v1105
      %v1108 = vunpack.c.l.s4 1983009808
      %v1109 = vunpack.c.0.s8 %v1108
      %v1110 = vlaneseq
      %v1111 = vshrl.u32 %v1110, 7
      %v1112 = vsub.s32 %v1109, %v1111
      %v1113 = vrot.slane %v1099, %v1112
      %v1114 = vcombine.low %v1090, %v1106
      %v1115 = vcombine.high %v1090, %v1106
      %v1117 = vunpack.c.l.s4 1934713408
      %v1118 = vunpack.c.0.s8 %v1117
      %v1119 = vlaneseq
      %v1120 = vshrl.u32 %v1119, 7
      %v1121 = vsub.s32 %v1118, %v1120
      %v1122 = vrot.slane %v1114, %v1121
      %v1124 = vunpack.c.l.s4 1934713408
      %v1125 = vunpack.c.0.s8 %v1124
      %v1126 = vlaneseq
      %v1127 = vshrl.u32 %v1126, 7
      %v1128 = vsub.s32 %v1125, %v1127
      %v1129 = vrot.slane %v1115, %v1128
      %v1130 = vcombine.low %v1097, %v1113
      %v1131 = vcombine.high %v1097, %v1113
      %v1133 = vunpack.c.l.s4 1934713408
      %v1134 = vunpack.c.0.s8 %v1133
      %v1135 = vlaneseq
      %v1136 = vshrl.u32 %v1135, 7
      %v1137 = vsub.s32 %v1134, %v1136
      %v1138 = vrot.slane %v1130, %v1137
      %v1140 = vunpack.c.l.s4 1934713408
      %v1141 = vunpack.c.0.s8 %v1140
      %v1142 = vlaneseq
      %v1143 = vshrl.u32 %v1142, 7
      %v1144 = vsub.s32 %v1141, %v1143
      %v1145 = vrot.slane %v1131, %v1144
      %v1146 = vcombine.high %v1122, 0.0
      %v1147 = vcombine.high %v1129, 0.0
      %v1148 = vcombine.high %v1138, 0.0
      %v1149 = vcombine.high %v1145, 0.0
      %v1150 = vcombine.low %v1122, %v1129
      %v1152 = vunpack.c.l.s4 1983009808
      %v1153 = vunpack.c.0.s8 %v1152
      %v1154 = vlaneseq
      %v1155 = vshrl.u32 %v1154, 7
      %v1156 = vsub.s32 %v1153, %v1155
      %v1157 = vrot.slane %v1150, %v1156
      %v1158 = vcombine.low %v1146, %v1147
      %v1160 = vunpack.c.l.s4 1983009808
      %v1161 = vunpack.c.0.s8 %v1160
      %v1162 = vlaneseq
      %v1163 = vshrl.u32 %v1162, 7
      %v1164 = vsub.s32 %v1161, %v1163
      %v1165 = vrot.slane %v1158, %v1164
      %v1166 = vcombine.low %v1138, %v1145
      %v1168 = vunpack.c.l.s4 1983009808
      %v1169 = vunpack.c.0.s8 %v1168
      %v1170 = vlaneseq
      %v1171 = vshrl.u32 %v1170, 7
      %v1172 = vsub.s32 %v1169, %v1171
      %v1173 = vrot.slane %v1166, %v1172
      %v1174 = vcombine.low %v1148, %v1149
      %v1176 = vunpack.c.l.s4 1983009808
      %v1177 = vunpack.c.0.s8 %v1176
      %v1178 = vlaneseq
      %v1179 = vshrl.u32 %v1178, 7
      %v1180 = vsub.s32 %v1177, %v1179
      %v1181 = vrot.slane %v1174, %v1180
      %v1182 = vcombine.low %v1157, %v1165
      %v1183 = vcombine.high %v1157, %v1165
      %v1185 = vunpack.c.l.s4 1934713408
      %v1186 = vunpack.c.0.s8 %v1185
      %v1187 = vlaneseq
      %v1188 = vshrl.u32 %v1187, 7
      %v1189 = vsub.s32 %v1186, %v1188
      %v1190 = vrot.slane %v1182, %v1189
      %v1192 = vunpack.c.l.s4 1934713408
      %v1193 = vunpack.c.0.s8 %v1192
      %v1194 = vlaneseq
      %v1195 = vshrl.u32 %v1194, 7
      %v1196 = vsub.s32 %v1193, %v1195
      %v1197 = vrot.slane %v1183, %v1196
      %v1198 = vcombine.low %v1173, %v1181
      %v1199 = vcombine.high %v1173, %v1181
      %v1201 = vunpack.c.l.s4 1934713408
      %v1202 = vunpack.c.0.s8 %v1201
      %v1203 = vlaneseq
      %v1204 = vshrl.u32 %v1203, 7
      %v1205 = vsub.s32 %v1202, %v1204
      %v1206 = vrot.slane %v1198, %v1205
      %v1208 = vunpack.c.l.s4 1934713408
      %v1209 = vunpack.c.0.s8 %v1208
      %v1210 = vlaneseq
      %v1211 = vshrl.u32 %v1210, 7
      %v1212 = vsub.s32 %v1209, %v1211
      %v1213 = vrot.slane %v1199, %v1212
      %v1214 = vcombine.low %v1190, %v1206
      %v1215 = vcombine.high %v1190, %v1206
      %v1216 = vcombine.low %v1197, %v1213
      %v1217 = vcombine.high %v1197, %v1213
      %1219 = vrot.lane.b32.xlu0 %v1215, 8
      %v1220 = vpop.permute.xlu0 %1219
      %1223 = vrot.lane.b32.xlu0 %v1216, 16
      %v1224 = vpop.permute.xlu0 %1223
      %1227 = vrot.lane.b32.xlu0 %v1217, 24
      %v1228 = vpop.permute.xlu0 %1227
      %v1230 = vsel %vm647, %v1214, %v1220
      %vm1231 = vcmask 130048
      %v1232 = vsel %vm1231, %v1230, %v1224
      %vm1233 = vcmask 195584
      %v1234 = vsel %vm1233, %v1232, %v1228
      %v1235 = vpack.c.bf16 %v1234, %v1234
      %vm1236 = vcmask 257024
      %1237 = vst.msk [vmem:[%s186] sm:$0xf] %vm1236, %v1235
      %p1238 = scmp.lt.s32.totalorder %s17, 1
      %s1239 = scalar_select %p1238, %s17, 1
      %p1240 = scmp.lt.s32.totalorder %s18, 0
      %s1241 = scalar_select %p1240, %s18, 0
      %s1242 = sadd.s32 %s1241, %s1239
      %s1243 = smul.addr %s1242, 4
      %s1244 = scalar_lea.vmem %s2, %s1243
      // Predicated region
      $region29: #{transformer_forward.34} parent=27 // pred_check
        %p1245 = pneg %p99
      $region30: #{transformer_forward.34} parent=27 // pred_check_branch
        %1247 = sbr.rel (%p1245) target = $region32
      $region31: #{transformer_forward.34} parent=27 // pred_region
        _
      $region32: #{transformer_forward.34} parent=27 // pred_fallthru
        _
    $region28: #{transformer_forward.34} parent=5 // pred_fallthru
      _
    %p1248 = scmp.le.s32.totalorder 2, %s8
    // Predicated region
    $region33: #{transformer_forward.34} parent=5 // pred_check
      %p1249 = pneg %p1248
    $region34: #{transformer_forward.34} parent=5 // pred_check_branch
      %1251 = sbr.rel (%p1249) target = $region36
    $region35: #{transformer_forward.34} parent=5 // pred_region
      %s1252 = ssub.s32 %s8, 2
      // Predicated region
      $region37: #{transformer_forward.34} parent=35 // pred_check
        %p1253 = pneg %p105
      $region38: #{transformer_forward.34} parent=35 // pred_check_branch
        %1255 = sbr.rel (%p1253) target = $region40
      $region39: #{transformer_forward.34} parent=35 // pred_region
        %p1256 = scmp.lt.s32.totalorder %s19, 1
        %s1257 = scalar_select %p1256, %s19, 1
        %p1258 = scmp.lt.s32.totalorder %s20, 0
        %s1259 = scalar_select %p1258, %s20, 0
        %s1260 = sadd.s32 %s1259, %s1257
        %s1261 = smul.addr %s1260, 4
        %s1262 = scalar_lea.vmem %s2, %s1261
      $region40: #{transformer_forward.34} parent=35 // pred_fallthru
        _
    $region36: #{transformer_forward.34} parent=5 // pred_fallthru
      _
  $region6: #{transformer_forward.34} parent=0 // loop_footer
    %s12 = sadd.s32 1, %s8
  $region7: #{transformer_forward.34} parent=0 // loop_footer_branch
    %7 = sbr.rel target = $region3
  $region8: #{transformer_forward.34} parent=0 // loop_exit
    _

// kernel: transformer_forward.38
$region0: #{transformer_forward.38}
  #allocation0 [shape = 'u32[]', space=smem, size = 0x4, offset = 0x4, fixed_abs, tag = 'smem constant byte address 0x4 - core index']
  #allocation1 [shape = 'u32[144,128]{1,0:T(1,128)}', space=vmem, size = 0x12000, scoped, tag = 'internal scratch']
  %s0 = inlined_call_operand.vmem [shape: bf16[2,8,32], index: 0, kind: input, shape index: {}]
  %s1 = inlined_call_operand.vmem [shape: bf16[2,8,64], index: 1, kind: input, shape index: {}]
  %s2 = inlined_call_operand.vmem [shape: bf16[2,8,32], index: 2, kind: output, shape index: {}]
  %s3 = sld [smem:[#allocation0]]
  $region41: #{transformer_forward.38} parent=0
    _
  %s5 = ssub.s32 1, %s3
  %s6 = scalar_select 0, %s5, %s3
  loop: start=0, step=1, limit=4
  $region2: #{transformer_forward.38} parent=0 // loop_pre_header
    _
  $region3: #{transformer_forward.38} parent=0 // loop_header
    %s8 = sphi 0, %s12
    %p9 = scmp.ge.s32.totalorder %s8, 4
    %s15 = sphi 0, %s27
    %s16 = sphi 0, %s23
    %s17 = sphi 0, %s15
    %s18 = sphi 0, %s16
    %s19 = sphi 0, %s17
    %s20 = sphi 0, %s18
    %s32 = sphi 0, %s34
    %s35 = sphi 0, %s32
    %s36 = sphi 0, %s35
    %s52 = sphi 0, %s36
    %s58 = sphi 0, %s60
    %s61 = sphi 0, %s58
    %s62 = sphi 0, %s61
    %s78 = sphi 0, %s62
    %s86 = sphi 0, %s88
    %s89 = sphi 0, %s86
    %s90 = sphi 0, %s89
    %s106 = sphi 0, %s90
  $region4: #{transformer_forward.38} parent=0 // loop_header_branch
    %11 = sbr.rel (%p9) target = $region8
  $region5: #{transformer_forward.38} parent=0 // loop_body
    %s13 = ssub.s32 %s8, 1
    %s14 = ssub.s32 %s8, 2
    %s21 = sadd.s32 1, %s16
    %p22 = scmp.ge.s32.totalorder %s21, 1
    %s23 = scalar_select %p22, 0, %s21
    %s24 = sadd.s32 1, %s15
    %s25 = scalar_select %p22, %s24, %s15
    %p26 = scmp.ge.s32.totalorder %s25, 2
    %s27 = scalar_select %p26, 0, %s25
    %s28 = ssub.s32 %s15, %s27
    %s29 = ssub.s32 %s16, %s23
    %s30 = sor.u32 %s28, %s29
    %p31 = scmp.eq.s32.totalorder %s30, 0
    %s33 = sadd.s32 %s32, 1
    %s34 = scalar_select %p31, %s32, %s33
    %p37 = pneg %p31
    %p38 = scmp.eq.s32.totalorder %s8, 1
    %p39 = por %p37, %p38
    %p40 = scmp.ne.s32.totalorder %s32, %s35
    %p41 = scmp.eq.s32.totalorder %s8, 0
    %p42 = por %p40, %p41
    %p43 = scmp.ne.s32.totalorder %s32, %s35
    %p44 = scmp.eq.s32.totalorder %s13, 1
    %p45 = por %p43, %p44
    %p46 = scmp.ne.s32.totalorder %s35, %s36
    %p47 = scmp.eq.s32.totalorder %s13, 0
    %p48 = por %p46, %p47
    %p49 = scmp.ne.s32.totalorder %s35, %s36
    %p50 = scmp.eq.s32.totalorder %s14, 1
    %p51 = por %p49, %p50
    %p53 = scmp.ne.s32.totalorder %s36, %s52
    %p54 = scmp.eq.s32.totalorder %s14, 0
    %p55 = por %p53, %p54
    %s56 = ssub.s32 %s15, %s27
    %p57 = scmp.eq.s32.totalorder %s56, 0
    %s59 = sadd.s32 %s58, 1
    %s60 = scalar_select %p57, %s58, %s59
    %p63 = pneg %p57
    %p64 = scmp.eq.s32.totalorder %s8, 1
    %p65 = por %p63, %p64
    %p66 = scmp.ne.s32.totalorder %s58, %s61
    %p67 = scmp.eq.s32.totalorder %s8, 0
    %p68 = por %p66, %p67
    %p69 = scmp.ne.s32.totalorder %s58, %s61
    %p70 = scmp.eq.s32.totalorder %s13, 1
    %p71 = por %p69, %p70
    %p72 = scmp.ne.s32.totalorder %s61, %s62
    %p73 = scmp.eq.s32.totalorder %s13, 0
    %p74 = por %p72, %p73
    %p75 = scmp.ne.s32.totalorder %s61, %s62
    %p76 = scmp.eq.s32.totalorder %s14, 1
    %p77 = por %p75, %p76
    %p79 = scmp.ne.s32.totalorder %s62, %s78
    %p80 = scmp.eq.s32.totalorder %s14, 0
    %p81 = por %p79, %p80
    %s82 = ssub.s32 %s15, %s27
    %s83 = ssub.s32 %s16, %s23
    %s84 = sor.u32 %s82, %s83
    %p85 = scmp.eq.s32.totalorder %s84, 0
    %s87 = sadd.s32 %s86, 1
    %s88 = scalar_select %p85, %s86, %s87
    %p91 = pneg %p85
    %p92 = scmp.eq.s32.totalorder %s8, 1
    %p93 = por %p91, %p92
    %p94 = scmp.ne.s32.totalorder %s86, %s89
    %p95 = scmp.eq.s32.totalorder %s8, 0
    %p96 = por %p94, %p95
    %p97 = scmp.ne.s32.totalorder %s86, %s89
    %p98 = scmp.eq.s32.totalorder %s13, 1
    %p99 = por %p97, %p98
    %p100 = scmp.ne.s32.totalorder %s89, %s90
    %p101 = scmp.eq.s32.totalorder %s13, 0
    %p102 = por %p100, %p101
    %p103 = scmp.ne.s32.totalorder %s89, %s90
    %p104 = scmp.eq.s32.totalorder %s14, 1
    %p105 = por %p103, %p104
    %p107 = scmp.ne.s32.totalorder %s90, %s106
    %p108 = scmp.eq.s32.totalorder %s14, 0
    %p109 = por %p107, %p108
    %p110 = scmp.le.s32.totalorder 1, %s8
    %p111 = scmp.lt.s32.totalorder %s8, 3
    %p112 = pnand %p110, %p111
    %p113 = pneg %p112
    // Predicated region
    $region9: #{transformer_forward.38} parent=5 // pred_check
      _
    $region10: #{transformer_forward.38} parent=5 // pred_check_branch
      %115 = sbr.rel (%p112) target = $region12
    $region11: #{transformer_forward.38} parent=5 // pred_region
      %s116 = ssub.s32 %s8, 1
    $region12: #{transformer_forward.38} parent=5 // pred_fallthru
      _
    %p117 = scmp.lt.s32.totalorder %s8, 2
    // Predicated region
    $region13: #{transformer_forward.38} parent=5 // pred_check
      %p118 = pneg %p117
    $region14: #{transformer_forward.38} parent=5 // pred_check_branch
      %120 = sbr.rel (%p118) target = $region16
    $region15: #{transformer_forward.38} parent=5 // pred_region
      // Predicated region
      $region17: #{transformer_forward.38} parent=15 // pred_check
        %p121 = pneg %p42
      $region18: #{transformer_forward.38} parent=15 // pred_check_branch
        %123 = sbr.rel (%p121) target = $region20
      $region19: #{transformer_forward.38} parent=15 // pred_region
        %p124 = scmp.lt.s32.totalorder %s15, 1
        %s125 = scalar_select %p124, %s15, 1
        %p126 = scmp.lt.s32.totalorder %s16, 0
        %s127 = scalar_select %p126, %s16, 0
        %s128 = sadd.s32 %s127, %s125
        %s129 = smul.addr %s128, 4
        %s130 = scalar_lea.vmem %s0, %s129
      $region20: #{transformer_forward.38} parent=15 // pred_fallthru
        _
      // Predicated region
      $region21: #{transformer_forward.38} parent=15 // pred_check
        %p131 = pneg %p68
      $region22: #{transformer_forward.38} parent=15 // pred_check_branch
        %133 = sbr.rel (%p131) target = $region24
      $region23: #{transformer_forward.38} parent=15 // pred_region
        %p134 = scmp.lt.s32.totalorder %s15, 1
        %s135 = scalar_select %p134, %s15, 1
        %s136 = smul.addr %s135, 4
        %s137 = scalar_lea.vmem %s1, %s136
      $region24: #{transformer_forward.38} parent=15 // pred_fallthru
        _
    $region16: #{transformer_forward.38} parent=5 // pred_fallthru
      _
    %p138 = scmp.le.s32.totalorder 1, %s8
    %p139 = scmp.lt.s32.totalorder %s8, 3
    %p140 = pnand %p138, %p139
    %p141 = pneg %p140
    // Predicated region
    $region25: #{transformer_forward.38} parent=5 // pred_check
      _
    $region26: #{transformer_forward.38} parent=5 // pred_check_branch
      %143 = sbr.rel (%p140) target = $region28
    $region27: #{transformer_forward.38} parent=5 // pred_region
      %s144 = ssub.s32 %s8, 1
      %p145 = scmp.lt.s32.totalorder %s17, 1
      %s146 = scalar_select %p145, %s17, 1
      %p147 = scmp.lt.s32.totalorder %s18, 0
      %s148 = scalar_select %p147, %s18, 0
      %s149 = sadd.s32 %s148, %s146
      %s150 = smul.addr %s149, 4
      %s151 = scalar_lea.vmem %s0, %s150
      %p152 = pneg %p48
      %p153 = pneg %p45
      %p154 = scmp.lt.s32.totalorder %s17, 1
      %s155 = scalar_select %p154, %s17, 1
      %s156 = smul.addr %s155, 4
      %s157 = scalar_lea.vmem %s1, %s156
      %p158 = pneg %p74
      %p159 = pneg %p71
      %p160 = pneg %p102
      %p161 = pneg %p99
      %p162 = scmp.lt.s32.totalorder %s17, 1
      %s163 = scalar_select %p162, %s17, 1
      %p164 = scmp.lt.s32.totalorder %s18, 0
      %s165 = scalar_select %p164, %s18, 0
      %s166 = sadd.s32 %s165, %s163
      %s167 = smul.addr %s166, 4
      %s168 = scalar_lea.vmem %s2, %s167
      %p169 = scmp.lt.s32.totalorder %s17, 1
      %s170 = scalar_select %p169, %s17, 1
      %p171 = scmp.lt.s32.totalorder %s18, 0
      %s172 = scalar_select %p171, %s18, 0
      %s173 = sadd.s32 %s172, %s170
      %s174 = smul.addr %s173, 4
      %s175 = scalar_lea.vmem %s0, %s174
      %p176 = scmp.lt.s32.totalorder %s17, 1
      %s177 = scalar_select %p176, %s17, 1
      %s178 = smul.addr %s177, 4
      %s179 = scalar_lea.vmem %s1, %s178
      %p180 = scmp.lt.s32.totalorder %s17, 1
      %s181 = scalar_select %p180, %s17, 1
      %p182 = scmp.lt.s32.totalorder %s18, 0
      %s183 = scalar_select %p182, %s18, 0
      %s184 = sadd.s32 %s183, %s181
      %s185 = smul.addr %s184, 4
      %s186 = scalar_lea.vmem %s2, %s185
      %v188 = vld [vmem:[%s175] sm:$0xf]
      %v189 = vld [vmem:[%s179] sm:$0xf]
      %191 = vrot.lane.b32.xlu0 %v188, 120
      %v192 = vpop.permute.xlu0 %191
      %193 = vrot.lane.b32.xlu0 %v188, 112
      %v194 = vpop.permute.xlu0 %193
      %195 = vrot.lane.b32.xlu0 %v188, 104
      %v196 = vpop.permute.xlu0 %195
      %v199 = vpack.i.b16 %v192, %v188
      %v200 = vshrl.u32 %v188, 16
      %v201 = vshrl.u32 %v192, 16
      %v202 = vpack.i.b16 %v201, %v200
      %v205 = vpack.i.b16 %v196, %v194
      %v206 = vshrl.u32 %v194, 16
      %v207 = vshrl.u32 %v196, 16
      %v208 = vpack.i.b16 %v207, %v206
      %v211 = vunpack.c.l.s4 1983009808
      %v212 = vunpack.c.0.s8 %v211
      %v213 = vlaneseq
      %v214 = vshrl.u32 %v213, 7
      %v215 = vsub.s32 %v212, %v214
      %v216 = vrot.slane %v199, %v215
      %v219 = vunpack.c.l.s4 1983009808
      %v220 = vunpack.c.0.s8 %v219
      %v221 = vlaneseq
      %v222 = vshrl.u32 %v221, 7
      %v223 = vsub.s32 %v220, %v222
      %v224 = vrot.slane %v205, %v223
      %v225 = vcombine.low %v216, %v224
      %v226 = vcombine.high %v216, %v224
      %v228 = vunpack.c.l.s4 1934713408
      %v229 = vunpack.c.0.s8 %v228
      %v230 = vlaneseq
      %v231 = vshrl.u32 %v230, 7
      %v232 = vsub.s32 %v229, %v231
      %v233 = vrot.slane %v225, %v232
      %v235 = vunpack.c.l.s4 1934713408
      %v236 = vunpack.c.0.s8 %v235
      %v237 = vlaneseq
      %v238 = vshrl.u32 %v237, 7
      %v239 = vsub.s32 %v236, %v238
      %v240 = vrot.slane %v226, %v239
      %v241 = vcombine.high %v233, 0
      %v242 = vcombine.high %v240, 0
      %v245 = vunpack.c.l.s4 1983009808
      %v246 = vunpack.c.0.s8 %v245
      %v247 = vlaneseq
      %v248 = vshrl.u32 %v247, 7
      %v249 = vsub.s32 %v246, %v248
      %v250 = vrot.slane %v202, %v249
      %v253 = vunpack.c.l.s4 1983009808
      %v254 = vunpack.c.0.s8 %v253
      %v255 = vlaneseq
      %v256 = vshrl.u32 %v255, 7
      %v257 = vsub.s32 %v254, %v256
      %v258 = vrot.slane %v208, %v257
      %v259 = vcombine.low %v250, %v258
      %v260 = vcombine.high %v250, %v258
      %v262 = vunpack.c.l.s4 1934713408
      %v263 = vunpack.c.0.s8 %v262
      %v264 = vlaneseq
      %v265 = vshrl.u32 %v264, 7
      %v266 = vsub.s32 %v263, %v265
      %v267 = vrot.slane %v259, %v266
      %v269 = vunpack.c.l.s4 1934713408
      %v270 = vunpack.c.0.s8 %v269
      %v271 = vlaneseq
      %v272 = vshrl.u32 %v271, 7
      %v273 = vsub.s32 %v270, %v272
      %v274 = vrot.slane %v260, %v273
      %v275 = vcombine.high %v267, 0
      %v276 = vcombine.high %v274, 0
      %v277 = vcombine.low %v233, %v240
      %v279 = vunpack.c.l.s4 1983009808
      %v280 = vunpack.c.0.s8 %v279
      %v281 = vlaneseq
      %v282 = vshrl.u32 %v281, 7
      %v283 = vsub.s32 %v280, %v282
      %v284 = vrot.slane %v277, %v283
      %v285 = vcombine.low %v241, %v242
      %v287 = vunpack.c.l.s4 1983009808
      %v288 = vunpack.c.0.s8 %v287
      %v289 = vlaneseq
      %v290 = vshrl.u32 %v289, 7
      %v291 = vsub.s32 %v288, %v290
      %v292 = vrot.slane %v285, %v291
      %v293 = vcombine.low %v284, %v292
      %v295 = vunpack.c.l.s4 1934713408
      %v296 = vunpack.c.0.s8 %v295
      %v297 = vlaneseq
      %v298 = vshrl.u32 %v297, 7
      %v299 = vsub.s32 %v296, %v298
      %v300 = vrot.slane %v293, %v299
      %v301 = vcombine.high %v300, 0
      %v302 = vcombine.low %v267, %v274
      %v304 = vunpack.c.l.s4 1983009808
      %v305 = vunpack.c.0.s8 %v304
      %v306 = vlaneseq
      %v307 = vshrl.u32 %v306, 7
      %v308 = vsub.s32 %v305, %v307
      %v309 = vrot.slane %v302, %v308
      %v310 = vcombine.low %v275, %v276
      %v312 = vunpack.c.l.s4 1983009808
      %v313 = vunpack.c.0.s8 %v312
      %v314 = vlaneseq
      %v315 = vshrl.u32 %v314, 7
      %v316 = vsub.s32 %v313, %v315
      %v317 = vrot.slane %v310, %v316
      %v318 = vcombine.low %v309, %v317
      %v320 = vunpack.c.l.s4 1934713408
      %v321 = vunpack.c.0.s8 %v320
      %v322 = vlaneseq
      %v323 = vshrl.u32 %v322, 7
      %v324 = vsub.s32 %v321, %v323
      %v325 = vrot.slane %v318, %v324
      %v326 = vcombine.high %v325, 0
      %v329 = vpack.i.b16 %v325, %v300
      %v330 = vshrl.u32 %v300, 16
      %v331 = vshrl.u32 %v325, 16
      %v332 = vpack.i.b16 %v331, %v330
      %v335 = vpack.i.b16 %v326, %v301
      %v336 = vshrl.u32 %v301, 16
      %v337 = vshrl.u32 %v326, 16
      %v338 = vpack.i.b16 %v337, %v336
      %340 = vrot.lane.b32.xlu0 %v189, 120
      %v341 = vpop.permute.xlu0 %340
      %342 = vrot.lane.b32.xlu0 %v189, 112
      %v343 = vpop.permute.xlu0 %342
      %344 = vrot.lane.b32.xlu0 %v189, 104
      %v345 = vpop.permute.xlu0 %344
      %v348 = vpack.i.b16 %v341, %v189
      %v349 = vshrl.u32 %v189, 16
      %v350 = vshrl.u32 %v341, 16
      %v351 = vpack.i.b16 %v350, %v349
      %v354 = vpack.i.b16 %v345, %v343
      %v355 = vshrl.u32 %v343, 16
      %v356 = vshrl.u32 %v345, 16
      %v357 = vpack.i.b16 %v356, %v355
      %v360 = vunpack.c.l.s4 1983009808
      %v361 = vunpack.c.0.s8 %v360
      %v362 = vlaneseq
      %v363 = vshrl.u32 %v362, 7
      %v364 = vsub.s32 %v361, %v363
      %v365 = vrot.slane %v348, %v364
      %v368 = vunpack.c.l.s4 1983009808
      %v369 = vunpack.c.0.s8 %v368
      %v370 = vlaneseq
      %v371 = vshrl.u32 %v370, 7
      %v372 = vsub.s32 %v369, %v371
      %v373 = vrot.slane %v354, %v372
      %v374 = vcombine.low %v365, %v373
      %v375 = vcombine.high %v365, %v373
      %v377 = vunpack.c.l.s4 1934713408
      %v378 = vunpack.c.0.s8 %v377
      %v379 = vlaneseq
      %v380 = vshrl.u32 %v379, 7
      %v381 = vsub.s32 %v378, %v380
      %v382 = vrot.slane %v374, %v381
      %v384 = vunpack.c.l.s4 1934713408
      %v385 = vunpack.c.0.s8 %v384
      %v386 = vlaneseq
      %v387 = vshrl.u32 %v386, 7
      %v388 = vsub.s32 %v385, %v387
      %v389 = vrot.slane %v375, %v388
      %v390 = vcombine.high %v382, 0
      %v391 = vcombine.high %v389, 0
      %v394 = vunpack.c.l.s4 1983009808
      %v395 = vunpack.c.0.s8 %v394
      %v396 = vlaneseq
      %v397 = vshrl.u32 %v396, 7
      %v398 = vsub.s32 %v395, %v397
      %v399 = vrot.slane %v351, %v398
      %v402 = vunpack.c.l.s4 1983009808
      %v403 = vunpack.c.0.s8 %v402
      %v404 = vlaneseq
      %v405 = vshrl.u32 %v404, 7
      %v406 = vsub.s32 %v403, %v405
      %v407 = vrot.slane %v357, %v406
      %v408 = vcombine.low %v399, %v407
      %v409 = vcombine.high %v399, %v407
      %v411 = vunpack.c.l.s4 1934713408
      %v412 = vunpack.c.0.s8 %v411
      %v413 = vlaneseq
      %v414 = vshrl.u32 %v413, 7
      %v415 = vsub.s32 %v412, %v414
      %v416 = vrot.slane %v408, %v415
      %v418 = vunpack.c.l.s4 1934713408
      %v419 = vunpack.c.0.s8 %v418
      %v420 = vlaneseq
      %v421 = vshrl.u32 %v420, 7
      %v422 = vsub.s32 %v419, %v421
      %v423 = vrot.slane %v409, %v422
      %v424 = vcombine.high %v416, 0
      %v425 = vcombine.high %v423, 0
      %v426 = vcombine.low %v382, %v389
      %v428 = vunpack.c.l.s4 1983009808
      %v429 = vunpack.c.0.s8 %v428
      %v430 = vlaneseq
      %v431 = vshrl.u32 %v430, 7
      %v432 = vsub.s32 %v429, %v431
      %v433 = vrot.slane %v426, %v432
      %v434 = vcombine.low %v390, %v391
      %v436 = vunpack.c.l.s4 1983009808
      %v437 = vunpack.c.0.s8 %v436
      %v438 = vlaneseq
      %v439 = vshrl.u32 %v438, 7
      %v440 = vsub.s32 %v437, %v439
      %v441 = vrot.slane %v434, %v440
      %v442 = vcombine.low %v433, %v441
      %v444 = vunpack.c.l.s4 1934713408
      %v445 = vunpack.c.0.s8 %v444
      %v446 = vlaneseq
      %v447 = vshrl.u32 %v446, 7
      %v448 = vsub.s32 %v445, %v447
      %v449 = vrot.slane %v442, %v448
      %v450 = vcombine.high %v449, 0
      %v451 = vcombine.low %v416, %v423
      %v453 = vunpack.c.l.s4 1983009808
      %v454 = vunpack.c.0.s8 %v453
      %v455 = vlaneseq
      %v456 = vshrl.u32 %v455, 7
      %v457 = vsub.s32 %v454, %v456
      %v458 = vrot.slane %v451, %v457
      %v459 = vcombine.low %v424, %v425
      %v461 = vunpack.c.l.s4 1983009808
      %v462 = vunpack.c.0.s8 %v461
      %v463 = vlaneseq
      %v464 = vshrl.u32 %v463, 7
      %v465 = vsub.s32 %v462, %v464
      %v466 = vrot.slane %v459, %v465
      %v467 = vcombine.low %v458, %v466
      %v469 = vunpack.c.l.s4 1934713408
      %v470 = vunpack.c.0.s8 %v469
      %v471 = vlaneseq
      %v472 = vshrl.u32 %v471, 7
      %v473 = vsub.s32 %v470, %v472
      %v474 = vrot.slane %v467, %v473
      %v475 = vcombine.high %v474, 0
      %v478 = vpack.i.b16 %v474, %v449
      %v479 = vshrl.u32 %v449, 16
      %v480 = vshrl.u32 %v474, 16
      %v481 = vpack.i.b16 %v480, %v479
      %v484 = vpack.i.b16 %v475, %v450
      %v485 = vshrl.u32 %v450, 16
      %v486 = vshrl.u32 %v475, 16
      %v487 = vpack.i.b16 %v486, %v485
      %488 = vrot.lane.b32.xlu0 %v189, 96
      %v489 = vpop.permute.xlu0 %488
      %490 = vrot.lane.b32.xlu0 %v341, 96
      %v491 = vpop.permute.xlu0 %490
      %492 = vrot.lane.b32.xlu0 %v343, 96
      %v493 = vpop.permute.xlu0 %492
      %494 = vrot.lane.b32.xlu0 %v345, 96
      %v495 = vpop.permute.xlu0 %494
      %v498 = vpack.i.b16 %v491, %v489
      %v499 = vshrl.u32 %v489, 16
      %v500 = vshrl.u32 %v491, 16
      %v501 = vpack.i.b16 %v500, %v499
      %v504 = vpack.i.b16 %v495, %v493
      %v505 = vshrl.u32 %v493, 16
      %v506 = vshrl.u32 %v495, 16
      %v507 = vpack.i.b16 %v506, %v505
      %v510 = vunpack.c.l.s4 1983009808
      %v511 = vunpack.c.0.s8 %v510
      %v512 = vlaneseq
      %v513 = vshrl.u32 %v512, 7
      %v514 = vsub.s32 %v511, %v513
      %v515 = vrot.slane %v498, %v514
      %v518 = vunpack.c.l.s4 1983009808
      %v519 = vunpack.c.0.s8 %v518
      %v520 = vlaneseq
      %v521 = vshrl.u32 %v520, 7
      %v522 = vsub.s32 %v519, %v521
      %v523 = vrot.slane %v504, %v522
      %v524 = vcombine.low %v515, %v523
      %v525 = vcombine.high %v515, %v523
      %v527 = vunpack.c.l.s4 1934713408
      %v528 = vunpack.c.0.s8 %v527
      %v529 = vlaneseq
      %v530 = vshrl.u32 %v529, 7
      %v531 = vsub.s32 %v528, %v530
      %v532 = vrot.slane %v524, %v531
      %v534 = vunpack.c.l.s4 1934713408
      %v535 = vunpack.c.0.s8 %v534
      %v536 = vlaneseq
      %v537 = vshrl.u32 %v536, 7
      %v538 = vsub.s32 %v535, %v537
      %v539 = vrot.slane %v525, %v538
      %v540 = vcombine.high %v532, 0
      %v541 = vcombine.high %v539, 0
      %v544 = vunpack.c.l.s4 1983009808
      %v545 = vunpack.c.0.s8 %v544
      %v546 = vlaneseq
      %v547 = vshrl.u32 %v546, 7
      %v548 = vsub.s32 %v545, %v547
      %v549 = vrot.slane %v501, %v548
      %v552 = vunpack.c.l.s4 1983009808
      %v553 = vunpack.c.0.s8 %v552
      %v554 = vlaneseq
      %v555 = vshrl.u32 %v554, 7
      %v556 = vsub.s32 %v553, %v555
      %v557 = vrot.slane %v507, %v556
      %v558 = vcombine.low %v549, %v557
      %v559 = vcombine.high %v549, %v557
      %v561 = vunpack.c.l.s4 1934713408
      %v562 = vunpack.c.0.s8 %v561
      %v563 = vlaneseq
      %v564 = vshrl.u32 %v563, 7
      %v565 = vsub.s32 %v562, %v564
      %v566 = vrot.slane %v558, %v565
      %v568 = vunpack.c.l.s4 1934713408
      %v569 = vunpack.c.0.s8 %v568
      %v570 = vlaneseq
      %v571 = vshrl.u32 %v570, 7
      %v572 = vsub.s32 %v569, %v571
      %v573 = vrot.slane %v559, %v572
      %v574 = vcombine.high %v566, 0
      %v575 = vcombine.high %v573, 0
      %v576 = vcombine.low %v532, %v539
      %v578 = vunpack.c.l.s4 1983009808
      %v579 = vunpack.c.0.s8 %v578
      %v580 = vlaneseq
      %v581 = vshrl.u32 %v580, 7
      %v582 = vsub.s32 %v579, %v581
      %v583 = vrot.slane %v576, %v582
      %v584 = vcombine.low %v540, %v541
      %v586 = vunpack.c.l.s4 1983009808
      %v587 = vunpack.c.0.s8 %v586
      %v588 = vlaneseq
      %v589 = vshrl.u32 %v588, 7
      %v590 = vsub.s32 %v587, %v589
      %v591 = vrot.slane %v584, %v590
      %v592 = vcombine.low %v583, %v591
      %v594 = vunpack.c.l.s4 1934713408
      %v595 = vunpack.c.0.s8 %v594
      %v596 = vlaneseq
      %v597 = vshrl.u32 %v596, 7
      %v598 = vsub.s32 %v595, %v597
      %v599 = vrot.slane %v592, %v598
      %v600 = vcombine.high %v599, 0
      %v601 = vcombine.low %v566, %v573
      %v603 = vunpack.c.l.s4 1983009808
      %v604 = vunpack.c.0.s8 %v603
      %v605 = vlaneseq
      %v606 = vshrl.u32 %v605, 7
      %v607 = vsub.s32 %v604, %v606
      %v608 = vrot.slane %v601, %v607
      %v609 = vcombine.low %v574, %v575
      %v611 = vunpack.c.l.s4 1983009808
      %v612 = vunpack.c.0.s8 %v611
      %v613 = vlaneseq
      %v614 = vshrl.u32 %v613, 7
      %v615 = vsub.s32 %v612, %v614
      %v616 = vrot.slane %v609, %v615
      %v617 = vcombine.low %v608, %v616
      %v619 = vunpack.c.l.s4 1934713408
      %v620 = vunpack.c.0.s8 %v619
      %v621 = vlaneseq
      %v622 = vshrl.u32 %v621, 7
      %v623 = vsub.s32 %v620, %v622
      %v624 = vrot.slane %v617, %v623
      %v625 = vcombine.high %v624, 0
      %v628 = vpack.i.b16 %v624, %v599
      %v629 = vshrl.u32 %v599, 16
      %v630 = vshrl.u32 %v624, 16
      %v631 = vpack.i.b16 %v630, %v629
      %v634 = vpack.i.b16 %v625, %v600
      %v635 = vshrl.u32 %v600, 16
      %v636 = vshrl.u32 %v625, 16
      %v637 = vpack.i.b16 %v636, %v635
      %vm638 = vcmask 64512
      %v640 = vsel %vm638, %v329, 0
      %v643 = vsel %vm638, %v478, 0
      %645 = vmatprep.subr.bf16.mxu0 0
      %646 = vmatpush1.bf16.xpose.msra.mxu0 0
      %647 = vmatprep.subr.bf16.mxu0 0
      %648 = vmatpush1.bf16.xpose.msra.mxu0 0
      %649 = vmatprep.subr.bf16.mxu0 0
      %650 = vmatpush1.bf16.xpose.msra.mxu0 0
      %651 = vmatprep.subr.bf16.mxu0 0
      %652 = vmatpush1.bf16.xpose.msra.mxu0 0
      %653 = vmatprep.subr.bf16.mxu0 0
      %654 = vmatpush1.bf16.xpose.msra.mxu0 0
      %655 = vmatprep.subr.bf16.mxu0 0
      %656 = vmatpush1.bf16.xpose.msra.mxu0 0
      %657 = vmatprep.subr.bf16.mxu0 0
      %658 = vmatpush1.bf16.xpose.msra.mxu0 0
      %659 = vmatprep.subr.bf16.mxu0 0
      %660 = vmatpush1.bf16.xpose.msra.mxu0 %v643
      %661 = vmatprep.subr.bf16.mxu0 0
      %662 = vmatpush2.bf16.xpose.msra.mxu0 0
      %663 = vmatprep.subr.bf16.mxu0 0
      %664 = vmatpush2.bf16.xpose.msra.mxu0 0
      %665 = vmatprep.subr.bf16.mxu0 0
      %666 = vmatpush2.bf16.xpose.msra.mxu0 0
      %667 = vmatprep.subr.bf16.mxu0 0
      %668 = vmatpush2.bf16.xpose.msra.mxu0 0
      %669 = vmatprep.subr.bf16.mxu0 0
      %670 = vmatpush2.bf16.xpose.msra.mxu0 0
      %671 = vmatprep.subr.bf16.mxu0 0
      %672 = vmatpush2.bf16.xpose.msra.mxu0 0
      %673 = vmatprep.subr.bf16.mxu0 0
      %674 = vmatpush2.bf16.xpose.msra.mxu0 0
      %675 = vmatprep.subr.bf16.mxu0 0
      %676 = vmatpush2.bf16.xpose.msra.mxu0 0
      %677 = vmatprep.mubr.bf16.mxu0 0
      %678 = vmatmul.mubr.bf16.gmra.mxu0 %v640
      %v679 = vpop.f32.mrf.mxu0
      %v680 = vadd.f32 0.0, %v679
      %v681 = vpop.f32.mrf.mxu0
      %v682 = vpop.f32.mrf.mxu0
      %v683 = vpop.f32.mrf.mxu0
      %684 = vdwg.mxu0
      %v686 = vsel %vm638, %v332, 0
      %v689 = vsel %vm638, %v481, 0
      %691 = vmatprep.subr.bf16.mxu0 0
      %692 = vmatpush1.bf16.xpose.msra.mxu0 0
      %693 = vmatprep.subr.bf16.mxu0 0
      %694 = vmatpush1.bf16.xpose.msra.mxu0 0
      %695 = vmatprep.subr.bf16.mxu0 0
      %696 = vmatpush1.bf16.xpose.msra.mxu0 0
      %697 = vmatprep.subr.bf16.mxu0 0
      %698 = vmatpush1.bf16.xpose.msra.mxu0 0
      %699 = vmatprep.subr.bf16.mxu0 0
      %700 = vmatpush1.bf16.xpose.msra.mxu0 0
      %701 = vmatprep.subr.bf16.mxu0 0
      %702 = vmatpush1.bf16.xpose.msra.mxu0 0
      %703 = vmatprep.subr.bf16.mxu0 0
      %704 = vmatpush1.bf16.xpose.msra.mxu0 0
      %705 = vmatprep.subr.bf16.mxu0 0
      %706 = vmatpush1.bf16.xpose.msra.mxu0 %v689
      %707 = vmatprep.subr.bf16.mxu0 0
      %708 = vmatpush2.bf16.xpose.msra.mxu0 0
      %709 = vmatprep.subr.bf16.mxu0 0
      %710 = vmatpush2.bf16.xpose.msra.mxu0 0
      %711 = vmatprep.subr.bf16.mxu0 0
      %712 = vmatpush2.bf16.xpose.msra.mxu0 0
      %713 = vmatprep.subr.bf16.mxu0 0
      %714 = vmatpush2.bf16.xpose.msra.mxu0 0
      %715 = vmatprep.subr.bf16.mxu0 0
      %716 = vmatpush2.bf16.xpose.msra.mxu0 0
      %717 = vmatprep.subr.bf16.mxu0 0
      %718 = vmatpush2.bf16.xpose.msra.mxu0 0
      %719 = vmatprep.subr.bf16.mxu0 0
      %720 = vmatpush2.bf16.xpose.msra.mxu0 0
      %721 = vmatprep.subr.bf16.mxu0 0
      %722 = vmatpush2.bf16.xpose.msra.mxu0 0
      %723 = vmatprep.mubr.bf16.mxu0 0
      %724 = vmatmul.mubr.bf16.gmra.mxu0 %v686
      %v725 = vpop.f32.mrf.mxu0
      %v726 = vadd.f32 0.0, %v725
      %v727 = vpop.f32.mrf.mxu0
      %v728 = vpop.f32.mrf.mxu0
      %v729 = vpop.f32.mrf.mxu0
      %730 = vdwg.mxu0
      %v732 = vsel %vm638, %v335, 0
      %v735 = vsel %vm638, %v484, 0
      %737 = vmatprep.subr.bf16.mxu0 0
      %738 = vmatpush1.bf16.xpose.msra.mxu0 0
      %739 = vmatprep.subr.bf16.mxu0 0
      %740 = vmatpush1.bf16.xpose.msra.mxu0 0
      %741 = vmatprep.subr.bf16.mxu0 0
      %742 = vmatpush1.bf16.xpose.msra.mxu0 0
      %743 = vmatprep.subr.bf16.mxu0 0
      %744 = vmatpush1.bf16.xpose.msra.mxu0 0
      %745 = vmatprep.subr.bf16.mxu0 0
      %746 = vmatpush1.bf16.xpose.msra.mxu0 0
      %747 = vmatprep.subr.bf16.mxu0 0
      %748 = vmatpush1.bf16.xpose.msra.mxu0 0
      %749 = vmatprep.subr.bf16.mxu0 0
      %750 = vmatpush1.bf16.xpose.msra.mxu0 0
      %751 = vmatprep.subr.bf16.mxu0 0
      %752 = vmatpush1.bf16.xpose.msra.mxu0 %v735
      %753 = vmatprep.subr.bf16.mxu0 0
      %754 = vmatpush2.bf16.xpose.msra.mxu0 0
      %755 = vmatprep.subr.bf16.mxu0 0
      %756 = vmatpush2.bf16.xpose.msra.mxu0 0
      %757 = vmatprep.subr.bf16.mxu0 0
      %758 = vmatpush2.bf16.xpose.msra.mxu0 0
      %759 = vmatprep.subr.bf16.mxu0 0
      %760 = vmatpush2.bf16.xpose.msra.mxu0 0
      %761 = vmatprep.subr.bf16.mxu0 0
      %762 = vmatpush2.bf16.xpose.msra.mxu0 0
      %763 = vmatprep.subr.bf16.mxu0 0
      %764 = vmatpush2.bf16.xpose.msra.mxu0 0
      %765 = vmatprep.subr.bf16.mxu0 0
      %766 = vmatpush2.bf16.xpose.msra.mxu0 0
      %767 = vmatprep.subr.bf16.mxu0 0
      %768 = vmatpush2.bf16.xpose.msra.mxu0 0
      %769 = vmatprep.mubr.bf16.mxu0 0
      %770 = vmatmul.mubr.bf16.gmra.mxu0 %v732
      %v771 = vpop.f32.mrf.mxu0
      %v772 = vadd.f32 0.0, %v771
      %v773 = vpop.f32.mrf.mxu0
      %v774 = vpop.f32.mrf.mxu0
      %v775 = vpop.f32.mrf.mxu0
      %776 = vdwg.mxu0
      %v778 = vsel %vm638, %v338, 0
      %v781 = vsel %vm638, %v487, 0
      %783 = vmatprep.subr.bf16.mxu0 0
      %784 = vmatpush1.bf16.xpose.msra.mxu0 0
      %785 = vmatprep.subr.bf16.mxu0 0
      %786 = vmatpush1.bf16.xpose.msra.mxu0 0
      %787 = vmatprep.subr.bf16.mxu0 0
      %788 = vmatpush1.bf16.xpose.msra.mxu0 0
      %789 = vmatprep.subr.bf16.mxu0 0
      %790 = vmatpush1.bf16.xpose.msra.mxu0 0
      %791 = vmatprep.subr.bf16.mxu0 0
      %792 = vmatpush1.bf16.xpose.msra.mxu0 0
      %793 = vmatprep.subr.bf16.mxu0 0
      %794 = vmatpush1.bf16.xpose.msra.mxu0 0
      %795 = vmatprep.subr.bf16.mxu0 0
      %796 = vmatpush1.bf16.xpose.msra.mxu0 0
      %797 = vmatprep.subr.bf16.mxu0 0
      %798 = vmatpush1.bf16.xpose.msra.mxu0 %v781
      %799 = vmatprep.subr.bf16.mxu0 0
      %800 = vmatpush2.bf16.xpose.msra.mxu0 0
      %801 = vmatprep.subr.bf16.mxu0 0
      %802 = vmatpush2.bf16.xpose.msra.mxu0 0
      %803 = vmatprep.subr.bf16.mxu0 0
      %804 = vmatpush2.bf16.xpose.msra.mxu0 0
      %805 = vmatprep.subr.bf16.mxu0 0
      %806 = vmatpush2.bf16.xpose.msra.mxu0 0
      %807 = vmatprep.subr.bf16.mxu0 0
      %808 = vmatpush2.bf16.xpose.msra.mxu0 0
      %809 = vmatprep.subr.bf16.mxu0 0
      %810 = vmatpush2.bf16.xpose.msra.mxu0 0
      %811 = vmatprep.subr.bf16.mxu0 0
      %812 = vmatpush2.bf16.xpose.msra.mxu0 0
      %813 = vmatprep.subr.bf16.mxu0 0
      %814 = vmatpush2.bf16.xpose.msra.mxu0 0
      %815 = vmatprep.mubr.bf16.mxu0 0
      %816 = vmatmul.mubr.bf16.gmra.mxu0 %v778
      %v817 = vpop.f32.mrf.mxu0
      %v818 = vadd.f32 0.0, %v817
      %v819 = vpop.f32.mrf.mxu0
      %v820 = vpop.f32.mrf.mxu0
      %v821 = vpop.f32.mrf.mxu0
      %822 = vdwg.mxu0
      %v823 = vmul.f32 %v680, 0.35355338
      %v824 = vmul.f32 %v726, 0.35355338
      %v825 = vmul.f32 %v772, 0.35355338
      %v826 = vmul.f32 %v818, 0.35355338
      %v827 = vsel %vm638, %v823, -inf
      %828 = vmax.xlane.f32.xlu0 %v827
      %v829 = vpop.xlane.xlu0 %828
      %v830 = vsel %vm638, %v824, -inf
      %831 = vmax.xlane.f32.xlu0 %v830
      %v832 = vpop.xlane.xlu0 %831
      %v833 = vsel %vm638, %v825, -inf
      %834 = vmax.xlane.f32.xlu0 %v833
      %v835 = vpop.xlane.xlu0 %834
      %v836 = vsel %vm638, %v826, -inf
      %837 = vmax.xlane.f32.xlu0 %v836
      %v838 = vpop.xlane.xlu0 %837
      %v839 = vsub.f32 %v823, %v829
      %v840 = vsub.f32 %v824, %v832
      %v841 = vsub.f32 %v825, %v835
      %v842 = vsub.f32 %v826, %v838
      %v843 = vmul.f32 %v839, 1.442695
      %v844 = vpow.pop %v843
      %v845 = vmul.f32 %v840, 1.442695
      %v846 = vpow.pop %v845
      %v847 = vmul.f32 %v841, 1.442695
      %v848 = vpow.pop %v847
      %v849 = vmul.f32 %v842, 1.442695
      %v850 = vpow.pop %v849
      %v851 = vsel %vm638, %v844, 0.0
      %852 = vadd.xlane.f32.xlu0 %v851
      %v853 = vpop.xlane.xlu0 %852
      %v854 = vsel %vm638, %v846, 0.0
      %855 = vadd.xlane.f32.xlu0 %v854
      %v856 = vpop.xlane.xlu0 %855
      %v857 = vsel %vm638, %v848, 0.0
      %858 = vadd.xlane.f32.xlu0 %v857
      %v859 = vpop.xlane.xlu0 %858
      %v860 = vsel %vm638, %v850, 0.0
      %861 = vadd.xlane.f32.xlu0 %v860
      %v862 = vpop.xlane.xlu0 %861
      %v863 = vrcp.pop %v853
      %v864 = vrcp.pop %v856
      %v865 = vrcp.pop %v859
      %v866 = vrcp.pop %v862
      %v867 = vmul.f32 %v844, %v863
      %v868 = vmul.f32 %v846, %v864
      %v869 = vmul.f32 %v848, %v865
      %v870 = vmul.f32 %v850, %v866
      %v871 = vpack.c.bf16 %v867, %v867
      %v872 = vpack.c.bf16 %v868, %v868
      %v873 = vpack.c.bf16 %v869, %v869
      %v874 = vpack.c.bf16 %v870, %v870
      %v876 = vsel %vm638, %v871, 0
      %vm878 = vcmask 1043456
      %v880 = vsel %vm878, %v628, 0
      %882 = vmatprep.subr.bf16.mxu0 0
      %883 = vmatpush1.bf16.msra.mxu0 0
      %884 = vmatprep.subr.bf16.mxu0 0
      %885 = vmatpush1.bf16.msra.mxu0 0
      %886 = vmatprep.subr.bf16.mxu0 0
      %887 = vmatpush1.bf16.msra.mxu0 0
      %888 = vmatprep.subr.bf16.mxu0 0
      %889 = vmatpush1.bf16.msra.mxu0 0
      %890 = vmatprep.subr.bf16.mxu0 0
      %891 = vmatpush1.bf16.msra.mxu0 0
      %892 = vmatprep.subr.bf16.mxu0 0
      %893 = vmatpush1.bf16.msra.mxu0 0
      %894 = vmatprep.subr.bf16.mxu0 0
      %895 = vmatpush1.bf16.msra.mxu0 0
      %896 = vmatprep.subr.bf16.mxu0 0
      %897 = vmatpush1.bf16.msra.mxu0 %v880
      %898 = vmatprep.subr.bf16.mxu0 0
      %899 = vmatpush2.bf16.msra.mxu0 0
      %900 = vmatprep.subr.bf16.mxu0 0
      %901 = vmatpush2.bf16.msra.mxu0 0
      %902 = vmatprep.subr.bf16.mxu0 0
      %903 = vmatpush2.bf16.msra.mxu0 0
      %904 = vmatprep.subr.bf16.mxu0 0
      %905 = vmatpush2.bf16.msra.mxu0 0
      %906 = vmatprep.subr.bf16.mxu0 0
      %907 = vmatpush2.bf16.msra.mxu0 0
      %908 = vmatprep.subr.bf16.mxu0 0
      %909 = vmatpush2.bf16.msra.mxu0 0
      %910 = vmatprep.subr.bf16.mxu0 0
      %911 = vmatpush2.bf16.msra.mxu0 0
      %912 = vmatprep.subr.bf16.mxu0 0
      %913 = vmatpush2.bf16.msra.mxu0 0
      %914 = vmatprep.mubr.bf16.mxu0 0
      %915 = vmatmul.mubr.bf16.gmra.mxu0 %v876
      %v916 = vpop.f32.mrf.mxu0
      %v917 = vadd.f32 0.0, %v916
      %v918 = vpop.f32.mrf.mxu0
      %v919 = vpop.f32.mrf.mxu0
      %v920 = vpop.f32.mrf.mxu0
      %921 = vdwg.mxu0
      %v923 = vsel %vm638, %v872, 0
      %v926 = vsel %vm878, %v631, 0
      %928 = vmatprep.subr.bf16.mxu0 0
      %929 = vmatpush1.bf16.msra.mxu0 0
      %930 = vmatprep.subr.bf16.mxu0 0
      %931 = vmatpush1.bf16.msra.mxu0 0
      %932 = vmatprep.subr.bf16.mxu0 0
      %933 = vmatpush1.bf16.msra.mxu0 0
      %934 = vmatprep.subr.bf16.mxu0 0
      %935 = vmatpush1.bf16.msra.mxu0 0
      %936 = vmatprep.subr.bf16.mxu0 0
      %937 = vmatpush1.bf16.msra.mxu0 0
      %938 = vmatprep.subr.bf16.mxu0 0
      %939 = vmatpush1.bf16.msra.mxu0 0
      %940 = vmatprep.subr.bf16.mxu0 0
      %941 = vmatpush1.bf16.msra.mxu0 0
      %942 = vmatprep.subr.bf16.mxu0 0
      %943 = vmatpush1.bf16.msra.mxu0 %v926
      %944 = vmatprep.subr.bf16.mxu0 0
      %945 = vmatpush2.bf16.msra.mxu0 0
      %946 = vmatprep.subr.bf16.mxu0 0
      %947 = vmatpush2.bf16.msra.mxu0 0
      %948 = vmatprep.subr.bf16.mxu0 0
      %949 = vmatpush2.bf16.msra.mxu0 0
      %950 = vmatprep.subr.bf16.mxu0 0
      %951 = vmatpush2.bf16.msra.mxu0 0
      %952 = vmatprep.subr.bf16.mxu0 0
      %953 = vmatpush2.bf16.msra.mxu0 0
      %954 = vmatprep.subr.bf16.mxu0 0
      %955 = vmatpush2.bf16.msra.mxu0 0
      %956 = vmatprep.subr.bf16.mxu0 0
      %957 = vmatpush2.bf16.msra.mxu0 0
      %958 = vmatprep.subr.bf16.mxu0 0
      %959 = vmatpush2.bf16.msra.mxu0 0
      %960 = vmatprep.mubr.bf16.mxu0 0
      %961 = vmatmul.mubr.bf16.gmra.mxu0 %v923
      %v962 = vpop.f32.mrf.mxu0
      %v963 = vadd.f32 0.0, %v962
      %v964 = vpop.f32.mrf.mxu0
      %v965 = vpop.f32.mrf.mxu0
      %v966 = vpop.f32.mrf.mxu0
      %967 = vdwg.mxu0
      %v969 = vsel %vm638, %v873, 0
      %v972 = vsel %vm878, %v634, 0
      %974 = vmatprep.subr.bf16.mxu0 0
      %975 = vmatpush1.bf16.msra.mxu0 0
      %976 = vmatprep.subr.bf16.mxu0 0
      %977 = vmatpush1.bf16.msra.mxu0 0
      %978 = vmatprep.subr.bf16.mxu0 0
      %979 = vmatpush1.bf16.msra.mxu0 0
      %980 = vmatprep.subr.bf16.mxu0 0
      %981 = vmatpush1.bf16.msra.mxu0 0
      %982 = vmatprep.subr.bf16.mxu0 0
      %983 = vmatpush1.bf16.msra.mxu0 0
      %984 = vmatprep.subr.bf16.mxu0 0
      %985 = vmatpush1.bf16.msra.mxu0 0
      %986 = vmatprep.subr.bf16.mxu0 0
      %987 = vmatpush1.bf16.msra.mxu0 0
      %988 = vmatprep.subr.bf16.mxu0 0
      %989 = vmatpush1.bf16.msra.mxu0 %v972
      %990 = vmatprep.subr.bf16.mxu0 0
      %991 = vmatpush2.bf16.msra.mxu0 0
      %992 = vmatprep.subr.bf16.mxu0 0
      %993 = vmatpush2.bf16.msra.mxu0 0
      %994 = vmatprep.subr.bf16.mxu0 0
      %995 = vmatpush2.bf16.msra.mxu0 0
      %996 = vmatprep.subr.bf16.mxu0 0
      %997 = vmatpush2.bf16.msra.mxu0 0
      %998 = vmatprep.subr.bf16.mxu0 0
      %999 = vmatpush2.bf16.msra.mxu0 0
      %1000 = vmatprep.subr.bf16.mxu0 0
      %1001 = vmatpush2.bf16.msra.mxu0 0
      %1002 = vmatprep.subr.bf16.mxu0 0
      %1003 = vmatpush2.bf16.msra.mxu0 0
      %1004 = vmatprep.subr.bf16.mxu0 0
      %1005 = vmatpush2.bf16.msra.mxu0 0
      %1006 = vmatprep.mubr.bf16.mxu0 0
      %1007 = vmatmul.mubr.bf16.gmra.mxu0 %v969
      %v1008 = vpop.f32.mrf.mxu0
      %v1009 = vadd.f32 0.0, %v1008
      %v1010 = vpop.f32.mrf.mxu0
      %v1011 = vpop.f32.mrf.mxu0
      %v1012 = vpop.f32.mrf.mxu0
      %1013 = vdwg.mxu0
      %v1015 = vsel %vm638, %v874, 0
      %v1018 = vsel %vm878, %v637, 0
      %1020 = vmatprep.subr.bf16.mxu0 0
      %1021 = vmatpush1.bf16.msra.mxu0 0
      %1022 = vmatprep.subr.bf16.mxu0 0
      %1023 = vmatpush1.bf16.msra.mxu0 0
      %1024 = vmatprep.subr.bf16.mxu0 0
      %1025 = vmatpush1.bf16.msra.mxu0 0
      %1026 = vmatprep.subr.bf16.mxu0 0
      %1027 = vmatpush1.bf16.msra.mxu0 0
      %1028 = vmatprep.subr.bf16.mxu0 0
      %1029 = vmatpush1.bf16.msra.mxu0 0
      %1030 = vmatprep.subr.bf16.mxu0 0
      %1031 = vmatpush1.bf16.msra.mxu0 0
      %1032 = vmatprep.subr.bf16.mxu0 0
      %1033 = vmatpush1.bf16.msra.mxu0 0
      %1034 = vmatprep.subr.bf16.mxu0 0
      %1035 = vmatpush1.bf16.msra.mxu0 %v1018
      %1036 = vmatprep.subr.bf16.mxu0 0
      %1037 = vmatpush2.bf16.msra.mxu0 0
      %1038 = vmatprep.subr.bf16.mxu0 0
      %1039 = vmatpush2.bf16.msra.mxu0 0
      %1040 = vmatprep.subr.bf16.mxu0 0
      %1041 = vmatpush2.bf16.msra.mxu0 0
      %1042 = vmatprep.subr.bf16.mxu0 0
      %1043 = vmatpush2.bf16.msra.mxu0 0
      %1044 = vmatprep.subr.bf16.mxu0 0
      %1045 = vmatpush2.bf16.msra.mxu0 0
      %1046 = vmatprep.subr.bf16.mxu0 0
      %1047 = vmatpush2.bf16.msra.mxu0 0
      %1048 = vmatprep.subr.bf16.mxu0 0
      %1049 = vmatpush2.bf16.msra.mxu0 0
      %1050 = vmatprep.subr.bf16.mxu0 0
      %1051 = vmatpush2.bf16.msra.mxu0 0
      %1052 = vmatprep.mubr.bf16.mxu0 0
      %1053 = vmatmul.mubr.bf16.gmra.mxu0 %v1015
      %v1054 = vpop.f32.mrf.mxu0
      %v1055 = vadd.f32 0.0, %v1054
      %v1056 = vpop.f32.mrf.mxu0
      %v1057 = vpop.f32.mrf.mxu0
      %v1058 = vpop.f32.mrf.mxu0
      %1059 = vdwg.mxu0
      %v1060 = vcombine.low %v917, %v1009
      %v1061 = vcombine.high %v917, %v1009
      %v1063 = vunpack.c.l.s4 1983009808
      %v1064 = vunpack.c.0.s8 %v1063
      %v1065 = vlaneseq
      %v1066 = vshrl.u32 %v1065, 7
      %v1067 = vsub.s32 %v1064, %v1066
      %v1068 = vrot.slane %v1060, %v1067
      %v1070 = vunpack.c.l.s4 1983009808
      %v1071 = vunpack.c.0.s8 %v1070
      %v1072 = vlaneseq
      %v1073 = vshrl.u32 %v1072, 7
      %v1074 = vsub.s32 %v1071, %v1073
      %v1075 = vrot.slane %v1061, %v1074
      %v1076 = vcombine.low %v963, %v1055
      %v1077 = vcombine.high %v963, %v1055
      %v1079 = vunpack.c.l.s4 1983009808
      %v1080 = vunpack.c.0.s8 %v1079
      %v1081 = vlaneseq
      %v1082 = vshrl.u32 %v1081, 7
      %v1083 = vsub.s32 %v1080, %v1082
      %v1084 = vrot.slane %v1076, %v1083
      %v1086 = vunpack.c.l.s4 1983009808
      %v1087 = vunpack.c.0.s8 %v1086
      %v1088 = vlaneseq
      %v1089 = vshrl.u32 %v1088, 7
      %v1090 = vsub.s32 %v1087, %v1089
      %v1091 = vrot.slane %v1077, %v1090
      %v1092 = vcombine.low %v1068, %v1084
      %v1093 = vcombine.high %v1068, %v1084
      %v1095 = vunpack.c.l.s4 1934713408
      %v1096 = vunpack.c.0.s8 %v1095
      %v1097 = vlaneseq
      %v1098 = vshrl.u32 %v1097, 7
      %v1099 = vsub.s32 %v1096, %v1098
      %v1100 = vrot.slane %v1092, %v1099
      %v1102 = vunpack.c.l.s4 1934713408
      %v1103 = vunpack.c.0.s8 %v1102
      %v1104 = vlaneseq
      %v1105 = vshrl.u32 %v1104, 7
      %v1106 = vsub.s32 %v1103, %v1105
      %v1107 = vrot.slane %v1093, %v1106
      %v1108 = vcombine.low %v1075, %v1091
      %v1109 = vcombine.high %v1075, %v1091
      %v1111 = vunpack.c.l.s4 1934713408
      %v1112 = vunpack.c.0.s8 %v1111
      %v1113 = vlaneseq
      %v1114 = vshrl.u32 %v1113, 7
      %v1115 = vsub.s32 %v1112, %v1114
      %v1116 = vrot.slane %v1108, %v1115
      %v1118 = vunpack.c.l.s4 1934713408
      %v1119 = vunpack.c.0.s8 %v1118
      %v1120 = vlaneseq
      %v1121 = vshrl.u32 %v1120, 7
      %v1122 = vsub.s32 %v1119, %v1121
      %v1123 = vrot.slane %v1109, %v1122
      %v1124 = vcombine.high %v1100, 0.0
      %v1125 = vcombine.high %v1107, 0.0
      %v1126 = vcombine.high %v1116, 0.0
      %v1127 = vcombine.high %v1123, 0.0
      %v1128 = vcombine.low %v1100, %v1107
      %v1130 = vunpack.c.l.s4 1983009808
      %v1131 = vunpack.c.0.s8 %v1130
      %v1132 = vlaneseq
      %v1133 = vshrl.u32 %v1132, 7
      %v1134 = vsub.s32 %v1131, %v1133
      %v1135 = vrot.slane %v1128, %v1134
      %v1136 = vcombine.low %v1124, %v1125
      %v1138 = vunpack.c.l.s4 1983009808
      %v1139 = vunpack.c.0.s8 %v1138
      %v1140 = vlaneseq
      %v1141 = vshrl.u32 %v1140, 7
      %v1142 = vsub.s32 %v1139, %v1141
      %v1143 = vrot.slane %v1136, %v1142
      %v1144 = vcombine.low %v1116, %v1123
      %v1146 = vunpack.c.l.s4 1983009808
      %v1147 = vunpack.c.0.s8 %v1146
      %v1148 = vlaneseq
      %v1149 = vshrl.u32 %v1148, 7
      %v1150 = vsub.s32 %v1147, %v1149
      %v1151 = vrot.slane %v1144, %v1150
      %v1152 = vcombine.low %v1126, %v1127
      %v1154 = vunpack.c.l.s4 1983009808
      %v1155 = vunpack.c.0.s8 %v1154
      %v1156 = vlaneseq
      %v1157 = vshrl.u32 %v1156, 7
      %v1158 = vsub.s32 %v1155, %v1157
      %v1159 = vrot.slane %v1152, %v1158
      %v1160 = vcombine.low %v1135, %v1143
      %v1161 = vcombine.high %v1135, %v1143
      %v1163 = vunpack.c.l.s4 1934713408
      %v1164 = vunpack.c.0.s8 %v1163
      %v1165 = vlaneseq
      %v1166 = vshrl.u32 %v1165, 7
      %v1167 = vsub.s32 %v1164, %v1166
      %v1168 = vrot.slane %v1160, %v1167
      %v1170 = vunpack.c.l.s4 1934713408
      %v1171 = vunpack.c.0.s8 %v1170
      %v1172 = vlaneseq
      %v1173 = vshrl.u32 %v1172, 7
      %v1174 = vsub.s32 %v1171, %v1173
      %v1175 = vrot.slane %v1161, %v1174
      %v1176 = vcombine.low %v1151, %v1159
      %v1177 = vcombine.high %v1151, %v1159
      %v1179 = vunpack.c.l.s4 1934713408
      %v1180 = vunpack.c.0.s8 %v1179
      %v1181 = vlaneseq
      %v1182 = vshrl.u32 %v1181, 7
      %v1183 = vsub.s32 %v1180, %v1182
      %v1184 = vrot.slane %v1176, %v1183
      %v1186 = vunpack.c.l.s4 1934713408
      %v1187 = vunpack.c.0.s8 %v1186
      %v1188 = vlaneseq
      %v1189 = vshrl.u32 %v1188, 7
      %v1190 = vsub.s32 %v1187, %v1189
      %v1191 = vrot.slane %v1177, %v1190
      %v1192 = vcombine.low %v1168, %v1184
      %v1193 = vcombine.high %v1168, %v1184
      %v1194 = vcombine.low %v1175, %v1191
      %v1195 = vcombine.high %v1175, %v1191
      %1197 = vrot.lane.b32.xlu0 %v1193, 8
      %v1198 = vpop.permute.xlu0 %1197
      %1201 = vrot.lane.b32.xlu0 %v1194, 16
      %v1202 = vpop.permute.xlu0 %1201
      %1205 = vrot.lane.b32.xlu0 %v1195, 24
      %v1206 = vpop.permute.xlu0 %1205
      %v1208 = vsel %vm638, %v1192, %v1198
      %vm1209 = vcmask 130048
      %v1210 = vsel %vm1209, %v1208, %v1202
      %vm1211 = vcmask 195584
      %v1212 = vsel %vm1211, %v1210, %v1206
      %v1213 = vpack.c.bf16 %v1212, %v1212
      %vm1214 = vcmask 257024
      %1215 = vst.msk [vmem:[%s186] sm:$0xf] %vm1214, %v1213
      %p1216 = scmp.lt.s32.totalorder %s17, 1
      %s1217 = scalar_select %p1216, %s17, 1
      %p1218 = scmp.lt.s32.totalorder %s18, 0
      %s1219 = scalar_select %p1218, %s18, 0
      %s1220 = sadd.s32 %s1219, %s1217
      %s1221 = smul.addr %s1220, 4
      %s1222 = scalar_lea.vmem %s2, %s1221
      // Predicated region
      $region29: #{transformer_forward.38} parent=27 // pred_check
        %p1223 = pneg %p99
      $region30: #{transformer_forward.38} parent=27 // pred_check_branch
        %1225 = sbr.rel (%p1223) target = $region32
      $region31: #{transformer_forward.38} parent=27 // pred_region
        _
      $region32: #{transformer_forward.38} parent=27 // pred_fallthru
        _
    $region28: #{transformer_forward.38} parent=5 // pred_fallthru
      _
    %p1226 = scmp.le.s32.totalorder 2, %s8
    // Predicated region
    $region33: #{transformer_forward.38} parent=5 // pred_check
      %p1227 = pneg %p1226
    $region34: #{transformer_forward.38} parent=5 // pred_check_branch
      %1229 = sbr.rel (%p1227) target = $region36
    $region35: #{transformer_forward.38} parent=5 // pred_region
      %s1230 = ssub.s32 %s8, 2
      // Predicated region
      $region37: #{transformer_forward.38} parent=35 // pred_check
        %p1231 = pneg %p105
      $region38: #{transformer_forward.38} parent=35 // pred_check_branch
        %1233 = sbr.rel (%p1231) target = $region40
      $region39: #{transformer_forward.38} parent=35 // pred_region
        %p1234 = scmp.lt.s32.totalorder %s19, 1
        %s1235 = scalar_select %p1234, %s19, 1
        %p1236 = scmp.lt.s32.totalorder %s20, 0
        %s1237 = scalar_select %p1236, %s20, 0
        %s1238 = sadd.s32 %s1237, %s1235
        %s1239 = smul.addr %s1238, 4
        %s1240 = scalar_lea.vmem %s2, %s1239
      $region40: #{transformer_forward.38} parent=35 // pred_fallthru
        _
    $region36: #{transformer_forward.38} parent=5 // pred_fallthru
      _
  $region6: #{transformer_forward.38} parent=0 // loop_footer
    %s12 = sadd.s32 1, %s8
  $region7: #{transformer_forward.38} parent=0 // loop_footer_branch
    %7 = sbr.rel target = $region3
  $region8: #{transformer_forward.38} parent=0 // loop_exit
    _

// kernel: transformer_forward.36
$region0: #{transformer_forward.36}
  #allocation0 [shape = 'u32[]', space=smem, size = 0x4, offset = 0x4, fixed_abs, tag = 'smem constant byte address 0x4 - core index']
  #allocation1 [shape = 'u32[144,128]{1,0:T(1,128)}', space=vmem, size = 0x12000, scoped, tag = 'internal scratch']
  #allocation2 [shape = 'bf16[16,32]{1,0:T(8,128)(2,1)}', space=vmem, size = 0x1000, scoped, tag = 'scratch operand']
  %s0 = inlined_call_operand.vmem [shape: f32[16,32], index: 0, kind: input, shape index: {}]
  %s1 = inlined_call_operand.vmem [shape: f32[1,32], index: 1, kind: input, shape index: {}]
  %s2 = inlined_call_operand.vmem [shape: f32[1,32], index: 2, kind: input, shape index: {}]
  %s3 = inlined_call_operand.vmem [shape: bf16[32,32], index: 3, kind: input, shape index: {}]
  %s4 = inlined_call_operand.vmem [shape: f32[1,32], index: 4, kind: input, shape index: {}]
  %s5 = inlined_call_operand.vmem [shape: bf16[16,32], index: 5, kind: output, shape index: {}]
  %s6 = sld [smem:[#allocation0]]
  $region34: #{transformer_forward.36} parent=0
    _
  %s8 = ssub.s32 1, %s6
  %s9 = scalar_select 0, %s8, %s6
  // Predicated region
  $region2: #{transformer_forward.36} parent=0 // pred_check
    _
  $region3: #{transformer_forward.36} parent=0 // pred_check_branch
    %11 = sbr.rel (0) target = $region5
  $region4: #{transformer_forward.36} parent=0 // pred_region
    _
  $region5: #{transformer_forward.36} parent=0 // pred_fallthru
    _
  // Predicated region
  $region6: #{transformer_forward.36} parent=0 // pred_check
    _
  $region7: #{transformer_forward.36} parent=0 // pred_check_branch
    %13 = sbr.rel (0) target = $region9
  $region8: #{transformer_forward.36} parent=0 // pred_region
    _
  $region9: #{transformer_forward.36} parent=0 // pred_fallthru
    _
  // Predicated region
  $region10: #{transformer_forward.36} parent=0 // pred_check
    _
  $region11: #{transformer_forward.36} parent=0 // pred_check_branch
    %15 = sbr.rel (0) target = $region13
  $region12: #{transformer_forward.36} parent=0 // pred_region
    _
  $region13: #{transformer_forward.36} parent=0 // pred_fallthru
    _
  // Predicated region
  $region14: #{transformer_forward.36} parent=0 // pred_check
    _
  $region15: #{transformer_forward.36} parent=0 // pred_check_branch
    %17 = sbr.rel (0) target = $region17
  $region16: #{transformer_forward.36} parent=0 // pred_region
    _
  $region17: #{transformer_forward.36} parent=0 // pred_fallthru
    _
  // Predicated region
  $region18: #{transformer_forward.36} parent=0 // pred_check
    _
  $region19: #{transformer_forward.36} parent=0 // pred_check_branch
    %19 = sbr.rel (0) target = $region21
  $region20: #{transformer_forward.36} parent=0 // pred_region
    _
  $region21: #{transformer_forward.36} parent=0 // pred_fallthru
    _
  %p21 = scmp.eq.s32.totalorder 0, 0
  // Predicated region
  $region22: #{transformer_forward.36} parent=0 // pred_check
    %p22 = pneg %p21
  $region23: #{transformer_forward.36} parent=0 // pred_check_branch
    %24 = sbr.rel (%p22) target = $region25
  $region24: #{transformer_forward.36} parent=0 // pred_region
    %v25 = vld [vmem:[%s0] sm:$0xff]
    %v26 = vld [vmem:[%s0 + $0x8] sm:$0xff]
    %vm27 = vcmask 261120
    %v28 = vsel %vm27, %v25, 0.0
    %29 = vadd.xlane.f32.xlu0 %v28
    %v30 = vpop.xlane.xlu0 %29
    %v31 = vsel %vm27, %v26, 0.0
    %32 = vadd.xlane.f32.xlu0 %v31
    %v33 = vpop.xlane.xlu0 %32
    %v34 = vrcp.pop 32.0
    %v35 = vmul.f32 %v30, %v34
    %v36 = vmul.f32 %v33, %v34
    %v37 = vsub.f32 %v25, %v35
    %v38 = vsub.f32 %v26, %v36
    %v39 = vmul.f32 %v37, %v37
    %v40 = vmul.f32 %v38, %v38
    %v41 = vsel %vm27, %v39, 0.0
    %42 = vadd.xlane.f32.xlu0 %v41
    %v43 = vpop.xlane.xlu0 %42
    %v44 = vsel %vm27, %v40, 0.0
    %45 = vadd.xlane.f32.xlu0 %v44
    %v46 = vpop.xlane.xlu0 %45
    %v47 = vmul.f32 %v43, %v34
    %v48 = vmul.f32 %v46, %v34
    %v49 = vadd.f32 %v47, 1e-05
    %v50 = vadd.f32 %v48, 1e-05
    %v51 = vrsqrt.pop %v49
    %v52 = vrsqrt.pop %v50
    %v53 = vmul.f32 %v37, %v51
    %v54 = vmul.f32 %v38, %v52
    %v55 = vld [vmem:[%s1] sm:$0x1]
    %v57 = vlaneseq
    %v58 = vshrl.u32 %v57, 7
    %v59 = vsub.s32 0, %v58
    %v60 = vrot.slane %v55, %v59
    %v62 = vmul.f32 %v53, %v60
    %v63 = vmul.f32 %v54, %v60
    %v64 = vld [vmem:[%s2] sm:$0x1]
    %v66 = vlaneseq
    %v67 = vshrl.u32 %v66, 7
    %v68 = vsub.s32 0, %v67
    %v69 = vrot.slane %v64, %v68
    %v71 = vadd.f32 %v62, %v69
    %v72 = vadd.f32 %v63, %v69
    %v73 = vpack.c.bf16 %v72, %v71
    %v75 = vunpack.c.l.b16 %v73
    %v76 = vunpack.c.h.b16 %v73
    %v77 = vpack.c.b16 %v75, %v75
    %v78 = vpack.c.b16 %v76, %v76
    %vm81 = vcmask 257024
    %82 = vst.msk [vmem:[#allocation2] sm:$0xf] %vm81, %v77
    %83 = vst.msk [vmem:[#allocation2 + $0x4] sm:$0xf] %vm81, %v78
  $region25: #{transformer_forward.36} parent=0 // pred_fallthru
    _
  %v84 = vld [vmem:[#allocation2] sm:$0xf]
  %v85 = vld [vmem:[#allocation2 + $0x4] sm:$0xf]
  %v86 = vld [vmem:[%s3] sm:$0xf]
  %v87 = vld [vmem:[%s3 + $0x4] sm:$0xf]
  %v88 = vld [vmem:[%s3 + $0x8] sm:$0xf]
  %v89 = vld [vmem:[%s3 + $0xc] sm:$0xf]
  %v90 = vld [vmem:[%s4] sm:$0x1]
  %v92 = vlaneseq
  %v93 = vshrl.u32 %v92, 7
  %v94 = vsub.s32 0, %v93
  %v95 = vrot.slane %v90, %v94
  %v99 = vunpack.c.l.b16 %v84
  %v100 = vunpack.c.l.b16 %v85
  %v101 = vpack.c.b16 %v100, %v99
  %v106 = vunpack.c.l.b16 %v86
  %v107 = vunpack.c.l.b16 %v87
  %v108 = vunpack.c.l.b16 %v88
  %v109 = vunpack.c.l.b16 %v89
  %v110 = vpack.c.b16 %v107, %v106
  %v111 = vpack.c.b16 %v109, %v108
  %vm114 = vcmask 261120
  %v116 = vsel %vm114, %v101, 0
  %118 = vmatprep.subr.bf16.mxu0 0
  %119 = vmatpush1.bf16.msra.mxu0 0
  %120 = vmatprep.subr.bf16.mxu0 0
  %121 = vmatpush1.bf16.msra.mxu0 0
  %122 = vmatprep.subr.bf16.mxu0 0
  %123 = vmatpush1.bf16.msra.mxu0 0
  %124 = vmatprep.subr.bf16.mxu0 0
  %125 = vmatpush1.bf16.msra.mxu0 0
  %126 = vmatprep.subr.bf16.mxu0 0
  %127 = vmatpush1.bf16.msra.mxu0 0
  %128 = vmatprep.subr.bf16.mxu0 0
  %129 = vmatpush1.bf16.msra.mxu0 0
  %130 = vmatprep.subr.bf16.mxu0 0
  %131 = vmatpush1.bf16.msra.mxu0 %v111
  %132 = vmatprep.subr.bf16.mxu0 0
  %133 = vmatpush1.bf16.msra.mxu0 %v110
  %134 = vmatprep.subr.bf16.mxu0 0
  %135 = vmatpush2.bf16.msra.mxu0 0
  %136 = vmatprep.subr.bf16.mxu0 0
  %137 = vmatpush2.bf16.msra.mxu0 0
  %138 = vmatprep.subr.bf16.mxu0 0
  %139 = vmatpush2.bf16.msra.mxu0 0
  %140 = vmatprep.subr.bf16.mxu0 0
  %141 = vmatpush2.bf16.msra.mxu0 0
  %142 = vmatprep.subr.bf16.mxu0 0
  %143 = vmatpush2.bf16.msra.mxu0 0
  %144 = vmatprep.subr.bf16.mxu0 0
  %145 = vmatpush2.bf16.msra.mxu0 0
  %146 = vmatprep.subr.bf16.mxu0 0
  %147 = vmatpush2.bf16.msra.mxu0 0
  %148 = vmatprep.subr.bf16.mxu0 0
  %149 = vmatpush2.bf16.msra.mxu0 0
  %150 = vmatprep.mubr.bf16.mxu0 0
  %151 = vmatmul.mubr.bf16.gmra.mxu0 %v116
  %v152 = vpop.f32.mrf.mxu0
  %v153 = vadd.f32 %v95, %v152
  %v154 = vpop.f32.mrf.mxu0
  %v155 = vpop.f32.mrf.mxu0
  %v156 = vadd.f32 %v95, %v155
  %v157 = vpop.f32.mrf.mxu0
  %158 = vdwg.mxu0
  %v159 = vpack.c.bf16 %v156, %v153
  %v161 = vunpack.c.l.b16 %v159
  %v162 = vunpack.c.h.b16 %v159
  %v163 = vpack.c.b16 %v161, %v161
  %v164 = vpack.c.b16 %v162, %v162
  %vm167 = vcmask 257024
  %168 = vst.msk [vmem:[%s5] sm:$0xf] %vm167, %v163
  %169 = vst.msk [vmem:[%s5 + $0x4] sm:$0xf] %vm167, %v164
  // Predicated region
  $region26: #{transformer_forward.36} parent=0 // pred_check
    _
  $region27: #{transformer_forward.36} parent=0 // pred_check_branch
    %171 = sbr.rel (0) target = $region29
  $region28: #{transformer_forward.36} parent=0 // pred_region
    _
  $region29: #{transformer_forward.36} parent=0 // pred_fallthru
    _
  // Predicated region
  $region30: #{transformer_forward.36} parent=0 // pred_check
    _
  $region31: #{transformer_forward.36} parent=0 // pred_check_branch
    %173 = sbr.rel (0) target = $region33
  $region32: #{transformer_forward.36} parent=0 // pred_region
    _
  $region33: #{transformer_forward.36} parent=0 // pred_fallthru
    _

// kernel: transformer_forward.49
$region0: #{transformer_forward.49}
  #allocation0 [shape = 'u32[]', space=smem, size = 0x4, offset = 0x4, fixed_abs, tag = 'smem constant byte address 0x4 - core index']
  #allocation1 [shape = 'u32[144,128]{1,0:T(1,128)}', space=vmem, size = 0x12000, scoped, tag = 'internal scratch']
  #allocation2 [shape = 'bf16[16,32]{1,0:T(8,128)(2,1)}', space=vmem, size = 0x1000, scoped, tag = 'scratch operand']
  %s0 = inlined_call_operand.vmem [shape: f32[16,32], index: 0, kind: input, shape index: {}]
  %s1 = inlined_call_operand.vmem [shape: f32[1,32], index: 1, kind: input, shape index: {}]
  %s2 = inlined_call_operand.vmem [shape: f32[1,32], index: 2, kind: input, shape index: {}]
  %s3 = inlined_call_operand.vmem [shape: bf16[32,64], index: 3, kind: input, shape index: {}]
  %s4 = inlined_call_operand.vmem [shape: f32[1,64], index: 4, kind: input, shape index: {}]
  %s5 = inlined_call_operand.hbm [shape: f32[16,64], index: 5, kind: output, shape index: {}]
  %s6 = sld [smem:[#allocation0]]
  $region34: #{transformer_forward.49} parent=0
    _
  %s8 = ssub.s32 1, %s6
  %s9 = scalar_select 0, %s8, %s6
  $region1: #{transformer_forward.49} parent=0
    #allocation3 [shape = 'u8[8192]{0}', space=vmem, size = 0x2000, scoped, tag = 'output window, operand 0, single buffered']
    #allocation4 [shape = 's32[1]{0}', space=sflag, size = 0x4, scoped, tag = 'scoped memory for transformer_forward.49']
    %10 = vsyncpa [#allocation4], 0
    // Predicated region
    $region2: #{transformer_forward.49} parent=1 // pred_check
      _
    $region3: #{transformer_forward.49} parent=1 // pred_check_branch
      %12 = sbr.rel (0) target = $region5
    $region4: #{transformer_forward.49} parent=1 // pred_region
      _
    $region5: #{transformer_forward.49} parent=1 // pred_fallthru
      _
    // Predicated region
    $region6: #{transformer_forward.49} parent=1 // pred_check
      _
    $region7: #{transformer_forward.49} parent=1 // pred_check_branch
      %14 = sbr.rel (0) target = $region9
    $region8: #{transformer_forward.49} parent=1 // pred_region
      _
    $region9: #{transformer_forward.49} parent=1 // pred_fallthru
      _
    // Predicated region
    $region10: #{transformer_forward.49} parent=1 // pred_check
      _
    $region11: #{transformer_forward.49} parent=1 // pred_check_branch
      %16 = sbr.rel (0) target = $region13
    $region12: #{transformer_forward.49} parent=1 // pred_region
      _
    $region13: #{transformer_forward.49} parent=1 // pred_fallthru
      _
    // Predicated region
    $region14: #{transformer_forward.49} parent=1 // pred_check
      _
    $region15: #{transformer_forward.49} parent=1 // pred_check_branch
      %18 = sbr.rel (0) target = $region17
    $region16: #{transformer_forward.49} parent=1 // pred_region
      _
    $region17: #{transformer_forward.49} parent=1 // pred_fallthru
      _
    // Predicated region
    $region18: #{transformer_forward.49} parent=1 // pred_check
      _
    $region19: #{transformer_forward.49} parent=1 // pred_check_branch
      %20 = sbr.rel (0) target = $region21
    $region20: #{transformer_forward.49} parent=1 // pred_region
      _
    $region21: #{transformer_forward.49} parent=1 // pred_fallthru
      _
    %p22 = scmp.eq.s32.totalorder 0, 0
    // Predicated region
    $region22: #{transformer_forward.49} parent=1 // pred_check
      %p23 = pneg %p22
    $region23: #{transformer_forward.49} parent=1 // pred_check_branch
      %25 = sbr.rel (%p23) target = $region25
    $region24: #{transformer_forward.49} parent=1 // pred_region
      %v26 = vld [vmem:[%s0] sm:$0xff]
      %v27 = vld [vmem:[%s0 + $0x8] sm:$0xff]
      %vm28 = vcmask 261120
      %v29 = vsel %vm28, %v26, 0.0
      %30 = vadd.xlane.f32.xlu0 %v29
      %v31 = vpop.xlane.xlu0 %30
      %v32 = vsel %vm28, %v27, 0.0
      %33 = vadd.xlane.f32.xlu0 %v32
      %v34 = vpop.xlane.xlu0 %33
      %v35 = vrcp.pop 32.0
      %v36 = vmul.f32 %v31, %v35
      %v37 = vmul.f32 %v34, %v35
      %v38 = vsub.f32 %v26, %v36
      %v39 = vsub.f32 %v27, %v37
      %v40 = vmul.f32 %v38, %v38
      %v41 = vmul.f32 %v39, %v39
      %v42 = vsel %vm28, %v40, 0.0
      %43 = vadd.xlane.f32.xlu0 %v42
      %v44 = vpop.xlane.xlu0 %43
      %v45 = vsel %vm28, %v41, 0.0
      %46 = vadd.xlane.f32.xlu0 %v45
      %v47 = vpop.xlane.xlu0 %46
      %v48 = vmul.f32 %v44, %v35
      %v49 = vmul.f32 %v47, %v35
      %v50 = vadd.f32 %v48, 1e-05
      %v51 = vadd.f32 %v49, 1e-05
      %v52 = vrsqrt.pop %v50
      %v53 = vrsqrt.pop %v51
      %v54 = vmul.f32 %v38, %v52
      %v55 = vmul.f32 %v39, %v53
      %v56 = vld [vmem:[%s1] sm:$0x1]
      %v58 = vlaneseq
      %v59 = vshrl.u32 %v58, 7
      %v60 = vsub.s32 0, %v59
      %v61 = vrot.slane %v56, %v60
      %v63 = vmul.f32 %v54, %v61
      %v64 = vmul.f32 %v55, %v61
      %v65 = vld [vmem:[%s2] sm:$0x1]
      %v67 = vlaneseq
      %v68 = vshrl.u32 %v67, 7
      %v69 = vsub.s32 0, %v68
      %v70 = vrot.slane %v65, %v69
      %v72 = vadd.f32 %v63, %v70
      %v73 = vadd.f32 %v64, %v70
      %v74 = vpack.c.bf16 %v73, %v72
      %v76 = vunpack.c.l.b16 %v74
      %v77 = vunpack.c.h.b16 %v74
      %v78 = vpack.c.b16 %v76, %v76
      %v79 = vpack.c.b16 %v77, %v77
      %vm82 = vcmask 257024
      %83 = vst.msk [vmem:[#allocation2] sm:$0xf] %vm82, %v78
      %84 = vst.msk [vmem:[#allocation2 + $0x4] sm:$0xf] %vm82, %v79
    $region25: #{transformer_forward.49} parent=1 // pred_fallthru
      _
    %v85 = vld [vmem:[#allocation2] sm:$0xf]
    %v86 = vld [vmem:[#allocation2 + $0x4] sm:$0xf]
    %v87 = vld [vmem:[%s3] sm:$0xf]
    %v88 = vld [vmem:[%s3 + $0x4] sm:$0xf]
    %v89 = vld [vmem:[%s3 + $0x8] sm:$0xf]
    %v90 = vld [vmem:[%s3 + $0xc] sm:$0xf]
    %v91 = vld [vmem:[%s4] sm:$0x1]
    %v93 = vlaneseq
    %v94 = vshrl.u32 %v93, 7
    %v95 = vsub.s32 0, %v94
    %v96 = vrot.slane %v91, %v95
    %v100 = vunpack.c.l.b16 %v85
    %v101 = vunpack.c.l.b16 %v86
    %v102 = vpack.c.b16 %v101, %v100
    %v107 = vunpack.c.l.b16 %v87
    %v108 = vunpack.c.l.b16 %v88
    %v109 = vunpack.c.l.b16 %v89
    %v110 = vunpack.c.l.b16 %v90
    %v111 = vpack.c.b16 %v108, %v107
    %v112 = vpack.c.b16 %v110, %v109
    %vm115 = vcmask 261120
    %v117 = vsel %vm115, %v102, 0
    %119 = vmatprep.subr.bf16.mxu0 0
    %120 = vmatpush1.bf16.msra.mxu0 0
    %121 = vmatprep.subr.bf16.mxu0 0
    %122 = vmatpush1.bf16.msra.mxu0 0
    %123 = vmatprep.subr.bf16.mxu0 0
    %124 = vmatpush1.bf16.msra.mxu0 0
    %125 = vmatprep.subr.bf16.mxu0 0
    %126 = vmatpush1.bf16.msra.mxu0 0
    %127 = vmatprep.subr.bf16.mxu0 0
    %128 = vmatpush1.bf16.msra.mxu0 0
    %129 = vmatprep.subr.bf16.mxu0 0
    %130 = vmatpush1.bf16.msra.mxu0 0
    %131 = vmatprep.subr.bf16.mxu0 0
    %132 = vmatpush1.bf16.msra.mxu0 %v112
    %133 = vmatprep.subr.bf16.mxu0 0
    %134 = vmatpush1.bf16.msra.mxu0 %v111
    %135 = vmatprep.subr.bf16.mxu0 0
    %136 = vmatpush2.bf16.msra.mxu0 0
    %137 = vmatprep.subr.bf16.mxu0 0
    %138 = vmatpush2.bf16.msra.mxu0 0
    %139 = vmatprep.subr.bf16.mxu0 0
    %140 = vmatpush2.bf16.msra.mxu0 0
    %141 = vmatprep.subr.bf16.mxu0 0
    %142 = vmatpush2.bf16.msra.mxu0 0
    %143 = vmatprep.subr.bf16.mxu0 0
    %144 = vmatpush2.bf16.msra.mxu0 0
    %145 = vmatprep.subr.bf16.mxu0 0
    %146 = vmatpush2.bf16.msra.mxu0 0
    %147 = vmatprep.subr.bf16.mxu0 0
    %148 = vmatpush2.bf16.msra.mxu0 0
    %149 = vmatprep.subr.bf16.mxu0 0
    %150 = vmatpush2.bf16.msra.mxu0 0
    %151 = vmatprep.mubr.bf16.mxu0 0
    %152 = vmatmul.mubr.bf16.gmra.mxu0 %v117
    %v153 = vpop.f32.mrf.mxu0
    %v154 = vadd.f32 %v96, %v153
    %v155 = vpop.f32.mrf.mxu0
    %v156 = vpop.f32.mrf.mxu0
    %v157 = vadd.f32 %v96, %v156
    %v158 = vpop.f32.mrf.mxu0
    %159 = vdwg.mxu0
    %vm160 = vcmask 523264
    %161 = vst.msk [vmem:[#allocation3] sm:$0xff] %vm160, %v154
    %162 = vst.msk [vmem:[#allocation3 + $0x8] sm:$0xff] %vm160, %v157
    // Predicated region
    $region26: #{transformer_forward.49} parent=1 // pred_check
      _
    $region27: #{transformer_forward.49} parent=1 // pred_check_branch
      %164 = sbr.rel (0) target = $region29
    $region28: #{transformer_forward.49} parent=1 // pred_region
      %s166 = ssub.s32 256, 256
      %167 = vsyncadd [#allocation4], %s166
      %s168 = sshll.u32 [#allocation3], 4
      %s169 = int_to_ptr.vmem [resolvable:$true] %s168
      %174 = dma.vmem_to_hbm [thread:$0]  %s169, 256, %s5, [#allocation4], 128, 128, 8
    $region29: #{transformer_forward.49} parent=1 // pred_fallthru
      _
    // Predicated region
    $region30: #{transformer_forward.49} parent=1 // pred_check
      _
    $region31: #{transformer_forward.49} parent=1 // pred_check_branch
      %176 = sbr.rel (0) target = $region33
    $region32: #{transformer_forward.49} parent=1 // pred_region
      %177 = dma.done [#allocation4], 256
    $region33: #{transformer_forward.49} parent=1 // pred_fallthru
      _
    %178 = vsyncpa [#allocation4], 1

</llo_original>
